<compile_context>
chip_gen: v5e
topology: v5e:2x2
jax: 0.10.0
libtpu: 0.0.40
codegen_flags: <defaults>
</compile_context>

<pallas_src>
import jax
import jax.numpy as jnp
from jax import lax
from jax.experimental import pallas as pl
from jax.experimental.pallas import tpu as pltpu


_VMEM_LIMIT = 48 * 1024 * 1024    # < 64 MiB physical VMEM/TC on v7x; fine on v5e/v6e
_TILE_BUDGET = 8 * 1024 * 1024    # working-set budget used to clamp M tiles
_LANES = 128


def _round_up(x, m):
    return ((x + m - 1) // m) * m


def _pick_tile(m, target):
    """Largest multiple-of-8 divisor of m that is <= target.

    The target is first clamped to m // 2 (when m >= 16) so the M grid axis
    always has >= 2 steps: keeps DMA/compute overlap alive and gives v7x's two
    TensorCores work even when the phase axis alone would not split evenly.
    """
    if m >= 16:
        target = min(target, m // 2)
    t = min(m, max(8, target))
    t -= t % 8
    while t >= 8:
        if m % t == 0:
            return t
        t -= 8
    return m


def _tile_target(row_bytes, default):
    """VMEM-aware cap on the M tile (double-buffered per-row working set)."""
    return max(8, min(default, _TILE_BUDGET // max(row_bytes, 1)))


# ----------------------------------------------------------------------------
# Pallas kernels
# ----------------------------------------------------------------------------
def _phase_matmul_stats_kernel(x_ref, w_ref, y_ref, stat_ref):
    # One (phase, M-tile) grid step of BN pass 1:
    #   bf16 x bf16 -> f32 MXU GEMM, bf16 pre-activation out, f32 channel sums.
    y = jnp.dot(x_ref[...], w_ref[...], preferred_element_type=jnp.float32)
    y_ref[...] = y.astype(y_ref.dtype)
    stat_ref[0:1, :] = jnp.sum(y, axis=0, keepdims=True)        # per-channel sum
    stat_ref[1:2, :] = jnp.sum(y * y, axis=0, keepdims=True)    # per-channel sumsq


def _phase_matmul_tanh_kernel(x_ref, w_ref, o_ref):
    y = jnp.dot(x_ref[...], w_ref[...], preferred_element_type=jnp.float32)
    o_ref[...] = jnp.tanh(y).astype(o_ref.dtype)


def _matmul_kernel(x_ref, w_ref, o_ref):
    o_ref[...] = jnp.dot(x_ref[...], w_ref[...],
                         preferred_element_type=jnp.float32)


def _bn_relu_kernel(y_ref, scale_ref, shift_ref, o_ref):
    # Shared by the 2-D (layer 1) and phase-slab wrappers: refs are (rows, lanes).
    y = y_ref[...].astype(jnp.float32) * scale_ref[...] + shift_ref[...]
    o_ref[...] = jnp.maximum(y, 0.0).astype(o_ref.dtype)


# ----------------------------------------------------------------------------
# pallas_call wrappers
# ----------------------------------------------------------------------------
def phase_matmul_stats(pat, wstack, target_tm=1024):
    """pat: (4, M, K) bf16, wstack: (4, K, Cp) bf16 ->
       y (4, M, Cp) bf16, stats (4, grid_m, 2, Cp) f32 (row0=sum, row1=sumsq)."""
    _, M, K = pat.shape
    Cp = wstack.shape[-1]
    tm = _pick_tile(M, _tile_target(4 * (K + Cp), target_tm))
    gm = M // tm
    return pl.pallas_call(
        _phase_matmul_stats_kernel,
        grid=(4, gm),
        in_specs=[
            pl.BlockSpec((None, tm, K), lambda p, i: (p, i, 0)),
            pl.BlockSpec((None, K, Cp), lambda p, i: (p, 0, 0)),
        ],
        out_specs=(
            pl.BlockSpec((None, tm, Cp), lambda p, i: (p, i, 0)),
            pl.BlockSpec((None, None, 2, Cp), lambda p, i: (p, i, 0, 0)),
        ),
        out_shape=(
            jax.ShapeDtypeStruct((4, M, Cp), jnp.bfloat16),
            jax.ShapeDtypeStruct((4, gm, 2, Cp), jnp.float32),
        ),
        compiler_params=pltpu.CompilerParams(
            dimension_semantics=("parallel", "parallel"),
            vmem_limit_bytes=_VMEM_LIMIT),
    )(pat, wstack)


def phase_matmul_tanh(pat, wstack, target_tm=1024):
    _, M, K = pat.shape
    Cp = wstack.shape[-1]
    tm = _pick_tile(M, _tile_target(4 * (K + Cp), target_tm))
    return pl.pallas_call(
        _phase_matmul_tanh_kernel,
        grid=(4, M // tm),
        in_specs=[
            pl.BlockSpec((None, tm, K), lambda p, i: (p, i, 0)),
            pl.BlockSpec((None, K, Cp), lambda p, i: (p, 0, 0)),
        ],
        out_specs=pl.BlockSpec((None, tm, Cp), lambda p, i: (p, i, 0)),
        out_shape=jax.ShapeDtypeStruct((4, M, Cp), jnp.bfloat16),
        compiler_params=pltpu.CompilerParams(
            dimension_semantics=("parallel", "parallel"),
            vmem_limit_bytes=_VMEM_LIMIT),
    )(pat, wstack)


def bn_relu_apply_slab(y_slab, scale, shift, target_tm=2048):
    P, M, Cp = y_slab.shape
    tm = _pick_tile(M, _tile_target(8 * Cp, target_tm))
    return pl.pallas_call(
        _bn_relu_kernel,
        grid=(P, M // tm),
        in_specs=[
            pl.BlockSpec((None, tm, Cp), lambda p, i: (p, i, 0)),
            pl.BlockSpec((1, Cp), lambda p, i: (0, 0)),
            pl.BlockSpec((1, Cp), lambda p, i: (0, 0)),
        ],
        out_specs=pl.BlockSpec((None, tm, Cp), lambda p, i: (p, i, 0)),
        out_shape=jax.ShapeDtypeStruct((P, M, Cp), jnp.bfloat16),
        compiler_params=pltpu.CompilerParams(
            dimension_semantics=("parallel", "parallel"),
            vmem_limit_bytes=_VMEM_LIMIT),
    )(y_slab, scale, shift)


def bn_relu_apply_2d(y, scale, shift, target_tm=2048):
    M, Cp = y.shape
    tm = _pick_tile(M, _tile_target(8 * Cp, target_tm))
    return pl.pallas_call(
        _bn_relu_kernel,
        grid=(M // tm,),
        in_specs=[
            pl.BlockSpec((tm, Cp), lambda i: (i, 0)),
            pl.BlockSpec((1, Cp), lambda i: (0, 0)),
            pl.BlockSpec((1, Cp), lambda i: (0, 0)),
        ],
        out_specs=pl.BlockSpec((tm, Cp), lambda i: (i, 0)),
        out_shape=jax.ShapeDtypeStruct((M, Cp), jnp.bfloat16),
        compiler_params=pltpu.CompilerParams(
            dimension_semantics=("parallel",),
            vmem_limit_bytes=_VMEM_LIMIT),
    )(y, scale, shift)


def small_matmul_f32(x_bf16, w_bf16):
    """Tiny single-step GEMM (layer 1): (N, K) @ (K, Cn) -> f32."""
    M, K = x_bf16.shape
    Cn = w_bf16.shape[1]
    return pl.pallas_call(
        _matmul_kernel,
        grid=(1,),
        in_specs=[pl.BlockSpec((M, K), lambda i: (0, 0)),
                  pl.BlockSpec((K, Cn), lambda i: (0, 0))],
        out_specs=pl.BlockSpec((M, Cn), lambda i: (0, 0)),
        out_shape=jax.ShapeDtypeStruct((M, Cn), jnp.float32),
        compiler_params=pltpu.CompilerParams(
            dimension_semantics=("arbitrary",),
            vmem_limit_bytes=_VMEM_LIMIT),
    )(x_bf16, w_bf16)


# ----------------------------------------------------------------------------
# JAX glue: transposed-conv lowering (4x4 / stride-2 / pad-1, 4-phase sub-pixel)
# ----------------------------------------------------------------------------
# Derived from out[o] = sum_i x[i] * w[o - 2i + 1] on the 1-padded input:
#   even outputs (phase 0): taps (padded-input offset, kernel index) = (0,3),(1,1)
#   odd  outputs (phase 1): taps                                    = (1,2),(2,0)
_PHASE_TAPS = {0: ((0, 3), (1, 1)),
               1: ((1, 2), (2, 0))}


def _phase_patches_stacked(xp, N, H, W):
    """xp: (N, H+2, W+2, Ci) bf16 -> (4, N*H*W, 4*Ci) with phase p = 2*ph + pw."""
    Ci = xp.shape[-1]
    phases = []
    for ph in (0, 1):
        for pw in (0, 1):
            cols = [xp[:, oh:oh + H, ow:ow + W, :]
                    for (oh, _) in _PHASE_TAPS[ph] for (ow, _) in _PHASE_TAPS[pw]]
            pat = jnp.stack(cols, axis=3).reshape(N * H * W, 4 * Ci)
            phases.append(pat)
    # TODO(synk): extract these taps inside the GEMM kernel (halo'd input blocks
    # or manual DMA) to avoid materializing the patch slab in HBM; also consider
    # the combined 3x3/4*Co "depth-to-space" GEMM for layers with 4*Co <= 128.
    return jnp.stack(phases, axis=0)


def _phase_weight(w_pt, ph, pw, co_pad):
    Ci, Co = w_pt.shape[0], w_pt.shape[1]
    kh_idx = [kk for (_, kk) in _PHASE_TAPS[ph]]
    kw_idx = [kk for (_, kk) in _PHASE_TAPS[pw]]
    wsel = w_pt[:, :, kh_idx, :][:, :, :, kw_idx]          # (Ci, Co, 2, 2)
    wmat = jnp.transpose(wsel, (2, 3, 0, 1)).reshape(4 * Ci, Co)
    if co_pad > Co:
        wmat = jnp.pad(wmat, ((0, 0), (0, co_pad - Co)))
    return wmat


def _phase_weight_stack(w_pt, co_pad):
    return jnp.stack([_phase_weight(w_pt, ph, pw, co_pad)
                      for ph in (0, 1) for pw in (0, 1)], axis=0)


def _interleave_phases(out_slab, N, H, W, Co):
    """(4, N*H*W, Cp) slab (p = 2*ph + pw) -> (N, 2H, 2W, Co)."""
    Cp = out_slab.shape[-1]
    y = out_slab.reshape(2, 2, N, H, W, Cp)[..., :Co]
    return jnp.transpose(y, (2, 3, 0, 4, 1, 5)).reshape(N, 2 * H, 2 * W, Co)


def _bn_scale_shift(stats, m_total, gamma_p, beta_p, eps):
    """Combine per-(phase, tile) partial sums into BN scale/shift (f32)."""
    s = stats[:, :, 0, :].sum(axis=(0, 1))
    s2 = stats[:, :, 1, :].sum(axis=(0, 1))
    mean = s / m_total
    var = jnp.maximum(s2 / m_total - mean * mean, 0.0)   # biased var (PyTorch BN)
    scale = gamma_p * lax.rsqrt(var + eps)
    shift = beta_p - mean * scale
    return scale[None, :], shift[None, :]


def _pad_affine(gamma, beta, co_pad):
    Co = gamma.shape[0]
    g = jnp.pad(gamma.astype(jnp.float32), (0, co_pad - Co))
    b = jnp.pad(beta.astype(jnp.float32), (0, co_pad - Co))
    return g, b


# ----------------------------------------------------------------------------
# Layers
# ----------------------------------------------------------------------------
def conv_transpose1x1_to4x4_bn_relu(x_2d, w_pt, gamma, beta, eps=1e-5):
    """Layer 1: ConvTranspose2d(nz, Co, 4, 1, 0) on a 1x1 input == direct GEMM
    (N, nz) @ (nz, 16*Co_pad), then BN(+ReLU) over the N*4*4 samples/channel."""
    N, _ = x_2d.shape
    Co = w_pt.shape[1]
    Cp = _round_up(Co, _LANES)
    wm = jnp.transpose(w_pt, (0, 2, 3, 1))                        # (Ci, 4, 4, Co)
    wm = jnp.pad(wm, ((0, 0), (0, 0), (0, 0), (0, Cp - Co)))
    wm = wm.reshape(w_pt.shape[0], 16 * Cp).astype(jnp.bfloat16)
    y = small_matmul_f32(x_2d.astype(jnp.bfloat16), wm)           # (N, 16*Cp) f32
    y4 = y.reshape(N * 16, Cp)
    mean = jnp.mean(y4, axis=0)
    var = jnp.maximum(jnp.mean(y4 * y4, axis=0) - mean * mean, 0.0)
    g, b = _pad_affine(gamma, beta, Cp)
    scale = g * lax.rsqrt(var + eps)
    shift = b - mean * scale
    out = bn_relu_apply_2d(y4, scale[None, :], shift[None, :])    # (N*16, Cp) bf16
    return out.reshape(N, 4, 4, Cp)[:, :, :, :Co]


def conv_transpose4x4_s2_bn_relu(x_nhwc, w_pt, gamma, beta, eps=1e-5):
    N, H, W, _ = x_nhwc.shape
    Co = w_pt.shape[1]
    Cp = _round_up(Co, _LANES)
    xp = jnp.pad(x_nhwc, ((0, 0), (1, 1), (1, 1), (0, 0))).astype(jnp.bfloat16)
    pat = _phase_patches_stacked(xp, N, H, W)                     # (4, M, 4Ci)
    wstack = _phase_weight_stack(w_pt, Cp).astype(jnp.bfloat16)   # (4, 4Ci, Cp)
    y_slab, stats = phase_matmul_stats(pat, wstack)               # pass 1
    g, b = _pad_affine(gamma, beta, Cp)
    scale, shift = _bn_scale_shift(stats, 4 * N * H * W, g, b, eps)
    out_slab = bn_relu_apply_slab(y_slab, scale, shift)           # pass 2 (bf16)
    return _interleave_phases(out_slab, N, H, W, Co)              # (N, 2H, 2W, Co)


def conv_transpose4x4_s2_tanh(x_nhwc, w_pt):
    N, H, W, _ = x_nhwc.shape
    Co = w_pt.shape[1]
    Cp = _round_up(Co, _LANES)
    xp = jnp.pad(x_nhwc, ((0, 0), (1, 1), (1, 1), (0, 0))).astype(jnp.bfloat16)
    pat = _phase_patches_stacked(xp, N, H, W)
    wstack = _phase_weight_stack(w_pt, Cp).astype(jnp.bfloat16)
    out_slab = phase_matmul_tanh(pat, wstack)                     # (4, M, Cp) bf16
    return _interleave_phases(out_slab, N, H, W, Co)


# ----------------------------------------------------------------------------
# Generator: nz -> ngf*8 (4x4) -> ngf*4 (8x8) -> ngf*2 (16x16)
#               -> ngf (32x32) -> nc (64x64)
# ----------------------------------------------------------------------------
class PallasGenerator:
    def __init__(self, nz, ngf, nc, key):
        self.nz, self.ngf, self.nc = nz, ngf, nc
        dims = [(nz, ngf * 8), (ngf * 8, ngf * 4), (ngf * 4, ngf * 2),
                (ngf * 2, ngf), (ngf, nc)]
        keys = jax.random.split(key, 3 * len(dims))
        self.weights, self.gammas, self.betas = [], [], []
        for i, (ci, co) in enumerate(dims):
            w = 0.05 * jax.random.normal(keys[3 * i], (ci, co, 4, 4), jnp.float32)
            self.weights.append(w)
            if i < len(dims) - 1:  # last layer has no BatchNorm
                g = 1.0 + 0.01 * jax.random.normal(keys[3 * i + 1], (co,), jnp.float32)
                b = 0.01 * jax.random.normal(keys[3 * i + 2], (co,), jnp.float32)
                self.gammas.append(g)
                self.betas.append(b)
        # TODO(synk): BatchNorm running-stat buffers (stateful running_mean/var
        # updates for eval mode) are not modeled; forward uses batch statistics.

    def __call__(self, noise_nchw):
        N = noise_nchw.shape[0]
        x = noise_nchw.reshape(N, self.nz).astype(jnp.float32)    # (N, nz, 1, 1) -> (N, nz)
        # Layer 1: 4x4, stride 1, pad 0 (1x1 -> 4x4) as a direct GEMM + BN + ReLU.
        x = conv_transpose1x1_to4x4_bn_relu(x, self.weights[0],
                                            self.gammas[0], self.betas[0])
        # Layers 2-4: 4x4, stride 2, pad 1, merged 4-phase GEMM + BN + ReLU.
        for i in (1, 2, 3):
            x = conv_transpose4x4_s2_bn_relu(x, self.weights[i],
                                             self.gammas[i], self.betas[i])
        # Layer 5: 4x4, stride 2, pad 1, merged 4-phase GEMM + Tanh (bf16 out).
        x = conv_transpose4x4_s2_tanh(x, self.weights[4])
        return jnp.transpose(x, (0, 3, 1, 2)).astype(jnp.float32)  # NHWC -> NCHW


# ----------------------------------------------------------------------------
# Pure-JAX reference (ConvTranspose2d = dilated-input conv with flipped kernel)
# ----------------------------------------------------------------------------
def _ref_conv_transpose(x_nhwc, w_pt, stride, pad):
    k = w_pt.shape[2]
    w_hwio = jnp.transpose(w_pt[:, :, ::-1, ::-1], (2, 3, 0, 1))
    p = k - 1 - pad
    return lax.conv_general_dilated(
        x_nhwc, w_hwio, window_strides=(1, 1), padding=[(p, p), (p, p)],
        lhs_dilation=(stride, stride),
        dimension_numbers=("NHWC", "HWIO", "NHWC"),
        precision=lax.Precision.HIGHEST)


def _ref_generator(noise_nchw, weights, gammas, betas, eps=1e-5):
    def q(a):  # emulate the bf16 rounding of the Pallas path
        return a.astype(jnp.bfloat16).astype(jnp.float32)
    x = jnp.transpose(noise_nchw, (0, 2, 3, 1))
    strides = [1, 2, 2, 2, 2]
    pads = [0, 1, 1, 1, 1]
    for i in range(5):
        y = _ref_conv_transpose(q(x), q(weights[i]), strides[i], pads[i])
        if i < 4:
            mean = jnp.mean(y, axis=(0, 1, 2), keepdims=True)
            var = jnp.mean(jnp.square(y - mean), axis=(0, 1, 2), keepdims=True)
            ya = q(y) if i > 0 else y   # layers 2-4 store a bf16 pre-activation
            ya = (ya - mean) * lax.rsqrt(var + eps)
            ya = ya * gammas[i][None, None, None, :] + betas[i][None, None, None, :]
            x = jnp.maximum(ya, 0.0)
        else:
            x = jnp.tanh(y)
    return jnp.transpose(x, (0, 3, 1, 2))


if __name__ == "__main__":
    key = jax.random.PRNGKey(0)
    nz, ngf, nc, batch = 32, 8, 3, 2

    gen = PallasGenerator(nz, ngf, nc, key)
    noise = jax.random.normal(jax.random.fold_in(key, 123),
                              (batch, nz, 1, 1), jnp.float32)

    fwd = jax.jit(gen.__call__)
    out = jax.block_until_ready(fwd(noise))

    assert out.shape == (batch, nc, 64, 64), out.shape
    assert bool(jnp.all(jnp.isfinite(out)))
    assert bool(jnp.all(jnp.abs(out) <= 1.0 + 1e-6))      # tanh range

    ref = jax.block_until_ready(
        _ref_generator(noise, gen.weights, gen.gammas, gen.betas))
    max_err = float(jnp.max(jnp.abs(out.astype(jnp.float32) - ref)))
    assert max_err < 5e-2, f"mismatch vs reference: {max_err}"

    print("KERNEL_OK")
</pallas_src>

<mosaic_0001>
module attributes {stable_mosaic.version = 11 : i64} {
  func.func @_matmul_kernel(%arg0: i32, %arg1: memref<2x32xbf16, #tpu.memory_space<vmem>>, %arg2: memref<32x2048xbf16, #tpu.memory_space<vmem>>, %arg3: memref<2x2048xf32, #tpu.memory_space<vmem>>) attributes {dimension_semantics = [#tpu.dimension_semantics<arbitrary>], iteration_bounds = array<i64: 1>, scalar_prefetch = 0 : i64, scratch_operands = 0 : i64, tpu.core_type = #tpu.core_type<tc>, window_params = [{pipeline_mode = #tpu.pipeline_mode<synchronous>, transform_indices = @transform_0, window_bounds = array<i64: 2, 32>}, {pipeline_mode = #tpu.pipeline_mode<synchronous>, transform_indices = @transform_1, window_bounds = array<i64: 32, 2048>}, {pipeline_mode = #tpu.pipeline_mode<synchronous>, transform_indices = @transform_2, window_bounds = array<i64: 2, 2048>}]} {
    %c0 = arith.constant 0 : index
    %c0_0 = arith.constant 0 : index
    %0 = vector.load %arg1[%c0, %c0_0] : memref<2x32xbf16, #tpu.memory_space<vmem>>, vector<2x32xbf16>
    %c0_1 = arith.constant 0 : index
    %c0_2 = arith.constant 0 : index
    %1 = vector.load %arg2[%c0_1, %c0_2] : memref<32x2048xbf16, #tpu.memory_space<vmem>>, vector<32x2048xbf16>
    %cst = arith.constant dense<0.000000e+00> : vector<2x2048xf32>
    %2 = tpu.matmul %0, %1, %cst {dimension_numbers = #tpu.dot_dimension_numbers<[1], [0], [0], [1], [0, 0, 1, 1], [], []>} : vector<2x32xbf16>, vector<32x2048xbf16>, vector<2x2048xf32> -> vector<2x2048xf32>
    %c0_3 = arith.constant 0 : index
    %c0_4 = arith.constant 0 : index
    %3 = vector.load %arg3[%c0_3, %c0_4] : memref<2x2048xf32, #tpu.memory_space<vmem>>, vector<2x2048xf32>
    tpu.vector_store %arg3[%c0_3, %c0_4], %2 {strides = array<i32>} : memref<2x2048xf32, #tpu.memory_space<vmem>>, vector<2x2048xf32>,
    return
  }
  func.func @transform_0(%arg0: i32) -> (i32, i32) {
    %c0_i32 = arith.constant 0 : i32
    %c0_i32_0 = arith.constant 0 : i32
    %c0_i32_1 = arith.constant 0 : i32
    return %c0_i32, %c0_i32_0 : i32, i32
  }
  func.func @transform_1(%arg0: i32) -> (i32, i32) {
    %c0_i32 = arith.constant 0 : i32
    %c0_i32_0 = arith.constant 0 : i32
    %c0_i32_1 = arith.constant 0 : i32
    return %c0_i32, %c0_i32_0 : i32, i32
  }
  func.func @transform_2(%arg0: i32) -> (i32, i32) {
    %c0_i32 = arith.constant 0 : i32
    %c0_i32_0 = arith.constant 0 : i32
    %c0_i32_1 = arith.constant 0 : i32
    return %c0_i32, %c0_i32_0 : i32, i32
  }
}

module attributes {stable_mosaic.version = 11 : i64} {
  func.func @_bn_relu_kernel(%arg0: i32, %arg1: memref<16x128xf32, #tpu.memory_space<vmem>>, %arg2: memref<1x128xf32, #tpu.memory_space<vmem>>, %arg3: memref<1x128xf32, #tpu.memory_space<vmem>>, %arg4: memref<16x128xbf16, #tpu.memory_space<vmem>>) attributes {dimension_semantics = [#tpu.dimension_semantics<parallel>], iteration_bounds = array<i64: 2>, scalar_prefetch = 0 : i64, scratch_operands = 0 : i64, tpu.core_type = #tpu.core_type<tc>, window_params = [{transform_indices = @transform_0, window_bounds = array<i64: 16, 128>}, {pipeline_mode = #tpu.pipeline_mode<synchronous>, transform_indices = @transform_1, window_bounds = array<i64: 1, 128>}, {pipeline_mode = #tpu.pipeline_mode<synchronous>, transform_indices = @transform_2, window_bounds = array<i64: 1, 128>}, {transform_indices = @transform_3, window_bounds = array<i64: 16, 128>}]} {
    %c0 = arith.constant 0 : index
    %c0_0 = arith.constant 0 : index
    %0 = vector.load %arg1[%c0, %c0_0] : memref<16x128xf32, #tpu.memory_space<vmem>>, vector<16x128xf32>
    %c0_1 = arith.constant 0 : index
    %c0_2 = arith.constant 0 : index
    %1 = vector.load %arg2[%c0_1, %c0_2] : memref<1x128xf32, #tpu.memory_space<vmem>>, vector<1x128xf32>
    %2 = vector.broadcast %1 : vector<1x128xf32> to vector<16x128xf32>
    %3 = arith.mulf %0, %2 : vector<16x128xf32>
    %c0_3 = arith.constant 0 : index
    %c0_4 = arith.constant 0 : index
    %4 = vector.load %arg3[%c0_3, %c0_4] : memref<1x128xf32, #tpu.memory_space<vmem>>, vector<1x128xf32>
    %5 = vector.broadcast %4 : vector<1x128xf32> to vector<16x128xf32>
    %6 = arith.addf %3, %5 : vector<16x128xf32>
    %cst = arith.constant 0.000000e+00 : f32
    %7 = vector.broadcast %cst : f32 to vector<16x128xf32>
    %8 = arith.maximumf %6, %7 : vector<16x128xf32>
    %9 = arith.truncf %8 : vector<16x128xf32> to vector<16x128xbf16>
    %c0_5 = arith.constant 0 : index
    %c0_6 = arith.constant 0 : index
    %10 = vector.load %arg4[%c0_5, %c0_6] : memref<16x128xbf16, #tpu.memory_space<vmem>>, vector<16x128xbf16>
    tpu.vector_store %arg4[%c0_5, %c0_6], %9 {strides = array<i32>} : memref<16x128xbf16, #tpu.memory_space<vmem>>, vector<16x128xbf16>,
    return
  }
  func.func @transform_0(%arg0: i32) -> (i32, i32) {
    %c0_i32 = arith.constant 0 : i32
    %c0_i32_0 = arith.constant 0 : i32
    return %arg0, %c0_i32 : i32, i32
  }
  func.func @transform_1(%arg0: i32) -> (i32, i32) {
    %c0_i32 = arith.constant 0 : i32
    %c0_i32_0 = arith.constant 0 : i32
    %c0_i32_1 = arith.constant 0 : i32
    return %c0_i32, %c0_i32_0 : i32, i32
  }
  func.func @transform_2(%arg0: i32) -> (i32, i32) {
    %c0_i32 = arith.constant 0 : i32
    %c0_i32_0 = arith.constant 0 : i32
    %c0_i32_1 = arith.constant 0 : i32
    return %c0_i32, %c0_i32_0 : i32, i32
  }
  func.func @transform_3(%arg0: i32) -> (i32, i32) {
    %c0_i32 = arith.constant 0 : i32
    %c0_i32_0 = arith.constant 0 : i32
    return %arg0, %c0_i32 : i32, i32
  }
}

module attributes {stable_mosaic.version = 11 : i64} {
  func.func @_phase_matmul_stats_kernel(%arg0: i32, %arg1: i32, %arg2: memref<1x16x256xbf16, #tpu.memory_space<vmem>>, %arg3: memref<1x256x128xbf16, #tpu.memory_space<vmem>>, %arg4: memref<1x16x128xbf16, #tpu.memory_space<vmem>>, %arg5: memref<1x1x2x128xf32, #tpu.memory_space<vmem>>) attributes {dimension_semantics = [#tpu.dimension_semantics<parallel>, #tpu.dimension_semantics<parallel>], iteration_bounds = array<i64: 4, 2>, scalar_prefetch = 0 : i64, scratch_operands = 0 : i64, tpu.core_type = #tpu.core_type<tc>, window_params = [{transform_indices = @transform_0, window_bounds = array<i64: 1, 16, 256>}, {transform_indices = @transform_1, window_bounds = array<i64: 1, 256, 128>}, {transform_indices = @transform_2, window_bounds = array<i64: 1, 16, 128>}, {transform_indices = @transform_3, window_bounds = array<i64: 1, 1, 2, 128>}]} {
    %c0 = arith.constant 0 : index
    %c0_0 = arith.constant 0 : index
    %c0_1 = arith.constant 0 : index
    %0 = vector.load %arg2[%c0, %c0_0, %c0_1] : memref<1x16x256xbf16, #tpu.memory_space<vmem>>, vector<1x16x256xbf16>
    %1 = vector.shape_cast %0 : vector<1x16x256xbf16> to vector<16x256xbf16>
    %c0_2 = arith.constant 0 : index
    %c0_3 = arith.constant 0 : index
    %c0_4 = arith.constant 0 : index
    %2 = vector.load %arg3[%c0_2, %c0_3, %c0_4] : memref<1x256x128xbf16, #tpu.memory_space<vmem>>, vector<1x256x128xbf16>
    %3 = vector.shape_cast %2 : vector<1x256x128xbf16> to vector<256x128xbf16>
    %cst = arith.constant dense<0.000000e+00> : vector<16x128xf32>
    %4 = tpu.matmul %1, %3, %cst {dimension_numbers = #tpu.dot_dimension_numbers<[1], [0], [0], [1], [0, 0, 1, 1], [], []>} : vector<16x256xbf16>, vector<256x128xbf16>, vector<16x128xf32> -> vector<16x128xf32>
    %5 = arith.truncf %4 : vector<16x128xf32> to vector<16x128xbf16>
    %c0_5 = arith.constant 0 : index
    %c0_6 = arith.constant 0 : index
    %c0_7 = arith.constant 0 : index
    %6 = vector.load %arg4[%c0_5, %c0_6, %c0_7] : memref<1x16x128xbf16, #tpu.memory_space<vmem>>, vector<1x16x128xbf16>
    %7 = vector.shape_cast %6 : vector<1x16x128xbf16> to vector<16x128xbf16>
    %8 = vector.shape_cast %5 : vector<16x128xbf16> to vector<1x16x128xbf16>
    tpu.vector_store %arg4[%c0_5, %c0_6, %c0_7], %8 {strides = array<i32>} : memref<1x16x128xbf16, #tpu.memory_space<vmem>>, vector<1x16x128xbf16>,
    %cst_8 = arith.constant dense<0.000000e+00> : vector<128xf32>
    %9 = vector.multi_reduction <add>, %4, %cst_8 [0] : vector<16x128xf32> to vector<128xf32>
    %10 = vector.shape_cast %9 : vector<128xf32> to vector<1x128xf32>
    %c0_9 = arith.constant 0 : index
    %c0_10 = arith.constant 0 : index
    %c0_11 = arith.constant 0 : index
    %c0_12 = arith.constant 0 : index
    %11 = vector.load %arg5[%c0_9, %c0_10, %c0_11, %c0_12] : memref<1x1x2x128xf32, #tpu.memory_space<vmem>>, vector<1x1x1x128xf32>
    %12 = vector.shape_cast %11 : vector<1x1x1x128xf32> to vector<1x128xf32>
    %13 = vector.shape_cast %10 : vector<1x128xf32> to vector<1x1x1x128xf32>
    tpu.vector_store %arg5[%c0_9, %c0_10, %c0_11, %c0_12], %13 {strides = array<i32>} : memref<1x1x2x128xf32, #tpu.memory_space<vmem>>, vector<1x1x1x128xf32>,
    %14 = arith.mulf %4, %4 : vector<16x128xf32>
    %cst_13 = arith.constant dense<0.000000e+00> : vector<128xf32>
    %15 = vector.multi_reduction <add>, %14, %cst_13 [0] : vector<16x128xf32> to vector<128xf32>
    %16 = vector.shape_cast %15 : vector<128xf32> to vector<1x128xf32>
    %c0_14 = arith.constant 0 : index
    %c0_15 = arith.constant 0 : index
    %c1 = arith.constant 1 : index
    %c0_16 = arith.constant 0 : index
    %17 = vector.load %arg5[%c0_14, %c0_15, %c1, %c0_16] : memref<1x1x2x128xf32, #tpu.memory_space<vmem>>, vector<1x1x1x128xf32>
    %18 = vector.shape_cast %17 : vector<1x1x1x128xf32> to vector<1x128xf32>
    %19 = vector.shape_cast %16 : vector<1x128xf32> to vector<1x1x1x128xf32>
    tpu.vector_store %arg5[%c0_14, %c0_15, %c1, %c0_16], %19 {strides = array<i32>} : memref<1x1x2x128xf32, #tpu.memory_space<vmem>>, vector<1x1x1x128xf32>,
    return
  }
  func.func @transform_0(%arg0: i32, %arg1: i32) -> (i32, i32, i32) {
    %c0_i32 = arith.constant 0 : i32
    %c0_i32_0 = arith.constant 0 : i32
    return %arg0, %arg1, %c0_i32 : i32, i32, i32
  }
  func.func @transform_1(%arg0: i32, %arg1: i32) -> (i32, i32, i32) {
    %c0_i32 = arith.constant 0 : i32
    %c0_i32_0 = arith.constant 0 : i32
    %c0_i32_1 = arith.constant 0 : i32
    return %arg0, %c0_i32, %c0_i32_0 : i32, i32, i32
  }
  func.func @transform_2(%arg0: i32, %arg1: i32) -> (i32, i32, i32) {
    %c0_i32 = arith.constant 0 : i32
    %c0_i32_0 = arith.constant 0 : i32
    return %arg0, %arg1, %c0_i32 : i32, i32, i32
  }
  func.func @transform_3(%arg0: i32, %arg1: i32) -> (i32, i32, i32, i32) {
    %c0_i32 = arith.constant 0 : i32
    %c0_i32_0 = arith.constant 0 : i32
    %c0_i32_1 = arith.constant 0 : i32
    return %arg0, %arg1, %c0_i32, %c0_i32_0 : i32, i32, i32, i32
  }
}

module attributes {stable_mosaic.version = 11 : i64} {
  func.func @_bn_relu_kernel(%arg0: i32, %arg1: i32, %arg2: memref<1x16x128xbf16, #tpu.memory_space<vmem>>, %arg3: memref<1x128xf32, #tpu.memory_space<vmem>>, %arg4: memref<1x128xf32, #tpu.memory_space<vmem>>, %arg5: memref<1x16x128xbf16, #tpu.memory_space<vmem>>) attributes {dimension_semantics = [#tpu.dimension_semantics<parallel>, #tpu.dimension_semantics<parallel>], iteration_bounds = array<i64: 4, 2>, scalar_prefetch = 0 : i64, scratch_operands = 0 : i64, tpu.core_type = #tpu.core_type<tc>, window_params = [{transform_indices = @transform_0, window_bounds = array<i64: 1, 16, 128>}, {pipeline_mode = #tpu.pipeline_mode<synchronous>, transform_indices = @transform_1, window_bounds = array<i64: 1, 128>}, {pipeline_mode = #tpu.pipeline_mode<synchronous>, transform_indices = @transform_2, window_bounds = array<i64: 1, 128>}, {transform_indices = @transform_3, window_bounds = array<i64: 1, 16, 128>}]} {
    %c0 = arith.constant 0 : index
    %c0_0 = arith.constant 0 : index
    %c0_1 = arith.constant 0 : index
    %0 = vector.load %arg2[%c0, %c0_0, %c0_1] : memref<1x16x128xbf16, #tpu.memory_space<vmem>>, vector<1x16x128xbf16>
    %1 = vector.shape_cast %0 : vector<1x16x128xbf16> to vector<16x128xbf16>
    %2 = arith.extf %1 : vector<16x128xbf16> to vector<16x128xf32>
    %c0_2 = arith.constant 0 : index
    %c0_3 = arith.constant 0 : index
    %3 = vector.load %arg3[%c0_2, %c0_3] : memref<1x128xf32, #tpu.memory_space<vmem>>, vector<1x128xf32>
    %4 = vector.broadcast %3 : vector<1x128xf32> to vector<16x128xf32>
    %5 = arith.mulf %2, %4 : vector<16x128xf32>
    %c0_4 = arith.constant 0 : index
    %c0_5 = arith.constant 0 : index
    %6 = vector.load %arg4[%c0_4, %c0_5] : memref<1x128xf32, #tpu.memory_space<vmem>>, vector<1x128xf32>
    %7 = vector.broadcast %6 : vector<1x128xf32> to vector<16x128xf32>
    %8 = arith.addf %5, %7 : vector<16x128xf32>
    %cst = arith.constant 0.000000e+00 : f32
    %9 = vector.broadcast %cst : f32 to vector<16x128xf32>
    %10 = arith.maximumf %8, %9 : vector<16x128xf32>
    %11 = arith.truncf %10 : vector<16x128xf32> to vector<16x128xbf16>
    %c0_6 = arith.constant 0 : index
    %c0_7 = arith.constant 0 : index
    %c0_8 = arith.constant 0 : index
    %12 = vector.load %arg5[%c0_6, %c0_7, %c0_8] : memref<1x16x128xbf16, #tpu.memory_space<vmem>>, vector<1x16x128xbf16>
    %13 = vector.shape_cast %12 : vector<1x16x128xbf16> to vector<16x128xbf16>
    %14 = vector.shape_cast %11 : vector<16x128xbf16> to vector<1x16x128xbf16>
    tpu.vector_store %arg5[%c0_6, %c0_7, %c0_8], %14 {strides = array<i32>} : memref<1x16x128xbf16, #tpu.memory_space<vmem>>, vector<1x16x128xbf16>,
    return
  }
  func.func @transform_0(%arg0: i32, %arg1: i32) -> (i32, i32, i32) {
    %c0_i32 = arith.constant 0 : i32
    %c0_i32_0 = arith.constant 0 : i32
    return %arg0, %arg1, %c0_i32 : i32, i32, i32
  }
  func.func @transform_1(%arg0: i32, %arg1: i32) -> (i32, i32) {
    %c0_i32 = arith.constant 0 : i32
    %c0_i32_0 = arith.constant 0 : i32
    %c0_i32_1 = arith.constant 0 : i32
    return %c0_i32, %c0_i32_0 : i32, i32
  }
  func.func @transform_2(%arg0: i32, %arg1: i32) -> (i32, i32) {
    %c0_i32 = arith.constant 0 : i32
    %c0_i32_0 = arith.constant 0 : i32
    %c0_i32_1 = arith.constant 0 : i32
    return %c0_i32, %c0_i32_0 : i32, i32
  }
  func.func @transform_3(%arg0: i32, %arg1: i32) -> (i32, i32, i32) {
    %c0_i32 = arith.constant 0 : i32
    %c0_i32_0 = arith.constant 0 : i32
    return %arg0, %arg1, %c0_i32 : i32, i32, i32
  }
}

module attributes {stable_mosaic.version = 11 : i64} {
  func.func @_phase_matmul_stats_kernel(%arg0: i32, %arg1: i32, %arg2: memref<1x64x128xbf16, #tpu.memory_space<vmem>>, %arg3: memref<1x128x128xbf16, #tpu.memory_space<vmem>>, %arg4: memref<1x64x128xbf16, #tpu.memory_space<vmem>>, %arg5: memref<1x1x2x128xf32, #tpu.memory_space<vmem>>) attributes {dimension_semantics = [#tpu.dimension_semantics<parallel>, #tpu.dimension_semantics<parallel>], iteration_bounds = array<i64: 4, 2>, scalar_prefetch = 0 : i64, scratch_operands = 0 : i64, tpu.core_type = #tpu.core_type<tc>, window_params = [{transform_indices = @transform_0, window_bounds = array<i64: 1, 64, 128>}, {transform_indices = @transform_1, window_bounds = array<i64: 1, 128, 128>}, {transform_indices = @transform_2, window_bounds = array<i64: 1, 64, 128>}, {transform_indices = @transform_3, window_bounds = array<i64: 1, 1, 2, 128>}]} {
    %c0 = arith.constant 0 : index
    %c0_0 = arith.constant 0 : index
    %c0_1 = arith.constant 0 : index
    %0 = vector.load %arg2[%c0, %c0_0, %c0_1] : memref<1x64x128xbf16, #tpu.memory_space<vmem>>, vector<1x64x128xbf16>
    %1 = vector.shape_cast %0 : vector<1x64x128xbf16> to vector<64x128xbf16>
    %c0_2 = arith.constant 0 : index
    %c0_3 = arith.constant 0 : index
    %c0_4 = arith.constant 0 : index
    %2 = vector.load %arg3[%c0_2, %c0_3, %c0_4] : memref<1x128x128xbf16, #tpu.memory_space<vmem>>, vector<1x128x128xbf16>
    %3 = vector.shape_cast %2 : vector<1x128x128xbf16> to vector<128x128xbf16>
    %cst = arith.constant dense<0.000000e+00> : vector<64x128xf32>
    %4 = tpu.matmul %1, %3, %cst {dimension_numbers = #tpu.dot_dimension_numbers<[1], [0], [0], [1], [0, 0, 1, 1], [], []>} : vector<64x128xbf16>, vector<128x128xbf16>, vector<64x128xf32> -> vector<64x128xf32>
    %5 = arith.truncf %4 : vector<64x128xf32> to vector<64x128xbf16>
    %c0_5 = arith.constant 0 : index
    %c0_6 = arith.constant 0 : index
    %c0_7 = arith.constant 0 : index
    %6 = vector.load %arg4[%c0_5, %c0_6, %c0_7] : memref<1x64x128xbf16, #tpu.memory_space<vmem>>, vector<1x64x128xbf16>
    %7 = vector.shape_cast %6 : vector<1x64x128xbf16> to vector<64x128xbf16>
    %8 = vector.shape_cast %5 : vector<64x128xbf16> to vector<1x64x128xbf16>
    tpu.vector_store %arg4[%c0_5, %c0_6, %c0_7], %8 {strides = array<i32>} : memref<1x64x128xbf16, #tpu.memory_space<vmem>>, vector<1x64x128xbf16>,
    %cst_8 = arith.constant dense<0.000000e+00> : vector<128xf32>
    %9 = vector.multi_reduction <add>, %4, %cst_8 [0] : vector<64x128xf32> to vector<128xf32>
    %10 = vector.shape_cast %9 : vector<128xf32> to vector<1x128xf32>
    %c0_9 = arith.constant 0 : index
    %c0_10 = arith.constant 0 : index
    %c0_11 = arith.constant 0 : index
    %c0_12 = arith.constant 0 : index
    %11 = vector.load %arg5[%c0_9, %c0_10, %c0_11, %c0_12] : memref<1x1x2x128xf32, #tpu.memory_space<vmem>>, vector<1x1x1x128xf32>
    %12 = vector.shape_cast %11 : vector<1x1x1x128xf32> to vector<1x128xf32>
    %13 = vector.shape_cast %10 : vector<1x128xf32> to vector<1x1x1x128xf32>
    tpu.vector_store %arg5[%c0_9, %c0_10, %c0_11, %c0_12], %13 {strides = array<i32>} : memref<1x1x2x128xf32, #tpu.memory_space<vmem>>, vector<1x1x1x128xf32>,
    %14 = arith.mulf %4, %4 : vector<64x128xf32>
    %cst_13 = arith.constant dense<0.000000e+00> : vector<128xf32>
    %15 = vector.multi_reduction <add>, %14, %cst_13 [0] : vector<64x128xf32> to vector<128xf32>
    %16 = vector.shape_cast %15 : vector<128xf32> to vector<1x128xf32>
    %c0_14 = arith.constant 0 : index
    %c0_15 = arith.constant 0 : index
    %c1 = arith.constant 1 : index
    %c0_16 = arith.constant 0 : index
    %17 = vector.load %arg5[%c0_14, %c0_15, %c1, %c0_16] : memref<1x1x2x128xf32, #tpu.memory_space<vmem>>, vector<1x1x1x128xf32>
    %18 = vector.shape_cast %17 : vector<1x1x1x128xf32> to vector<1x128xf32>
    %19 = vector.shape_cast %16 : vector<1x128xf32> to vector<1x1x1x128xf32>
    tpu.vector_store %arg5[%c0_14, %c0_15, %c1, %c0_16], %19 {strides = array<i32>} : memref<1x1x2x128xf32, #tpu.memory_space<vmem>>, vector<1x1x1x128xf32>,
    return
  }
  func.func @transform_0(%arg0: i32, %arg1: i32) -> (i32, i32, i32) {
    %c0_i32 = arith.constant 0 : i32
    %c0_i32_0 = arith.constant 0 : i32
    return %arg0, %arg1, %c0_i32 : i32, i32, i32
  }
  func.func @transform_1(%arg0: i32, %arg1: i32) -> (i32, i32, i32) {
    %c0_i32 = arith.constant 0 : i32
    %c0_i32_0 = arith.constant 0 : i32
    %c0_i32_1 = arith.constant 0 : i32
    return %arg0, %c0_i32, %c0_i32_0 : i32, i32, i32
  }
  func.func @transform_2(%arg0: i32, %arg1: i32) -> (i32, i32, i32) {
    %c0_i32 = arith.constant 0 : i32
    %c0_i32_0 = arith.constant 0 : i32
    return %arg0, %arg1, %c0_i32 : i32, i32, i32
  }
  func.func @transform_3(%arg0: i32, %arg1: i32) -> (i32, i32, i32, i32) {
    %c0_i32 = arith.constant 0 : i32
    %c0_i32_0 = arith.constant 0 : i32
    %c0_i32_1 = arith.constant 0 : i32
    return %arg0, %arg1, %c0_i32, %c0_i32_0 : i32, i32, i32, i32
  }
}

module attributes {stable_mosaic.version = 11 : i64} {
  func.func @_bn_relu_kernel(%arg0: i32, %arg1: i32, %arg2: memref<1x64x128xbf16, #tpu.memory_space<vmem>>, %arg3: memref<1x128xf32, #tpu.memory_space<vmem>>, %arg4: memref<1x128xf32, #tpu.memory_space<vmem>>, %arg5: memref<1x64x128xbf16, #tpu.memory_space<vmem>>) attributes {dimension_semantics = [#tpu.dimension_semantics<parallel>, #tpu.dimension_semantics<parallel>], iteration_bounds = array<i64: 4, 2>, scalar_prefetch = 0 : i64, scratch_operands = 0 : i64, tpu.core_type = #tpu.core_type<tc>, window_params = [{transform_indices = @transform_0, window_bounds = array<i64: 1, 64, 128>}, {pipeline_mode = #tpu.pipeline_mode<synchronous>, transform_indices = @transform_1, window_bounds = array<i64: 1, 128>}, {pipeline_mode = #tpu.pipeline_mode<synchronous>, transform_indices = @transform_2, window_bounds = array<i64: 1, 128>}, {transform_indices = @transform_3, window_bounds = array<i64: 1, 64, 128>}]} {
    %c0 = arith.constant 0 : index
    %c0_0 = arith.constant 0 : index
    %c0_1 = arith.constant 0 : index
    %0 = vector.load %arg2[%c0, %c0_0, %c0_1] : memref<1x64x128xbf16, #tpu.memory_space<vmem>>, vector<1x64x128xbf16>
    %1 = vector.shape_cast %0 : vector<1x64x128xbf16> to vector<64x128xbf16>
    %2 = arith.extf %1 : vector<64x128xbf16> to vector<64x128xf32>
    %c0_2 = arith.constant 0 : index
    %c0_3 = arith.constant 0 : index
    %3 = vector.load %arg3[%c0_2, %c0_3] : memref<1x128xf32, #tpu.memory_space<vmem>>, vector<1x128xf32>
    %4 = vector.broadcast %3 : vector<1x128xf32> to vector<64x128xf32>
    %5 = arith.mulf %2, %4 : vector<64x128xf32>
    %c0_4 = arith.constant 0 : index
    %c0_5 = arith.constant 0 : index
    %6 = vector.load %arg4[%c0_4, %c0_5] : memref<1x128xf32, #tpu.memory_space<vmem>>, vector<1x128xf32>
    %7 = vector.broadcast %6 : vector<1x128xf32> to vector<64x128xf32>
    %8 = arith.addf %5, %7 : vector<64x128xf32>
    %cst = arith.constant 0.000000e+00 : f32
    %9 = vector.broadcast %cst : f32 to vector<64x128xf32>
    %10 = arith.maximumf %8, %9 : vector<64x128xf32>
    %11 = arith.truncf %10 : vector<64x128xf32> to vector<64x128xbf16>
    %c0_6 = arith.constant 0 : index
    %c0_7 = arith.constant 0 : index
    %c0_8 = arith.constant 0 : index
    %12 = vector.load %arg5[%c0_6, %c0_7, %c0_8] : memref<1x64x128xbf16, #tpu.memory_space<vmem>>, vector<1x64x128xbf16>
    %13 = vector.shape_cast %12 : vector<1x64x128xbf16> to vector<64x128xbf16>
    %14 = vector.shape_cast %11 : vector<64x128xbf16> to vector<1x64x128xbf16>
    tpu.vector_store %arg5[%c0_6, %c0_7, %c0_8], %14 {strides = array<i32>} : memref<1x64x128xbf16, #tpu.memory_space<vmem>>, vector<1x64x128xbf16>,
    return
  }
  func.func @transform_0(%arg0: i32, %arg1: i32) -> (i32, i32, i32) {
    %c0_i32 = arith.constant 0 : i32
    %c0_i32_0 = arith.constant 0 : i32
    return %arg0, %arg1, %c0_i32 : i32, i32, i32
  }
  func.func @transform_1(%arg0: i32, %arg1: i32) -> (i32, i32) {
    %c0_i32 = arith.constant 0 : i32
    %c0_i32_0 = arith.constant 0 : i32
    %c0_i32_1 = arith.constant 0 : i32
    return %c0_i32, %c0_i32_0 : i32, i32
  }
  func.func @transform_2(%arg0: i32, %arg1: i32) -> (i32, i32) {
    %c0_i32 = arith.constant 0 : i32
    %c0_i32_0 = arith.constant 0 : i32
    %c0_i32_1 = arith.constant 0 : i32
    return %c0_i32, %c0_i32_0 : i32, i32
  }
  func.func @transform_3(%arg0: i32, %arg1: i32) -> (i32, i32, i32) {
    %c0_i32 = arith.constant 0 : i32
    %c0_i32_0 = arith.constant 0 : i32
    return %arg0, %arg1, %c0_i32 : i32, i32, i32
  }
}

module attributes {stable_mosaic.version = 11 : i64} {
  func.func @_phase_matmul_stats_kernel(%arg0: i32, %arg1: i32, %arg2: memref<1x256x64xbf16, #tpu.memory_space<vmem>>, %arg3: memref<1x64x128xbf16, #tpu.memory_space<vmem>>, %arg4: memref<1x256x128xbf16, #tpu.memory_space<vmem>>, %arg5: memref<1x1x2x128xf32, #tpu.memory_space<vmem>>) attributes {dimension_semantics = [#tpu.dimension_semantics<parallel>, #tpu.dimension_semantics<parallel>], iteration_bounds = array<i64: 4, 2>, scalar_prefetch = 0 : i64, scratch_operands = 0 : i64, tpu.core_type = #tpu.core_type<tc>, window_params = [{transform_indices = @transform_0, window_bounds = array<i64: 1, 256, 64>}, {transform_indices = @transform_1, window_bounds = array<i64: 1, 64, 128>}, {transform_indices = @transform_2, window_bounds = array<i64: 1, 256, 128>}, {transform_indices = @transform_3, window_bounds = array<i64: 1, 1, 2, 128>}]} {
    %c0 = arith.constant 0 : index
    %c0_0 = arith.constant 0 : index
    %c0_1 = arith.constant 0 : index
    %0 = vector.load %arg2[%c0, %c0_0, %c0_1] : memref<1x256x64xbf16, #tpu.memory_space<vmem>>, vector<1x256x64xbf16>
    %1 = vector.shape_cast %0 : vector<1x256x64xbf16> to vector<256x64xbf16>
    %c0_2 = arith.constant 0 : index
    %c0_3 = arith.constant 0 : index
    %c0_4 = arith.constant 0 : index
    %2 = vector.load %arg3[%c0_2, %c0_3, %c0_4] : memref<1x64x128xbf16, #tpu.memory_space<vmem>>, vector<1x64x128xbf16>
    %3 = vector.shape_cast %2 : vector<1x64x128xbf16> to vector<64x128xbf16>
    %cst = arith.constant dense<0.000000e+00> : vector<256x128xf32>
    %4 = tpu.matmul %1, %3, %cst {dimension_numbers = #tpu.dot_dimension_numbers<[1], [0], [0], [1], [0, 0, 1, 1], [], []>} : vector<256x64xbf16>, vector<64x128xbf16>, vector<256x128xf32> -> vector<256x128xf32>
    %5 = arith.truncf %4 : vector<256x128xf32> to vector<256x128xbf16>
    %c0_5 = arith.constant 0 : index
    %c0_6 = arith.constant 0 : index
    %c0_7 = arith.constant 0 : index
    %6 = vector.load %arg4[%c0_5, %c0_6, %c0_7] : memref<1x256x128xbf16, #tpu.memory_space<vmem>>, vector<1x256x128xbf16>
    %7 = vector.shape_cast %6 : vector<1x256x128xbf16> to vector<256x128xbf16>
    %8 = vector.shape_cast %5 : vector<256x128xbf16> to vector<1x256x128xbf16>
    tpu.vector_store %arg4[%c0_5, %c0_6, %c0_7], %8 {strides = array<i32>} : memref<1x256x128xbf16, #tpu.memory_space<vmem>>, vector<1x256x128xbf16>,
    %cst_8 = arith.constant dense<0.000000e+00> : vector<128xf32>
    %9 = vector.multi_reduction <add>, %4, %cst_8 [0] : vector<256x128xf32> to vector<128xf32>
    %10 = vector.shape_cast %9 : vector<128xf32> to vector<1x128xf32>
    %c0_9 = arith.constant 0 : index
    %c0_10 = arith.constant 0 : index
    %c0_11 = arith.constant 0 : index
    %c0_12 = arith.constant 0 : index
    %11 = vector.load %arg5[%c0_9, %c0_10, %c0_11, %c0_12] : memref<1x1x2x128xf32, #tpu.memory_space<vmem>>, vector<1x1x1x128xf32>
    %12 = vector.shape_cast %11 : vector<1x1x1x128xf32> to vector<1x128xf32>
    %13 = vector.shape_cast %10 : vector<1x128xf32> to vector<1x1x1x128xf32>
    tpu.vector_store %arg5[%c0_9, %c0_10, %c0_11, %c0_12], %13 {strides = array<i32>} : memref<1x1x2x128xf32, #tpu.memory_space<vmem>>, vector<1x1x1x128xf32>,
    %14 = arith.mulf %4, %4 : vector<256x128xf32>
    %cst_13 = arith.constant dense<0.000000e+00> : vector<128xf32>
    %15 = vector.multi_reduction <add>, %14, %cst_13 [0] : vector<256x128xf32> to vector<128xf32>
    %16 = vector.shape_cast %15 : vector<128xf32> to vector<1x128xf32>
    %c0_14 = arith.constant 0 : index
    %c0_15 = arith.constant 0 : index
    %c1 = arith.constant 1 : index
    %c0_16 = arith.constant 0 : index
    %17 = vector.load %arg5[%c0_14, %c0_15, %c1, %c0_16] : memref<1x1x2x128xf32, #tpu.memory_space<vmem>>, vector<1x1x1x128xf32>
    %18 = vector.shape_cast %17 : vector<1x1x1x128xf32> to vector<1x128xf32>
    %19 = vector.shape_cast %16 : vector<1x128xf32> to vector<1x1x1x128xf32>
    tpu.vector_store %arg5[%c0_14, %c0_15, %c1, %c0_16], %19 {strides = array<i32>} : memref<1x1x2x128xf32, #tpu.memory_space<vmem>>, vector<1x1x1x128xf32>,
    return
  }
  func.func @transform_0(%arg0: i32, %arg1: i32) -> (i32, i32, i32) {
    %c0_i32 = arith.constant 0 : i32
    %c0_i32_0 = arith.constant 0 : i32
    return %arg0, %arg1, %c0_i32 : i32, i32, i32
  }
  func.func @transform_1(%arg0: i32, %arg1: i32) -> (i32, i32, i32) {
    %c0_i32 = arith.constant 0 : i32
    %c0_i32_0 = arith.constant 0 : i32
    %c0_i32_1 = arith.constant 0 : i32
    return %arg0, %c0_i32, %c0_i32_0 : i32, i32, i32
  }
  func.func @transform_2(%arg0: i32, %arg1: i32) -> (i32, i32, i32) {
    %c0_i32 = arith.constant 0 : i32
    %c0_i32_0 = arith.constant 0 : i32
    return %arg0, %arg1, %c0_i32 : i32, i32, i32
  }
  func.func @transform_3(%arg0: i32, %arg1: i32) -> (i32, i32, i32, i32) {
    %c0_i32 = arith.constant 0 : i32
    %c0_i32_0 = arith.constant 0 : i32
    %c0_i32_1 = arith.constant 0 : i32
    return %arg0, %arg1, %c0_i32, %c0_i32_0 : i32, i32, i32, i32
  }
}

module attributes {stable_mosaic.version = 11 : i64} {
  func.func @_bn_relu_kernel(%arg0: i32, %arg1: i32, %arg2: memref<1x256x128xbf16, #tpu.memory_space<vmem>>, %arg3: memref<1x128xf32, #tpu.memory_space<vmem>>, %arg4: memref<1x128xf32, #tpu.memory_space<vmem>>, %arg5: memref<1x256x128xbf16, #tpu.memory_space<vmem>>) attributes {dimension_semantics = [#tpu.dimension_semantics<parallel>, #tpu.dimension_semantics<parallel>], iteration_bounds = array<i64: 4, 2>, scalar_prefetch = 0 : i64, scratch_operands = 0 : i64, tpu.core_type = #tpu.core_type<tc>, window_params = [{transform_indices = @transform_0, window_bounds = array<i64: 1, 256, 128>}, {pipeline_mode = #tpu.pipeline_mode<synchronous>, transform_indices = @transform_1, window_bounds = array<i64: 1, 128>}, {pipeline_mode = #tpu.pipeline_mode<synchronous>, transform_indices = @transform_2, window_bounds = array<i64: 1, 128>}, {transform_indices = @transform_3, window_bounds = array<i64: 1, 256, 128>}]} {
    %c0 = arith.constant 0 : index
    %c0_0 = arith.constant 0 : index
    %c0_1 = arith.constant 0 : index
    %0 = vector.load %arg2[%c0, %c0_0, %c0_1] : memref<1x256x128xbf16, #tpu.memory_space<vmem>>, vector<1x256x128xbf16>
    %1 = vector.shape_cast %0 : vector<1x256x128xbf16> to vector<256x128xbf16>
    %2 = arith.extf %1 : vector<256x128xbf16> to vector<256x128xf32>
    %c0_2 = arith.constant 0 : index
    %c0_3 = arith.constant 0 : index
    %3 = vector.load %arg3[%c0_2, %c0_3] : memref<1x128xf32, #tpu.memory_space<vmem>>, vector<1x128xf32>
    %4 = vector.broadcast %3 : vector<1x128xf32> to vector<256x128xf32>
    %5 = arith.mulf %2, %4 : vector<256x128xf32>
    %c0_4 = arith.constant 0 : index
    %c0_5 = arith.constant 0 : index
    %6 = vector.load %arg4[%c0_4, %c0_5] : memref<1x128xf32, #tpu.memory_space<vmem>>, vector<1x128xf32>
    %7 = vector.broadcast %6 : vector<1x128xf32> to vector<256x128xf32>
    %8 = arith.addf %5, %7 : vector<256x128xf32>
    %cst = arith.constant 0.000000e+00 : f32
    %9 = vector.broadcast %cst : f32 to vector<256x128xf32>
    %10 = arith.maximumf %8, %9 : vector<256x128xf32>
    %11 = arith.truncf %10 : vector<256x128xf32> to vector<256x128xbf16>
    %c0_6 = arith.constant 0 : index
    %c0_7 = arith.constant 0 : index
    %c0_8 = arith.constant 0 : index
    %12 = vector.load %arg5[%c0_6, %c0_7, %c0_8] : memref<1x256x128xbf16, #tpu.memory_space<vmem>>, vector<1x256x128xbf16>
    %13 = vector.shape_cast %12 : vector<1x256x128xbf16> to vector<256x128xbf16>
    %14 = vector.shape_cast %11 : vector<256x128xbf16> to vector<1x256x128xbf16>
    tpu.vector_store %arg5[%c0_6, %c0_7, %c0_8], %14 {strides = array<i32>} : memref<1x256x128xbf16, #tpu.memory_space<vmem>>, vector<1x256x128xbf16>,
    return
  }
  func.func @transform_0(%arg0: i32, %arg1: i32) -> (i32, i32, i32) {
    %c0_i32 = arith.constant 0 : i32
    %c0_i32_0 = arith.constant 0 : i32
    return %arg0, %arg1, %c0_i32 : i32, i32, i32
  }
  func.func @transform_1(%arg0: i32, %arg1: i32) -> (i32, i32) {
    %c0_i32 = arith.constant 0 : i32
    %c0_i32_0 = arith.constant 0 : i32
    %c0_i32_1 = arith.constant 0 : i32
    return %c0_i32, %c0_i32_0 : i32, i32
  }
  func.func @transform_2(%arg0: i32, %arg1: i32) -> (i32, i32) {
    %c0_i32 = arith.constant 0 : i32
    %c0_i32_0 = arith.constant 0 : i32
    %c0_i32_1 = arith.constant 0 : i32
    return %c0_i32, %c0_i32_0 : i32, i32
  }
  func.func @transform_3(%arg0: i32, %arg1: i32) -> (i32, i32, i32) {
    %c0_i32 = arith.constant 0 : i32
    %c0_i32_0 = arith.constant 0 : i32
    return %arg0, %arg1, %c0_i32 : i32, i32, i32
  }
}

module attributes {stable_mosaic.version = 11 : i64} {
  func.func @_phase_matmul_tanh_kernel(%arg0: i32, %arg1: i32, %arg2: memref<1x1024x32xbf16, #tpu.memory_space<vmem>>, %arg3: memref<1x32x128xbf16, #tpu.memory_space<vmem>>, %arg4: memref<1x1024x128xbf16, #tpu.memory_space<vmem>>) attributes {dimension_semantics = [#tpu.dimension_semantics<parallel>, #tpu.dimension_semantics<parallel>], iteration_bounds = array<i64: 4, 2>, scalar_prefetch = 0 : i64, scratch_operands = 0 : i64, tpu.core_type = #tpu.core_type<tc>, window_params = [{transform_indices = @transform_0, window_bounds = array<i64: 1, 1024, 32>}, {transform_indices = @transform_1, window_bounds = array<i64: 1, 32, 128>}, {transform_indices = @transform_2, window_bounds = array<i64: 1, 1024, 128>}]} {
    %c0 = arith.constant 0 : index
    %c0_0 = arith.constant 0 : index
    %c0_1 = arith.constant 0 : index
    %0 = vector.load %arg2[%c0, %c0_0, %c0_1] : memref<1x1024x32xbf16, #tpu.memory_space<vmem>>, vector<1x1024x32xbf16>
    %1 = vector.shape_cast %0 : vector<1x1024x32xbf16> to vector<1024x32xbf16>
    %c0_2 = arith.constant 0 : index
    %c0_3 = arith.constant 0 : index
    %c0_4 = arith.constant 0 : index
    %2 = vector.load %arg3[%c0_2, %c0_3, %c0_4] : memref<1x32x128xbf16, #tpu.memory_space<vmem>>, vector<1x32x128xbf16>
    %3 = vector.shape_cast %2 : vector<1x32x128xbf16> to vector<32x128xbf16>
    %cst = arith.constant dense<0.000000e+00> : vector<1024x128xf32>
    %4 = tpu.matmul %1, %3, %cst {dimension_numbers = #tpu.dot_dimension_numbers<[1], [0], [0], [1], [0, 0, 1, 1], [], []>} : vector<1024x32xbf16>, vector<32x128xbf16>, vector<1024x128xf32> -> vector<1024x128xf32>
    %5 = math.tanh %4 : vector<1024x128xf32>
    %6 = arith.truncf %5 : vector<1024x128xf32> to vector<1024x128xbf16>
    %c0_5 = arith.constant 0 : index
    %c0_6 = arith.constant 0 : index
    %c0_7 = arith.constant 0 : index
    %7 = vector.load %arg4[%c0_5, %c0_6, %c0_7] : memref<1x1024x128xbf16, #tpu.memory_space<vmem>>, vector<1x1024x128xbf16>
    %8 = vector.shape_cast %7 : vector<1x1024x128xbf16> to vector<1024x128xbf16>
    %9 = vector.shape_cast %6 : vector<1024x128xbf16> to vector<1x1024x128xbf16>
    tpu.vector_store %arg4[%c0_5, %c0_6, %c0_7], %9 {strides = array<i32>} : memref<1x1024x128xbf16, #tpu.memory_space<vmem>>, vector<1x1024x128xbf16>,
    return
  }
  func.func @transform_0(%arg0: i32, %arg1: i32) -> (i32, i32, i32) {
    %c0_i32 = arith.constant 0 : i32
    %c0_i32_0 = arith.constant 0 : i32
    return %arg0, %arg1, %c0_i32 : i32, i32, i32
  }
  func.func @transform_1(%arg0: i32, %arg1: i32) -> (i32, i32, i32) {
    %c0_i32 = arith.constant 0 : i32
    %c0_i32_0 = arith.constant 0 : i32
    %c0_i32_1 = arith.constant 0 : i32
    return %arg0, %c0_i32, %c0_i32_0 : i32, i32, i32
  }
  func.func @transform_2(%arg0: i32, %arg1: i32) -> (i32, i32, i32) {
    %c0_i32 = arith.constant 0 : i32
    %c0_i32_0 = arith.constant 0 : i32
    return %arg0, %arg1, %c0_i32 : i32, i32, i32
  }
}

</mosaic_0001>

<llo_original>
// kernel: a_call__.10
$region0: #{a_call__.10}
  #allocation0 [shape = 'u32[]', space=smem, size = 0x4, offset = 0x4, fixed_abs, tag = 'smem constant byte address 0x4 - core index']
  #allocation1 [shape = 'u32[72,128]{1,0:T(1,128)}', space=vmem, size = 0x9000, scoped, tag = 'internal scratch']
  %s0 = inlined_call_operand.vmem [shape: f32[32,128], index: 0, kind: input, shape index: {}]
  %s1 = inlined_call_operand.vmem [shape: f32[1,128], index: 1, kind: input, shape index: {}]
  %s2 = inlined_call_operand.vmem [shape: f32[1,128], index: 2, kind: input, shape index: {}]
  %s3 = inlined_call_operand.vmem [shape: bf16[32,128], index: 3, kind: output, shape index: {}]
  %s4 = sld [smem:[#allocation0]]
  $region45: #{a_call__.10} parent=0
    _
  %s6 = ssub.s32 1, %s4
  %s7 = scalar_select 0, %s6, %s4
  loop: start=0, step=1, limit=4
  $region2: #{a_call__.10} parent=0 // loop_pre_header
    _
  $region3: #{a_call__.10} parent=0 // loop_header
    %s9 = sphi 0, %s13
    %p10 = scmp.ge.s32.totalorder %s9, 4
    %s19 = sphi 0, %s21
    %s22 = sphi 0, %s19
    %s23 = sphi 0, %s22
    %s39 = sphi 0, %s23
    %s43 = sphi 0, %s43
    %s45 = sphi 0, %s43
    %s46 = sphi 0, %s45
    %s60 = sphi 0, %s46
    %s64 = sphi 0, %s64
    %s66 = sphi 0, %s64
    %s67 = sphi 0, %s66
    %s81 = sphi 0, %s67
    %s87 = sphi 0, %s89
    %s90 = sphi 0, %s87
    %s91 = sphi 0, %s90
    %s107 = sphi 0, %s91
  $region4: #{a_call__.10} parent=0 // loop_header_branch
    %12 = sbr.rel (%p10) target = $region8
  $region5: #{a_call__.10} parent=0 // loop_body
    %s14 = ssub.s32 %s9, 1
    %s15 = ssub.s32 %s9, 2
    %s16 = sadd.s32 %s9, 1
    %s17 = ssub.s32 %s9, %s16
    %p18 = scmp.eq.s32.totalorder %s17, 0
    %s20 = sadd.s32 %s19, 1
    %s21 = scalar_select %p18, %s19, %s20
    %p24 = pneg %p18
    %p25 = scmp.eq.s32.totalorder %s9, 1
    %p26 = por %p24, %p25
    %p27 = scmp.ne.s32.totalorder %s19, %s22
    %p28 = scmp.eq.s32.totalorder %s9, 0
    %p29 = por %p27, %p28
    %p30 = scmp.ne.s32.totalorder %s19, %s22
    %p31 = scmp.eq.s32.totalorder %s14, 1
    %p32 = por %p30, %p31
    %p33 = scmp.ne.s32.totalorder %s22, %s23
    %p34 = scmp.eq.s32.totalorder %s14, 0
    %p35 = por %p33, %p34
    %p36 = scmp.ne.s32.totalorder %s22, %s23
    %p37 = scmp.eq.s32.totalorder %s15, 1
    %p38 = por %p36, %p37
    %p40 = scmp.ne.s32.totalorder %s23, %s39
    %p41 = scmp.eq.s32.totalorder %s15, 0
    %p42 = por %p40, %p41
    %s44 = sadd.s32 %s43, 1
    %p47 = scmp.eq.s32.totalorder %s9, 1
    %p48 = scmp.ne.s32.totalorder %s43, %s45
    %p49 = scmp.eq.s32.totalorder %s9, 0
    %p50 = por %p48, %p49
    %p51 = scmp.ne.s32.totalorder %s43, %s45
    %p52 = scmp.eq.s32.totalorder %s14, 1
    %p53 = por %p51, %p52
    %p54 = scmp.ne.s32.totalorder %s45, %s46
    %p55 = scmp.eq.s32.totalorder %s14, 0
    %p56 = por %p54, %p55
    %p57 = scmp.ne.s32.totalorder %s45, %s46
    %p58 = scmp.eq.s32.totalorder %s15, 1
    %p59 = por %p57, %p58
    %p61 = scmp.ne.s32.totalorder %s46, %s60
    %p62 = scmp.eq.s32.totalorder %s15, 0
    %p63 = por %p61, %p62
    %s65 = sadd.s32 %s64, 1
    %p68 = scmp.eq.s32.totalorder %s9, 1
    %p69 = scmp.ne.s32.totalorder %s64, %s66
    %p70 = scmp.eq.s32.totalorder %s9, 0
    %p71 = por %p69, %p70
    %p72 = scmp.ne.s32.totalorder %s64, %s66
    %p73 = scmp.eq.s32.totalorder %s14, 1
    %p74 = por %p72, %p73
    %p75 = scmp.ne.s32.totalorder %s66, %s67
    %p76 = scmp.eq.s32.totalorder %s14, 0
    %p77 = por %p75, %p76
    %p78 = scmp.ne.s32.totalorder %s66, %s67
    %p79 = scmp.eq.s32.totalorder %s15, 1
    %p80 = por %p78, %p79
    %p82 = scmp.ne.s32.totalorder %s67, %s81
    %p83 = scmp.eq.s32.totalorder %s15, 0
    %p84 = por %p82, %p83
    %s85 = ssub.s32 %s9, %s16
    %p86 = scmp.eq.s32.totalorder %s85, 0
    %s88 = sadd.s32 %s87, 1
    %s89 = scalar_select %p86, %s87, %s88
    %p92 = pneg %p86
    %p93 = scmp.eq.s32.totalorder %s9, 1
    %p94 = por %p92, %p93
    %p95 = scmp.ne.s32.totalorder %s87, %s90
    %p96 = scmp.eq.s32.totalorder %s9, 0
    %p97 = por %p95, %p96
    %p98 = scmp.ne.s32.totalorder %s87, %s90
    %p99 = scmp.eq.s32.totalorder %s14, 1
    %p100 = por %p98, %p99
    %p101 = scmp.ne.s32.totalorder %s90, %s91
    %p102 = scmp.eq.s32.totalorder %s14, 0
    %p103 = por %p101, %p102
    %p104 = scmp.ne.s32.totalorder %s90, %s91
    %p105 = scmp.eq.s32.totalorder %s15, 1
    %p106 = por %p104, %p105
    %p108 = scmp.ne.s32.totalorder %s91, %s107
    %p109 = scmp.eq.s32.totalorder %s15, 0
    %p110 = por %p108, %p109
    %p111 = scmp.le.s32.totalorder 1, %s9
    %p112 = scmp.lt.s32.totalorder %s9, 3
    %p113 = pnand %p111, %p112
    %p114 = pneg %p113
    // Predicated region
    $region9: #{a_call__.10} parent=5 // pred_check
      _
    $region10: #{a_call__.10} parent=5 // pred_check_branch
      %116 = sbr.rel (%p113) target = $region12
    $region11: #{a_call__.10} parent=5 // pred_region
      %s117 = ssub.s32 %s9, 1
      // Predicated region
      $region13: #{a_call__.10} parent=11 // pred_check
        %p118 = pneg %p56
      $region14: #{a_call__.10} parent=11 // pred_check_branch
        %120 = sbr.rel (%p118) target = $region16
      $region15: #{a_call__.10} parent=11 // pred_region
        _
      $region16: #{a_call__.10} parent=11 // pred_fallthru
        _
      // Predicated region
      $region17: #{a_call__.10} parent=11 // pred_check
        %p121 = pneg %p77
      $region18: #{a_call__.10} parent=11 // pred_check_branch
        %123 = sbr.rel (%p121) target = $region20
      $region19: #{a_call__.10} parent=11 // pred_region
        _
      $region20: #{a_call__.10} parent=11 // pred_fallthru
        _
    $region12: #{a_call__.10} parent=5 // pred_fallthru
      _
    %p124 = scmp.lt.s32.totalorder %s9, 2
    // Predicated region
    $region21: #{a_call__.10} parent=5 // pred_check
      %p125 = pneg %p124
    $region22: #{a_call__.10} parent=5 // pred_check_branch
      %127 = sbr.rel (%p125) target = $region24
    $region23: #{a_call__.10} parent=5 // pred_region
      // Predicated region
      $region25: #{a_call__.10} parent=23 // pred_check
        %p128 = pneg %p29
      $region26: #{a_call__.10} parent=23 // pred_check_branch
        %130 = sbr.rel (%p128) target = $region28
      $region27: #{a_call__.10} parent=23 // pred_region
        %s131 = smul.u32 2, %s9
        %p132 = scmp.lt.s32.totalorder %s131, 3
        %s133 = scalar_select %p132, %s131, 3
        %s134 = smul.addr %s133, 8
        %s135 = scalar_lea.vmem %s0, %s134
        %s136 = smul.u32 2, %s9
      $region28: #{a_call__.10} parent=23 // pred_fallthru
        _
    $region24: #{a_call__.10} parent=5 // pred_fallthru
      _
    %p137 = scmp.le.s32.totalorder 1, %s9
    %p138 = scmp.lt.s32.totalorder %s9, 3
    %p139 = pnand %p137, %p138
    %p140 = pneg %p139
    // Predicated region
    $region29: #{a_call__.10} parent=5 // pred_check
      _
    $region30: #{a_call__.10} parent=5 // pred_check_branch
      %142 = sbr.rel (%p139) target = $region32
    $region31: #{a_call__.10} parent=5 // pred_region
      %s143 = ssub.s32 %s9, 1
      %s144 = smul.u32 2, %s14
      %p145 = scmp.lt.s32.totalorder %s144, 3
      %s146 = scalar_select %p145, %s144, 3
      %s147 = smul.addr %s146, 8
      %s148 = scalar_lea.vmem %s0, %s147
      %p149 = pneg %p35
      %p150 = pneg %p32
      %p151 = pneg %p56
      %p152 = pneg %p53
      %p153 = pneg %p77
      %p154 = pneg %p74
      %p155 = pneg %p103
      %p156 = pneg %p100
      %s157 = smul.u32 2, %s14
      %p158 = scmp.lt.s32.totalorder %s157, 3
      %s159 = scalar_select %p158, %s157, 3
      %s160 = smul.addr %s159, 4
      %s161 = scalar_lea.vmem %s3, %s160
      %s162 = smul.u32 2, %s14
      %p163 = scmp.lt.s32.totalorder %s162, 3
      %s164 = scalar_select %p163, %s162, 3
      %s165 = smul.addr %s164, 8
      %s166 = scalar_lea.vmem %s0, %s165
      %s167 = smul.u32 2, %s14
      %s168 = smul.u32 2, %s14
      %p169 = scmp.lt.s32.totalorder %s168, 3
      %s170 = scalar_select %p169, %s168, 3
      %s171 = smul.addr %s170, 4
      %s172 = scalar_lea.vmem %s3, %s171
      %s173 = smul.u32 2, %s14
      %v174 = vld [vmem:[%s166] sm:$0xff]
      %v175 = vld [vmem:[%s166 + $0x8] sm:$0xff]
      %v176 = vld [vmem:[%s1] sm:$0x1]
      %v178 = vperm.slane %v176, 0
      %v180 = vmul.f32 %v174, %v178
      %v181 = vmul.f32 %v175, %v178
      %v182 = vld [vmem:[%s2] sm:$0x1]
      %v184 = vperm.slane %v182, 0
      %v186 = vadd.f32 %v180, %v184
      %v187 = vadd.f32 %v181, %v184
      %v188 = vmax.f32 %v186, 0.0
      %v189 = vmax.f32 %v187, 0.0
      %v190 = vpack.c.bf16 %v188, %v188
      %v191 = vpack.c.bf16 %v189, %v189
      %192 = vst [vmem:[%s172] sm:$0xf] %v190
      %193 = vst [vmem:[%s172 + $0x4] sm:$0xf] %v191
      %s194 = smul.u32 2, %s14
      %p195 = scmp.lt.s32.totalorder %s194, 3
      %s196 = scalar_select %p195, %s194, 3
      %s197 = smul.addr %s196, 4
      %s198 = scalar_lea.vmem %s3, %s197
      // Predicated region
      $region33: #{a_call__.10} parent=31 // pred_check
        %p199 = pneg %p100
      $region34: #{a_call__.10} parent=31 // pred_check_branch
        %201 = sbr.rel (%p199) target = $region36
      $region35: #{a_call__.10} parent=31 // pred_region
        %s202 = smul.u32 2, %s14
      $region36: #{a_call__.10} parent=31 // pred_fallthru
        _
    $region32: #{a_call__.10} parent=5 // pred_fallthru
      _
    %p203 = scmp.le.s32.totalorder 2, %s9
    // Predicated region
    $region37: #{a_call__.10} parent=5 // pred_check
      %p204 = pneg %p203
    $region38: #{a_call__.10} parent=5 // pred_check_branch
      %206 = sbr.rel (%p204) target = $region40
    $region39: #{a_call__.10} parent=5 // pred_region
      %s207 = ssub.s32 %s9, 2
      // Predicated region
      $region41: #{a_call__.10} parent=39 // pred_check
        %p208 = pneg %p106
      $region42: #{a_call__.10} parent=39 // pred_check_branch
        %210 = sbr.rel (%p208) target = $region44
      $region43: #{a_call__.10} parent=39 // pred_region
        %s211 = smul.u32 2, %s15
        %p212 = scmp.lt.s32.totalorder %s211, 3
        %s213 = scalar_select %p212, %s211, 3
        %s214 = smul.addr %s213, 4
        %s215 = scalar_lea.vmem %s3, %s214
      $region44: #{a_call__.10} parent=39 // pred_fallthru
        _
    $region40: #{a_call__.10} parent=5 // pred_fallthru
      _
  $region6: #{a_call__.10} parent=0 // loop_footer
    %s13 = sadd.s32 1, %s9
  $region7: #{a_call__.10} parent=0 // loop_footer_branch
    %8 = sbr.rel target = $region3
  $region8: #{a_call__.10} parent=0 // loop_exit
    _

// kernel: a_call__.9
$region0: #{a_call__.9}
  #allocation0 [shape = 'u32[]', space=smem, size = 0x4, offset = 0x4, fixed_abs, tag = 'smem constant byte address 0x4 - core index']
  #allocation1 [shape = 'u32[72,128]{1,0:T(1,128)}', space=vmem, size = 0x9000, scoped, tag = 'internal scratch']
  %s0 = inlined_call_operand.vmem [shape: bf16[2,32], index: 0, kind: input, shape index: {}]
  %s1 = inlined_call_operand.hbm [shape: bf16[32,2048], index: 1, kind: input, shape index: {}]
  %s2 = inlined_call_operand.vmem [shape: f32[2,2048], index: 2, kind: output, shape index: {}]
  %s3 = sld [smem:[#allocation0]]
  $region22: #{a_call__.9} parent=0
    _
  %s5 = ssub.s32 1, %s3
  %s6 = scalar_select 0, %s5, %s3
  $region1: #{a_call__.9} parent=0
    #allocation2 [shape = 'u8[131072]{0}', space=vmem, size = 0x20000, scoped, tag = 'input window, operand 1, single buffered']
    #allocation3 [shape = 's32[1]{0}', space=sflag, size = 0x4, scoped, tag = 'scoped memory for a_call__.9']
    %7 = vsyncpa [#allocation3], 0
    // Predicated region
    $region2: #{a_call__.9} parent=1 // pred_check
      _
    $region3: #{a_call__.9} parent=1 // pred_check_branch
      %9 = sbr.rel (0) target = $region5
    $region4: #{a_call__.9} parent=1 // pred_region
      _
    $region5: #{a_call__.9} parent=1 // pred_fallthru
      _
    // Predicated region
    $region6: #{a_call__.9} parent=1 // pred_check
      _
    $region7: #{a_call__.9} parent=1 // pred_check_branch
      %11 = sbr.rel (0) target = $region9
    $region8: #{a_call__.9} parent=1 // pred_region
      %13 = vsyncadd [#allocation3], 0
      %s14 = sshll.u32 %s1, 4
      %s15 = int_to_ptr.hbm [resolvable:$true] %s14
      %s16 = sshll.u32 [#allocation2], 4
      %s17 = int_to_ptr.vmem [resolvable:$true] %s16
      %22 = dma.hbm_to_vmem [thread:$0]  %s15, 4096, %s17, [#allocation3], 1024, 1024, 64
    $region9: #{a_call__.9} parent=1 // pred_fallthru
      _
    // Predicated region
    $region10: #{a_call__.9} parent=1 // pred_check
      _
    $region11: #{a_call__.9} parent=1 // pred_check_branch
      %24 = sbr.rel (0) target = $region13
    $region12: #{a_call__.9} parent=1 // pred_region
      %26 = dma.done [#allocation3], 4096
    $region13: #{a_call__.9} parent=1 // pred_fallthru
      _
    %v28 = vld [vmem:[%s0] sm:$0x1]
    %v29 = vld [vmem:[#allocation2] sm:$0xff]
    %v30 = vld [vmem:[#allocation2 + $0x8] sm:$0xff]
    %v31 = vld [vmem:[#allocation2 + $0x10] sm:$0xff]
    %v32 = vld [vmem:[#allocation2 + $0x18] sm:$0xff]
    %v33 = vld [vmem:[#allocation2 + $0x20] sm:$0xff]
    %v34 = vld [vmem:[#allocation2 + $0x28] sm:$0xff]
    %v35 = vld [vmem:[#allocation2 + $0x30] sm:$0xff]
    %v36 = vld [vmem:[#allocation2 + $0x38] sm:$0xff]
    %v37 = vld [vmem:[#allocation2 + $0x40] sm:$0xff]
    %v38 = vld [vmem:[#allocation2 + $0x48] sm:$0xff]
    %v39 = vld [vmem:[#allocation2 + $0x50] sm:$0xff]
    %v40 = vld [vmem:[#allocation2 + $0x58] sm:$0xff]
    %v41 = vld [vmem:[#allocation2 + $0x60] sm:$0xff]
    %v42 = vld [vmem:[#allocation2 + $0x68] sm:$0xff]
    %v43 = vld [vmem:[#allocation2 + $0x70] sm:$0xff]
    %v44 = vld [vmem:[#allocation2 + $0x78] sm:$0xff]
    %v45 = vld [vmem:[#allocation2 + $0x80] sm:$0xff]
    %v46 = vld [vmem:[#allocation2 + $0x88] sm:$0xff]
    %v47 = vld [vmem:[#allocation2 + $0x90] sm:$0xff]
    %v48 = vld [vmem:[#allocation2 + $0x98] sm:$0xff]
    %v49 = vld [vmem:[#allocation2 + $0xa0] sm:$0xff]
    %v50 = vld [vmem:[#allocation2 + $0xa8] sm:$0xff]
    %v51 = vld [vmem:[#allocation2 + $0xb0] sm:$0xff]
    %v52 = vld [vmem:[#allocation2 + $0xb8] sm:$0xff]
    %v53 = vld [vmem:[#allocation2 + $0xc0] sm:$0xff]
    %v54 = vld [vmem:[#allocation2 + $0xc8] sm:$0xff]
    %v55 = vld [vmem:[#allocation2 + $0xd0] sm:$0xff]
    %v56 = vld [vmem:[#allocation2 + $0xd8] sm:$0xff]
    %v57 = vld [vmem:[#allocation2 + $0xe0] sm:$0xff]
    %v58 = vld [vmem:[#allocation2 + $0xe8] sm:$0xff]
    %v59 = vld [vmem:[#allocation2 + $0xf0] sm:$0xff]
    %v60 = vld [vmem:[#allocation2 + $0xf8] sm:$0xff]
    %v93 = vunpack.c.l.b16 %v29
    %v94 = vunpack.c.h.b16 %v29
    %v95 = vunpack.c.l.b16 %v30
    %v96 = vunpack.c.h.b16 %v30
    %v97 = vunpack.c.l.b16 %v31
    %v98 = vunpack.c.h.b16 %v31
    %v99 = vunpack.c.l.b16 %v32
    %v100 = vunpack.c.h.b16 %v32
    %v101 = vunpack.c.l.b16 %v33
    %v102 = vunpack.c.h.b16 %v33
    %v103 = vunpack.c.l.b16 %v34
    %v104 = vunpack.c.h.b16 %v34
    %v105 = vunpack.c.l.b16 %v35
    %v106 = vunpack.c.h.b16 %v35
    %v107 = vunpack.c.l.b16 %v36
    %v108 = vunpack.c.h.b16 %v36
    %v109 = vunpack.c.l.b16 %v37
    %v110 = vunpack.c.h.b16 %v37
    %v111 = vunpack.c.l.b16 %v38
    %v112 = vunpack.c.h.b16 %v38
    %v113 = vunpack.c.l.b16 %v39
    %v114 = vunpack.c.h.b16 %v39
    %v115 = vunpack.c.l.b16 %v40
    %v116 = vunpack.c.h.b16 %v40
    %v117 = vunpack.c.l.b16 %v41
    %v118 = vunpack.c.h.b16 %v41
    %v119 = vunpack.c.l.b16 %v42
    %v120 = vunpack.c.h.b16 %v42
    %v121 = vunpack.c.l.b16 %v43
    %v122 = vunpack.c.h.b16 %v43
    %v123 = vunpack.c.l.b16 %v44
    %v124 = vunpack.c.h.b16 %v44
    %v125 = vunpack.c.l.b16 %v45
    %v126 = vunpack.c.h.b16 %v45
    %v127 = vunpack.c.l.b16 %v46
    %v128 = vunpack.c.h.b16 %v46
    %v129 = vunpack.c.l.b16 %v47
    %v130 = vunpack.c.h.b16 %v47
    %v131 = vunpack.c.l.b16 %v48
    %v132 = vunpack.c.h.b16 %v48
    %v133 = vunpack.c.l.b16 %v49
    %v134 = vunpack.c.h.b16 %v49
    %v135 = vunpack.c.l.b16 %v50
    %v136 = vunpack.c.h.b16 %v50
    %v137 = vunpack.c.l.b16 %v51
    %v138 = vunpack.c.h.b16 %v51
    %v139 = vunpack.c.l.b16 %v52
    %v140 = vunpack.c.h.b16 %v52
    %v141 = vunpack.c.l.b16 %v53
    %v142 = vunpack.c.h.b16 %v53
    %v143 = vunpack.c.l.b16 %v54
    %v144 = vunpack.c.h.b16 %v54
    %v145 = vunpack.c.l.b16 %v55
    %v146 = vunpack.c.h.b16 %v55
    %v147 = vunpack.c.l.b16 %v56
    %v148 = vunpack.c.h.b16 %v56
    %v149 = vunpack.c.l.b16 %v57
    %v150 = vunpack.c.h.b16 %v57
    %v151 = vunpack.c.l.b16 %v58
    %v152 = vunpack.c.h.b16 %v58
    %v153 = vunpack.c.l.b16 %v59
    %v154 = vunpack.c.h.b16 %v59
    %v155 = vunpack.c.l.b16 %v60
    %v156 = vunpack.c.h.b16 %v60
    %v157 = vpack.c.b16 %v109, %v93
    %v158 = vpack.c.b16 %v110, %v94
    %v159 = vpack.c.b16 %v111, %v95
    %v160 = vpack.c.b16 %v112, %v96
    %v161 = vpack.c.b16 %v113, %v97
    %v162 = vpack.c.b16 %v114, %v98
    %v163 = vpack.c.b16 %v115, %v99
    %v164 = vpack.c.b16 %v116, %v100
    %v165 = vpack.c.b16 %v117, %v101
    %v166 = vpack.c.b16 %v118, %v102
    %v167 = vpack.c.b16 %v119, %v103
    %v168 = vpack.c.b16 %v120, %v104
    %v169 = vpack.c.b16 %v121, %v105
    %v170 = vpack.c.b16 %v122, %v106
    %v171 = vpack.c.b16 %v123, %v107
    %v172 = vpack.c.b16 %v124, %v108
    %v173 = vpack.c.b16 %v141, %v125
    %v174 = vpack.c.b16 %v142, %v126
    %v175 = vpack.c.b16 %v143, %v127
    %v176 = vpack.c.b16 %v144, %v128
    %v177 = vpack.c.b16 %v145, %v129
    %v178 = vpack.c.b16 %v146, %v130
    %v179 = vpack.c.b16 %v147, %v131
    %v180 = vpack.c.b16 %v148, %v132
    %v181 = vpack.c.b16 %v149, %v133
    %v182 = vpack.c.b16 %v150, %v134
    %v183 = vpack.c.b16 %v151, %v135
    %v184 = vpack.c.b16 %v152, %v136
    %v185 = vpack.c.b16 %v153, %v137
    %v186 = vpack.c.b16 %v154, %v138
    %v187 = vpack.c.b16 %v155, %v139
    %v188 = vpack.c.b16 %v156, %v140
    %vm221 = vcmask 261120
    %v223 = vsel %vm221, %v28, 0
    %225 = vmatpush.bf16.msra.mxu0 0
    %226 = vmatpush.bf16.msra.mxu0 0
    %227 = vmatpush.bf16.msra.mxu0 0
    %228 = vmatpush.bf16.msra.mxu0 0
    %229 = vmatpush.bf16.msra.mxu0 0
    %230 = vmatpush.bf16.msra.mxu0 0
    %231 = vmatpush.bf16.msra.mxu0 %v173
    %232 = vmatpush.bf16.msra.mxu0 %v157
    %233 = vmatmul.bf16.gmra.mxu0 %v223
    %v234 = vpop.f32.mrf.mxu0
    %v235 = vadd.f32 0.0, %v234
    %v236 = vpop.f32.mrf.mxu0
    %237 = vdwg.mxu0
    %238 = vmatpush.bf16.msra.mxu0 0
    %239 = vmatpush.bf16.msra.mxu0 0
    %240 = vmatpush.bf16.msra.mxu0 0
    %241 = vmatpush.bf16.msra.mxu0 0
    %242 = vmatpush.bf16.msra.mxu0 0
    %243 = vmatpush.bf16.msra.mxu0 0
    %244 = vmatpush.bf16.msra.mxu0 %v174
    %245 = vmatpush.bf16.msra.mxu0 %v158
    %246 = vmatmul.bf16.gmra.mxu0 %v223
    %v247 = vpop.f32.mrf.mxu0
    %v248 = vadd.f32 0.0, %v247
    %v249 = vpop.f32.mrf.mxu0
    %250 = vdwg.mxu0
    %251 = vmatpush.bf16.msra.mxu0 0
    %252 = vmatpush.bf16.msra.mxu0 0
    %253 = vmatpush.bf16.msra.mxu0 0
    %254 = vmatpush.bf16.msra.mxu0 0
    %255 = vmatpush.bf16.msra.mxu0 0
    %256 = vmatpush.bf16.msra.mxu0 0
    %257 = vmatpush.bf16.msra.mxu0 %v175
    %258 = vmatpush.bf16.msra.mxu0 %v159
    %259 = vmatmul.bf16.gmra.mxu0 %v223
    %v260 = vpop.f32.mrf.mxu0
    %v261 = vadd.f32 0.0, %v260
    %v262 = vpop.f32.mrf.mxu0
    %263 = vdwg.mxu0
    %264 = vmatpush.bf16.msra.mxu0 0
    %265 = vmatpush.bf16.msra.mxu0 0
    %266 = vmatpush.bf16.msra.mxu0 0
    %267 = vmatpush.bf16.msra.mxu0 0
    %268 = vmatpush.bf16.msra.mxu0 0
    %269 = vmatpush.bf16.msra.mxu0 0
    %270 = vmatpush.bf16.msra.mxu0 %v176
    %271 = vmatpush.bf16.msra.mxu0 %v160
    %272 = vmatmul.bf16.gmra.mxu0 %v223
    %v273 = vpop.f32.mrf.mxu0
    %v274 = vadd.f32 0.0, %v273
    %v275 = vpop.f32.mrf.mxu0
    %276 = vdwg.mxu0
    %277 = vmatpush.bf16.msra.mxu0 0
    %278 = vmatpush.bf16.msra.mxu0 0
    %279 = vmatpush.bf16.msra.mxu0 0
    %280 = vmatpush.bf16.msra.mxu0 0
    %281 = vmatpush.bf16.msra.mxu0 0
    %282 = vmatpush.bf16.msra.mxu0 0
    %283 = vmatpush.bf16.msra.mxu0 %v177
    %284 = vmatpush.bf16.msra.mxu0 %v161
    %285 = vmatmul.bf16.gmra.mxu0 %v223
    %v286 = vpop.f32.mrf.mxu0
    %v287 = vadd.f32 0.0, %v286
    %v288 = vpop.f32.mrf.mxu0
    %289 = vdwg.mxu0
    %290 = vmatpush.bf16.msra.mxu0 0
    %291 = vmatpush.bf16.msra.mxu0 0
    %292 = vmatpush.bf16.msra.mxu0 0
    %293 = vmatpush.bf16.msra.mxu0 0
    %294 = vmatpush.bf16.msra.mxu0 0
    %295 = vmatpush.bf16.msra.mxu0 0
    %296 = vmatpush.bf16.msra.mxu0 %v178
    %297 = vmatpush.bf16.msra.mxu0 %v162
    %298 = vmatmul.bf16.gmra.mxu0 %v223
    %v299 = vpop.f32.mrf.mxu0
    %v300 = vadd.f32 0.0, %v299
    %v301 = vpop.f32.mrf.mxu0
    %302 = vdwg.mxu0
    %303 = vmatpush.bf16.msra.mxu0 0
    %304 = vmatpush.bf16.msra.mxu0 0
    %305 = vmatpush.bf16.msra.mxu0 0
    %306 = vmatpush.bf16.msra.mxu0 0
    %307 = vmatpush.bf16.msra.mxu0 0
    %308 = vmatpush.bf16.msra.mxu0 0
    %309 = vmatpush.bf16.msra.mxu0 %v179
    %310 = vmatpush.bf16.msra.mxu0 %v163
    %311 = vmatmul.bf16.gmra.mxu0 %v223
    %v312 = vpop.f32.mrf.mxu0
    %v313 = vadd.f32 0.0, %v312
    %v314 = vpop.f32.mrf.mxu0
    %315 = vdwg.mxu0
    %316 = vmatpush.bf16.msra.mxu0 0
    %317 = vmatpush.bf16.msra.mxu0 0
    %318 = vmatpush.bf16.msra.mxu0 0
    %319 = vmatpush.bf16.msra.mxu0 0
    %320 = vmatpush.bf16.msra.mxu0 0
    %321 = vmatpush.bf16.msra.mxu0 0
    %322 = vmatpush.bf16.msra.mxu0 %v180
    %323 = vmatpush.bf16.msra.mxu0 %v164
    %324 = vmatmul.bf16.gmra.mxu0 %v223
    %v325 = vpop.f32.mrf.mxu0
    %v326 = vadd.f32 0.0, %v325
    %v327 = vpop.f32.mrf.mxu0
    %328 = vdwg.mxu0
    %329 = vmatpush.bf16.msra.mxu0 0
    %330 = vmatpush.bf16.msra.mxu0 0
    %331 = vmatpush.bf16.msra.mxu0 0
    %332 = vmatpush.bf16.msra.mxu0 0
    %333 = vmatpush.bf16.msra.mxu0 0
    %334 = vmatpush.bf16.msra.mxu0 0
    %335 = vmatpush.bf16.msra.mxu0 %v181
    %336 = vmatpush.bf16.msra.mxu0 %v165
    %337 = vmatmul.bf16.gmra.mxu0 %v223
    %v338 = vpop.f32.mrf.mxu0
    %v339 = vadd.f32 0.0, %v338
    %v340 = vpop.f32.mrf.mxu0
    %341 = vdwg.mxu0
    %342 = vmatpush.bf16.msra.mxu0 0
    %343 = vmatpush.bf16.msra.mxu0 0
    %344 = vmatpush.bf16.msra.mxu0 0
    %345 = vmatpush.bf16.msra.mxu0 0
    %346 = vmatpush.bf16.msra.mxu0 0
    %347 = vmatpush.bf16.msra.mxu0 0
    %348 = vmatpush.bf16.msra.mxu0 %v182
    %349 = vmatpush.bf16.msra.mxu0 %v166
    %350 = vmatmul.bf16.gmra.mxu0 %v223
    %v351 = vpop.f32.mrf.mxu0
    %v352 = vadd.f32 0.0, %v351
    %v353 = vpop.f32.mrf.mxu0
    %354 = vdwg.mxu0
    %355 = vmatpush.bf16.msra.mxu0 0
    %356 = vmatpush.bf16.msra.mxu0 0
    %357 = vmatpush.bf16.msra.mxu0 0
    %358 = vmatpush.bf16.msra.mxu0 0
    %359 = vmatpush.bf16.msra.mxu0 0
    %360 = vmatpush.bf16.msra.mxu0 0
    %361 = vmatpush.bf16.msra.mxu0 %v183
    %362 = vmatpush.bf16.msra.mxu0 %v167
    %363 = vmatmul.bf16.gmra.mxu0 %v223
    %v364 = vpop.f32.mrf.mxu0
    %v365 = vadd.f32 0.0, %v364
    %v366 = vpop.f32.mrf.mxu0
    %367 = vdwg.mxu0
    %368 = vmatpush.bf16.msra.mxu0 0
    %369 = vmatpush.bf16.msra.mxu0 0
    %370 = vmatpush.bf16.msra.mxu0 0
    %371 = vmatpush.bf16.msra.mxu0 0
    %372 = vmatpush.bf16.msra.mxu0 0
    %373 = vmatpush.bf16.msra.mxu0 0
    %374 = vmatpush.bf16.msra.mxu0 %v184
    %375 = vmatpush.bf16.msra.mxu0 %v168
    %376 = vmatmul.bf16.gmra.mxu0 %v223
    %v377 = vpop.f32.mrf.mxu0
    %v378 = vadd.f32 0.0, %v377
    %v379 = vpop.f32.mrf.mxu0
    %380 = vdwg.mxu0
    %381 = vmatpush.bf16.msra.mxu0 0
    %382 = vmatpush.bf16.msra.mxu0 0
    %383 = vmatpush.bf16.msra.mxu0 0
    %384 = vmatpush.bf16.msra.mxu0 0
    %385 = vmatpush.bf16.msra.mxu0 0
    %386 = vmatpush.bf16.msra.mxu0 0
    %387 = vmatpush.bf16.msra.mxu0 %v185
    %388 = vmatpush.bf16.msra.mxu0 %v169
    %389 = vmatmul.bf16.gmra.mxu0 %v223
    %v390 = vpop.f32.mrf.mxu0
    %v391 = vadd.f32 0.0, %v390
    %v392 = vpop.f32.mrf.mxu0
    %393 = vdwg.mxu0
    %394 = vmatpush.bf16.msra.mxu0 0
    %395 = vmatpush.bf16.msra.mxu0 0
    %396 = vmatpush.bf16.msra.mxu0 0
    %397 = vmatpush.bf16.msra.mxu0 0
    %398 = vmatpush.bf16.msra.mxu0 0
    %399 = vmatpush.bf16.msra.mxu0 0
    %400 = vmatpush.bf16.msra.mxu0 %v186
    %401 = vmatpush.bf16.msra.mxu0 %v170
    %402 = vmatmul.bf16.gmra.mxu0 %v223
    %v403 = vpop.f32.mrf.mxu0
    %v404 = vadd.f32 0.0, %v403
    %v405 = vpop.f32.mrf.mxu0
    %406 = vdwg.mxu0
    %407 = vmatpush.bf16.msra.mxu0 0
    %408 = vmatpush.bf16.msra.mxu0 0
    %409 = vmatpush.bf16.msra.mxu0 0
    %410 = vmatpush.bf16.msra.mxu0 0
    %411 = vmatpush.bf16.msra.mxu0 0
    %412 = vmatpush.bf16.msra.mxu0 0
    %413 = vmatpush.bf16.msra.mxu0 %v187
    %414 = vmatpush.bf16.msra.mxu0 %v171
    %415 = vmatmul.bf16.gmra.mxu0 %v223
    %v416 = vpop.f32.mrf.mxu0
    %v417 = vadd.f32 0.0, %v416
    %v418 = vpop.f32.mrf.mxu0
    %419 = vdwg.mxu0
    %420 = vmatpush.bf16.msra.mxu0 0
    %421 = vmatpush.bf16.msra.mxu0 0
    %422 = vmatpush.bf16.msra.mxu0 0
    %423 = vmatpush.bf16.msra.mxu0 0
    %424 = vmatpush.bf16.msra.mxu0 0
    %425 = vmatpush.bf16.msra.mxu0 0
    %426 = vmatpush.bf16.msra.mxu0 %v188
    %427 = vmatpush.bf16.msra.mxu0 %v172
    %428 = vmatmul.bf16.gmra.mxu0 %v223
    %v429 = vpop.f32.mrf.mxu0
    %v430 = vadd.f32 0.0, %v429
    %v431 = vpop.f32.mrf.mxu0
    %432 = vdwg.mxu0
    %v449 = vrot.slane %v248, 6
    %v450 = vrot.slane %v261, 4
    %v451 = vrot.slane %v274, 2
    %v452 = vrot.slane %v300, 6
    %v453 = vrot.slane %v313, 4
    %v454 = vrot.slane %v326, 2
    %v455 = vrot.slane %v352, 6
    %v456 = vrot.slane %v365, 4
    %v457 = vrot.slane %v378, 2
    %v458 = vrot.slane %v404, 6
    %v459 = vrot.slane %v417, 4
    %v460 = vrot.slane %v430, 2
    %vm461 = vcmask 1041408
    %v462 = vsel %vm461, %v235, %v449
    %vm463 = vcmask 1045508
    %v464 = vsel %vm463, %v450, %v451
    %vm465 = vcmask 1043456
    %v466 = vsel %vm465, %v462, %v464
    %v467 = vsel %vm461, %v287, %v452
    %v468 = vsel %vm463, %v453, %v454
    %v469 = vsel %vm465, %v467, %v468
    %v470 = vsel %vm461, %v339, %v455
    %v471 = vsel %vm463, %v456, %v457
    %v472 = vsel %vm465, %v470, %v471
    %v473 = vsel %vm461, %v391, %v458
    %v474 = vsel %vm463, %v459, %v460
    %v475 = vsel %vm465, %v473, %v474
    %480 = vst [vmem:[%s2] sm:$0xff] %v466
    %481 = vst [vmem:[%s2 + $0x8] sm:$0xff] %v469
    %482 = vst [vmem:[%s2 + $0x10] sm:$0xff] %v472
    %483 = vst [vmem:[%s2 + $0x18] sm:$0xff] %v475
    // Predicated region
    $region14: #{a_call__.9} parent=1 // pred_check
      _
    $region15: #{a_call__.9} parent=1 // pred_check_branch
      %485 = sbr.rel (0) target = $region17
    $region16: #{a_call__.9} parent=1 // pred_region
      _
    $region17: #{a_call__.9} parent=1 // pred_fallthru
      _
    // Predicated region
    $region18: #{a_call__.9} parent=1 // pred_check
      _
    $region19: #{a_call__.9} parent=1 // pred_check_branch
      %487 = sbr.rel (0) target = $region21
    $region20: #{a_call__.9} parent=1 // pred_region
      _
    $region21: #{a_call__.9} parent=1 // pred_fallthru
      _
    %488 = vsyncpa [#allocation3], 1

// kernel: a_call__.11
$region0: #{a_call__.11}
  #allocation0 [shape = 'u32[]', space=smem, size = 0x4, offset = 0x4, fixed_abs, tag = 'smem constant byte address 0x4 - core index']
  #allocation1 [shape = 'u32[72,128]{1,0:T(1,128)}', space=vmem, size = 0x9000, scoped, tag = 'internal scratch']
  %s0 = inlined_call_operand.vmem [shape: bf16[4,32,256], index: 0, kind: input, shape index: {}]
  %s1 = inlined_call_operand.hbm [shape: bf16[4,256,128], index: 1, kind: input, shape index: {}]
  %s2 = inlined_call_operand.vmem [shape: bf16[4,32,128], index: 2, kind: output, shape index: {0}]
  %s3 = inlined_call_operand.vmem [shape: f32[4,2,2,128], index: 3, kind: output, shape index: {1}]
  %4 = xla_tuple %s2, %s3
  %s5 = sld [smem:[#allocation0]]
  $region53: #{a_call__.11} parent=0
    _
  %s7 = ssub.s32 1, %s5
  %s8 = scalar_select 0, %s7, %s5
  $region1: #{a_call__.11} parent=0
    #allocation2 [shape = 'u8[131072]{0}', space=vmem, size = 0x20000, scoped, tag = 'input window, operand 1']
    #allocation3 [shape = 's32[2]{0}', space=sflag, size = 0x8, scoped, tag = 'scoped memory for a_call__.11']
    %9 = vsyncpa [#allocation3], 0
    %s10 = scalar_lea.sflag [#allocation3], 1
    %11 = vsyncpa %s10, 0
    loop: start=0, step=1, limit=10
    $region2: #{a_call__.11} parent=1 // loop_pre_header
      _
    $region3: #{a_call__.11} parent=1 // loop_header
      %s13 = sphi 0, %s17
      %p14 = scmp.ge.s32.totalorder %s13, 10
      %s20 = sphi 0, %s32
      %s21 = sphi 0, %s28
      %s22 = sphi 0, %s20
      %s23 = sphi 0, %s21
      %s24 = sphi 0, %s22
      %s25 = sphi 0, %s23
      %s37 = sphi 0, %s39
      %s40 = sphi 0, %s37
      %s41 = sphi 0, %s40
      %s57 = sphi 0, %s41
      %s63 = sphi 0, %s65
      %s66 = sphi 0, %s63
      %s67 = sphi 0, %s66
      %s83 = sphi 0, %s67
      %s91 = sphi 0, %s93
      %s94 = sphi 0, %s91
      %s95 = sphi 0, %s94
      %s111 = sphi 0, %s95
      %s119 = sphi 0, %s121
      %s122 = sphi 0, %s119
      %s123 = sphi 0, %s122
      %s139 = sphi 0, %s123
    $region4: #{a_call__.11} parent=1 // loop_header_branch
      %16 = sbr.rel (%p14) target = $region8
    $region5: #{a_call__.11} parent=1 // loop_body
      %s18 = ssub.s32 %s13, 1
      %s19 = ssub.s32 %s13, 2
      %s26 = sadd.s32 1, %s21
      %p27 = scmp.ge.s32.totalorder %s26, 2
      %s28 = scalar_select %p27, 0, %s26
      %s29 = sadd.s32 1, %s20
      %s30 = scalar_select %p27, %s29, %s20
      %p31 = scmp.ge.s32.totalorder %s30, 4
      %s32 = scalar_select %p31, 0, %s30
      %s33 = ssub.s32 %s20, %s32
      %s34 = ssub.s32 %s21, %s28
      %s35 = sor.u32 %s33, %s34
      %p36 = scmp.eq.s32.totalorder %s35, 0
      %s38 = sadd.s32 %s37, 1
      %s39 = scalar_select %p36, %s37, %s38
      %p42 = pneg %p36
      %p43 = scmp.eq.s32.totalorder %s13, 7
      %p44 = por %p42, %p43
      %p45 = scmp.ne.s32.totalorder %s37, %s40
      %p46 = scmp.eq.s32.totalorder %s13, 0
      %p47 = por %p45, %p46
      %p48 = scmp.ne.s32.totalorder %s37, %s40
      %p49 = scmp.eq.s32.totalorder %s18, 7
      %p50 = por %p48, %p49
      %p51 = scmp.ne.s32.totalorder %s40, %s41
      %p52 = scmp.eq.s32.totalorder %s18, 0
      %p53 = por %p51, %p52
      %p54 = scmp.ne.s32.totalorder %s40, %s41
      %p55 = scmp.eq.s32.totalorder %s19, 7
      %p56 = por %p54, %p55
      %p58 = scmp.ne.s32.totalorder %s41, %s57
      %p59 = scmp.eq.s32.totalorder %s19, 0
      %p60 = por %p58, %p59
      %s61 = ssub.s32 %s20, %s32
      %p62 = scmp.eq.s32.totalorder %s61, 0
      %s64 = sadd.s32 %s63, 1
      %s65 = scalar_select %p62, %s63, %s64
      %p68 = pneg %p62
      %p69 = scmp.eq.s32.totalorder %s13, 7
      %p70 = por %p68, %p69
      %p71 = scmp.ne.s32.totalorder %s63, %s66
      %p72 = scmp.eq.s32.totalorder %s13, 0
      %p73 = por %p71, %p72
      %p74 = scmp.ne.s32.totalorder %s63, %s66
      %p75 = scmp.eq.s32.totalorder %s18, 7
      %p76 = por %p74, %p75
      %p77 = scmp.ne.s32.totalorder %s66, %s67
      %p78 = scmp.eq.s32.totalorder %s18, 0
      %p79 = por %p77, %p78
      %p80 = scmp.ne.s32.totalorder %s66, %s67
      %p81 = scmp.eq.s32.totalorder %s19, 7
      %p82 = por %p80, %p81
      %p84 = scmp.ne.s32.totalorder %s67, %s83
      %p85 = scmp.eq.s32.totalorder %s19, 0
      %p86 = por %p84, %p85
      %s87 = ssub.s32 %s20, %s32
      %s88 = ssub.s32 %s21, %s28
      %s89 = sor.u32 %s87, %s88
      %p90 = scmp.eq.s32.totalorder %s89, 0
      %s92 = sadd.s32 %s91, 1
      %s93 = scalar_select %p90, %s91, %s92
      %p96 = pneg %p90
      %p97 = scmp.eq.s32.totalorder %s13, 7
      %p98 = por %p96, %p97
      %p99 = scmp.ne.s32.totalorder %s91, %s94
      %p100 = scmp.eq.s32.totalorder %s13, 0
      %p101 = por %p99, %p100
      %p102 = scmp.ne.s32.totalorder %s91, %s94
      %p103 = scmp.eq.s32.totalorder %s18, 7
      %p104 = por %p102, %p103
      %p105 = scmp.ne.s32.totalorder %s94, %s95
      %p106 = scmp.eq.s32.totalorder %s18, 0
      %p107 = por %p105, %p106
      %p108 = scmp.ne.s32.totalorder %s94, %s95
      %p109 = scmp.eq.s32.totalorder %s19, 7
      %p110 = por %p108, %p109
      %p112 = scmp.ne.s32.totalorder %s95, %s111
      %p113 = scmp.eq.s32.totalorder %s19, 0
      %p114 = por %p112, %p113
      %s115 = ssub.s32 %s20, %s32
      %s116 = ssub.s32 %s21, %s28
      %s117 = sor.u32 %s115, %s116
      %p118 = scmp.eq.s32.totalorder %s117, 0
      %s120 = sadd.s32 %s119, 1
      %s121 = scalar_select %p118, %s119, %s120
      %p124 = pneg %p118
      %p125 = scmp.eq.s32.totalorder %s13, 7
      %p126 = por %p124, %p125
      %p127 = scmp.ne.s32.totalorder %s119, %s122
      %p128 = scmp.eq.s32.totalorder %s13, 0
      %p129 = por %p127, %p128
      %p130 = scmp.ne.s32.totalorder %s119, %s122
      %p131 = scmp.eq.s32.totalorder %s18, 7
      %p132 = por %p130, %p131
      %p133 = scmp.ne.s32.totalorder %s122, %s123
      %p134 = scmp.eq.s32.totalorder %s18, 0
      %p135 = por %p133, %p134
      %p136 = scmp.ne.s32.totalorder %s122, %s123
      %p137 = scmp.eq.s32.totalorder %s19, 7
      %p138 = por %p136, %p137
      %p140 = scmp.ne.s32.totalorder %s123, %s139
      %p141 = scmp.eq.s32.totalorder %s19, 0
      %p142 = por %p140, %p141
      %p143 = scmp.le.s32.totalorder 1, %s13
      %p144 = scmp.lt.s32.totalorder %s13, 9
      %p145 = pnand %p143, %p144
      %p146 = pneg %p145
      // Predicated region
      $region9: #{a_call__.11} parent=5 // pred_check
        _
      $region10: #{a_call__.11} parent=5 // pred_check_branch
        %148 = sbr.rel (%p145) target = $region12
      $region11: #{a_call__.11} parent=5 // pred_region
        %s149 = ssub.s32 %s13, 1
      $region12: #{a_call__.11} parent=5 // pred_fallthru
        _
      %p150 = scmp.lt.s32.totalorder %s13, 8
      // Predicated region
      $region13: #{a_call__.11} parent=5 // pred_check
        %p151 = pneg %p150
      $region14: #{a_call__.11} parent=5 // pred_check_branch
        %153 = sbr.rel (%p151) target = $region16
      $region15: #{a_call__.11} parent=5 // pred_region
        // Predicated region
        $region17: #{a_call__.11} parent=15 // pred_check
          %p154 = pneg %p47
        $region18: #{a_call__.11} parent=15 // pred_check_branch
          %156 = sbr.rel (%p154) target = $region20
        $region19: #{a_call__.11} parent=15 // pred_region
          %s157 = smul.u32 2, %s21
          %p158 = scmp.lt.s32.totalorder %s20, 3
          %s159 = scalar_select %p158, %s20, 3
          %p160 = scmp.lt.s32.totalorder %s157, 3
          %s161 = scalar_select %p160, %s157, 3
          %s162 = smul.addr %s161, 2
          %s163 = smul.addr %s159, 8
          %s164 = sadd.s32 %s162, %s163
          %s165 = smul.addr %s164, 4
          %s166 = scalar_lea.vmem %s0, %s165
          %s167 = smul.u32 2, %s21
        $region20: #{a_call__.11} parent=15 // pred_fallthru
          _
        // Predicated region
        $region21: #{a_call__.11} parent=15 // pred_check
          %p168 = pneg %p73
        $region22: #{a_call__.11} parent=15 // pred_check_branch
          %170 = sbr.rel (%p168) target = $region24
        $region23: #{a_call__.11} parent=15 // pred_region
          %s171 = sand.u32 %s63, 1
          %s172 = scalar_lea.sflag [#allocation3], %s171
          %s173 = sand.u32 %s63, 1
          %s174 = smul.addr %s173, 128
          %s175 = scalar_lea.vmem [#allocation2], %s174
          %177 = vsyncadd %s172, 0
          %s178 = smul.addr %s20, 32
          %s179 = smul.addr %s178, 4
          %s180 = scalar_lea.hbm %s1, %s179
          %s181 = sshll.u32 %s180, 4
          %s182 = int_to_ptr.hbm [resolvable:$true] %s181
          %s183 = sshll.u32 %s175, 4
          %s184 = int_to_ptr.vmem [resolvable:$true] %s183
          %189 = dma.hbm_to_vmem [thread:$0]  %s182, 2048, %s184, %s172, 64, 64, 4
        $region24: #{a_call__.11} parent=15 // pred_fallthru
          _
      $region16: #{a_call__.11} parent=5 // pred_fallthru
        _
      %p190 = scmp.le.s32.totalorder 1, %s13
      %p191 = scmp.lt.s32.totalorder %s13, 9
      %p192 = pnand %p190, %p191
      %p193 = pneg %p192
      // Predicated region
      $region25: #{a_call__.11} parent=5 // pred_check
        _
      $region26: #{a_call__.11} parent=5 // pred_check_branch
        %195 = sbr.rel (%p192) target = $region28
      $region27: #{a_call__.11} parent=5 // pred_region
        %s196 = ssub.s32 %s13, 1
        %s197 = sand.u32 %s66, 1
        %s198 = scalar_lea.sflag [#allocation3], %s197
        %s199 = sand.u32 %s66, 1
        %s200 = smul.addr %s199, 128
        %s201 = scalar_lea.vmem [#allocation2], %s200
        // Predicated region
        $region29: #{a_call__.11} parent=27 // pred_check
          %p202 = pneg %p79
        $region30: #{a_call__.11} parent=27 // pred_check_branch
          %204 = sbr.rel (%p202) target = $region32
        $region31: #{a_call__.11} parent=27 // pred_region
          %206 = dma.done %s198, 2048
        $region32: #{a_call__.11} parent=27 // pred_fallthru
          _
        %s207 = smul.u32 2, %s23
        %p208 = scmp.lt.s32.totalorder %s22, 3
        %s209 = scalar_select %p208, %s22, 3
        %p210 = scmp.lt.s32.totalorder %s207, 3
        %s211 = scalar_select %p210, %s207, 3
        %s212 = smul.addr %s211, 2
        %s213 = smul.addr %s209, 8
        %s214 = sadd.s32 %s212, %s213
        %s215 = smul.addr %s214, 4
        %s216 = scalar_lea.vmem %s0, %s215
        %p217 = pneg %p53
        %p218 = pneg %p50
        %s219 = sand.u32 %s66, 1
        %s220 = scalar_lea.sflag [#allocation3], %s219
        %s221 = sand.u32 %s66, 1
        %s222 = smul.addr %s221, 128
        %s223 = scalar_lea.vmem [#allocation2], %s222
        %p224 = pneg %p79
        %p225 = pneg %p76
        %p226 = pneg %p107
        %p227 = pneg %p104
        %s228 = smul.u32 2, %s23
        %p229 = scmp.lt.s32.totalorder %s22, 3
        %s230 = scalar_select %p229, %s22, 3
        %p231 = scmp.lt.s32.totalorder %s228, 3
        %s232 = scalar_select %p231, %s228, 3
        %s233 = smul.addr %s230, 4
        %s234 = sadd.s32 %s232, %s233
        %s235 = smul.addr %s234, 4
        %s236 = scalar_lea.vmem %s2, %s235
        %p237 = pneg %p135
        %p238 = pneg %p132
        %p239 = scmp.lt.s32.totalorder %s22, 3
        %s240 = scalar_select %p239, %s22, 3
        %p241 = scmp.lt.s32.totalorder %s23, 1
        %s242 = scalar_select %p241, %s23, 1
        %s243 = smul.addr %s240, 2
        %s244 = sadd.s32 %s242, %s243
        %s245 = smul.addr %s244, 2
        %s246 = scalar_lea.vmem %s3, %s245
        %s247 = smul.u32 2, %s23
        %p248 = scmp.lt.s32.totalorder %s22, 3
        %s249 = scalar_select %p248, %s22, 3
        %p250 = scmp.lt.s32.totalorder %s247, 3
        %s251 = scalar_select %p250, %s247, 3
        %s252 = smul.addr %s251, 2
        %s253 = smul.addr %s249, 8
        %s254 = sadd.s32 %s252, %s253
        %s255 = smul.addr %s254, 4
        %s256 = scalar_lea.vmem %s0, %s255
        %s257 = smul.u32 2, %s23
        %s258 = smul.u32 2, %s23
        %p259 = scmp.lt.s32.totalorder %s22, 3
        %s260 = scalar_select %p259, %s22, 3
        %p261 = scmp.lt.s32.totalorder %s258, 3
        %s262 = scalar_select %p261, %s258, 3
        %s263 = smul.addr %s260, 4
        %s264 = sadd.s32 %s262, %s263
        %s265 = smul.addr %s264, 4
        %s266 = scalar_lea.vmem %s2, %s265
        %s267 = smul.u32 2, %s23
        %p268 = scmp.lt.s32.totalorder %s22, 3
        %s269 = scalar_select %p268, %s22, 3
        %p270 = scmp.lt.s32.totalorder %s23, 1
        %s271 = scalar_select %p270, %s23, 1
        %s272 = smul.addr %s269, 2
        %s273 = sadd.s32 %s271, %s272
        %s274 = smul.addr %s273, 2
        %s275 = scalar_lea.vmem %s3, %s274
        %v276 = vld [vmem:[%s256] sm:$0xff]
        %v277 = vld [vmem:[%s256 + $0x8] sm:$0xff]
        %v278 = vld [vmem:[%s201] sm:$0xf]
        %v279 = vld [vmem:[%s201 + $0x4] sm:$0xf]
        %v280 = vld [vmem:[%s201 + $0x8] sm:$0xf]
        %v281 = vld [vmem:[%s201 + $0xc] sm:$0xf]
        %v282 = vld [vmem:[%s201 + $0x10] sm:$0xf]
        %v283 = vld [vmem:[%s201 + $0x14] sm:$0xf]
        %v284 = vld [vmem:[%s201 + $0x18] sm:$0xf]
        %v285 = vld [vmem:[%s201 + $0x1c] sm:$0xf]
        %v286 = vld [vmem:[%s201 + $0x20] sm:$0xf]
        %v287 = vld [vmem:[%s201 + $0x24] sm:$0xf]
        %v288 = vld [vmem:[%s201 + $0x28] sm:$0xf]
        %v289 = vld [vmem:[%s201 + $0x2c] sm:$0xf]
        %v290 = vld [vmem:[%s201 + $0x30] sm:$0xf]
        %v291 = vld [vmem:[%s201 + $0x34] sm:$0xf]
        %v292 = vld [vmem:[%s201 + $0x38] sm:$0xf]
        %v293 = vld [vmem:[%s201 + $0x3c] sm:$0xf]
        %v294 = vld [vmem:[%s201 + $0x40] sm:$0xf]
        %v295 = vld [vmem:[%s201 + $0x44] sm:$0xf]
        %v296 = vld [vmem:[%s201 + $0x48] sm:$0xf]
        %v297 = vld [vmem:[%s201 + $0x4c] sm:$0xf]
        %v298 = vld [vmem:[%s201 + $0x50] sm:$0xf]
        %v299 = vld [vmem:[%s201 + $0x54] sm:$0xf]
        %v300 = vld [vmem:[%s201 + $0x58] sm:$0xf]
        %v301 = vld [vmem:[%s201 + $0x5c] sm:$0xf]
        %v302 = vld [vmem:[%s201 + $0x60] sm:$0xf]
        %v303 = vld [vmem:[%s201 + $0x64] sm:$0xf]
        %v304 = vld [vmem:[%s201 + $0x68] sm:$0xf]
        %v305 = vld [vmem:[%s201 + $0x6c] sm:$0xf]
        %v306 = vld [vmem:[%s201 + $0x70] sm:$0xf]
        %v307 = vld [vmem:[%s201 + $0x74] sm:$0xf]
        %v308 = vld [vmem:[%s201 + $0x78] sm:$0xf]
        %v309 = vld [vmem:[%s201 + $0x7c] sm:$0xf]
        %v312 = vunpack.c.l.b16 %v276
        %v313 = vunpack.c.h.b16 %v276
        %v314 = vunpack.c.l.b16 %v277
        %v315 = vunpack.c.h.b16 %v277
        %v316 = vpack.c.b16 %v314, %v312
        %v317 = vpack.c.b16 %v315, %v313
        %v352 = vunpack.c.l.b16 %v278
        %v353 = vunpack.c.l.b16 %v279
        %v354 = vunpack.c.l.b16 %v280
        %v355 = vunpack.c.l.b16 %v281
        %v356 = vunpack.c.l.b16 %v282
        %v357 = vunpack.c.l.b16 %v283
        %v358 = vunpack.c.l.b16 %v284
        %v359 = vunpack.c.l.b16 %v285
        %v360 = vunpack.c.l.b16 %v286
        %v361 = vunpack.c.l.b16 %v287
        %v362 = vunpack.c.l.b16 %v288
        %v363 = vunpack.c.l.b16 %v289
        %v364 = vunpack.c.l.b16 %v290
        %v365 = vunpack.c.l.b16 %v291
        %v366 = vunpack.c.l.b16 %v292
        %v367 = vunpack.c.l.b16 %v293
        %v368 = vunpack.c.l.b16 %v294
        %v369 = vunpack.c.l.b16 %v295
        %v370 = vunpack.c.l.b16 %v296
        %v371 = vunpack.c.l.b16 %v297
        %v372 = vunpack.c.l.b16 %v298
        %v373 = vunpack.c.l.b16 %v299
        %v374 = vunpack.c.l.b16 %v300
        %v375 = vunpack.c.l.b16 %v301
        %v376 = vunpack.c.l.b16 %v302
        %v377 = vunpack.c.l.b16 %v303
        %v378 = vunpack.c.l.b16 %v304
        %v379 = vunpack.c.l.b16 %v305
        %v380 = vunpack.c.l.b16 %v306
        %v381 = vunpack.c.l.b16 %v307
        %v382 = vunpack.c.l.b16 %v308
        %v383 = vunpack.c.l.b16 %v309
        %v384 = vpack.c.b16 %v353, %v352
        %v385 = vpack.c.b16 %v355, %v354
        %v386 = vpack.c.b16 %v357, %v356
        %v387 = vpack.c.b16 %v359, %v358
        %v388 = vpack.c.b16 %v361, %v360
        %v389 = vpack.c.b16 %v363, %v362
        %v390 = vpack.c.b16 %v365, %v364
        %v391 = vpack.c.b16 %v367, %v366
        %v392 = vpack.c.b16 %v369, %v368
        %v393 = vpack.c.b16 %v371, %v370
        %v394 = vpack.c.b16 %v373, %v372
        %v395 = vpack.c.b16 %v375, %v374
        %v396 = vpack.c.b16 %v377, %v376
        %v397 = vpack.c.b16 %v379, %v378
        %v398 = vpack.c.b16 %v381, %v380
        %v399 = vpack.c.b16 %v383, %v382
        %416 = vmatpush.bf16.msra.mxu0 %v391
        %417 = vmatpush.bf16.msra.mxu0 %v390
        %418 = vmatpush.bf16.msra.mxu0 %v389
        %419 = vmatpush.bf16.msra.mxu0 %v388
        %420 = vmatpush.bf16.msra.mxu0 %v387
        %421 = vmatpush.bf16.msra.mxu0 %v386
        %422 = vmatpush.bf16.msra.mxu0 %v385
        %423 = vmatpush.bf16.msra.mxu0 %v384
        %424 = vmatmul.bf16.gmra.mxu0 %v316
        %v425 = vpop.f32.mrf.mxu0
        %v426 = vadd.f32 0.0, %v425
        %v427 = vpop.f32.mrf.mxu0
        %v428 = vadd.f32 0.0, %v427
        %429 = vdwg.mxu0
        %430 = vmatpush.bf16.msra.mxu0 %v399
        %431 = vmatpush.bf16.msra.mxu0 %v398
        %432 = vmatpush.bf16.msra.mxu0 %v397
        %433 = vmatpush.bf16.msra.mxu0 %v396
        %434 = vmatpush.bf16.msra.mxu0 %v395
        %435 = vmatpush.bf16.msra.mxu0 %v394
        %436 = vmatpush.bf16.msra.mxu0 %v393
        %437 = vmatpush.bf16.msra.mxu0 %v392
        %438 = vmatmul.bf16.gmra.mxu0 %v317
        %v439 = vpop.f32.mrf.mxu0
        %v440 = vadd.f32 %v426, %v439
        %v441 = vpop.f32.mrf.mxu0
        %v442 = vadd.f32 %v428, %v441
        %443 = vdwg.mxu0
        %v444 = vpack.c.bf16 %v440, %v440
        %v445 = vpack.c.bf16 %v442, %v442
        %446 = vst [vmem:[%s266] sm:$0xf] %v444
        %447 = vst [vmem:[%s266 + $0x4] sm:$0xf] %v445
        %v448 = vadd.f32 %v440, %v442
        %v449 = vrot.slane %v448, 4
        %v450 = vadd.f32 %v448, %v449
        %v451 = vrot.slane %v450, 2
        %v452 = vadd.f32 %v450, %v451
        %v453 = vrot.slane %v452, 1
        %v454 = vadd.f32 %v452, %v453
        %455 = vst [vmem:[%s275] sm:$0x1] %v454
        %v456 = vmul.f32 %v440, %v440
        %v457 = vmul.f32 %v442, %v442
        %v458 = vadd.f32 %v456, %v457
        %v459 = vrot.slane %v458, 4
        %v460 = vadd.f32 %v458, %v459
        %v461 = vrot.slane %v460, 2
        %v462 = vadd.f32 %v460, %v461
        %v463 = vrot.slane %v462, 1
        %v464 = vadd.f32 %v462, %v463
        %465 = vst [vmem:[%s275 + $0x1] sm:$0x1] %v464
        %s466 = smul.u32 2, %s23
        %p467 = scmp.lt.s32.totalorder %s22, 3
        %s468 = scalar_select %p467, %s22, 3
        %p469 = scmp.lt.s32.totalorder %s466, 3
        %s470 = scalar_select %p469, %s466, 3
        %s471 = smul.addr %s468, 4
        %s472 = sadd.s32 %s470, %s471
        %s473 = smul.addr %s472, 4
        %s474 = scalar_lea.vmem %s2, %s473
        %p475 = scmp.lt.s32.totalorder %s22, 3
        %s476 = scalar_select %p475, %s22, 3
        %p477 = scmp.lt.s32.totalorder %s23, 1
        %s478 = scalar_select %p477, %s23, 1
        %s479 = smul.addr %s476, 2
        %s480 = sadd.s32 %s478, %s479
        %s481 = smul.addr %s480, 2
        %s482 = scalar_lea.vmem %s3, %s481
        // Predicated region
        $region33: #{a_call__.11} parent=27 // pred_check
          %p483 = pneg %p104
        $region34: #{a_call__.11} parent=27 // pred_check_branch
          %485 = sbr.rel (%p483) target = $region36
        $region35: #{a_call__.11} parent=27 // pred_region
          %s486 = smul.u32 2, %s23
        $region36: #{a_call__.11} parent=27 // pred_fallthru
          _
        // Predicated region
        $region37: #{a_call__.11} parent=27 // pred_check
          %p487 = pneg %p132
        $region38: #{a_call__.11} parent=27 // pred_check_branch
          %489 = sbr.rel (%p487) target = $region40
        $region39: #{a_call__.11} parent=27 // pred_region
          _
        $region40: #{a_call__.11} parent=27 // pred_fallthru
          _
      $region28: #{a_call__.11} parent=5 // pred_fallthru
        _
      %p490 = scmp.le.s32.totalorder 2, %s13
      // Predicated region
      $region41: #{a_call__.11} parent=5 // pred_check
        %p491 = pneg %p490
      $region42: #{a_call__.11} parent=5 // pred_check_branch
        %493 = sbr.rel (%p491) target = $region44
      $region43: #{a_call__.11} parent=5 // pred_region
        %s494 = ssub.s32 %s13, 2
        // Predicated region
        $region45: #{a_call__.11} parent=43 // pred_check
          %p495 = pneg %p110
        $region46: #{a_call__.11} parent=43 // pred_check_branch
          %497 = sbr.rel (%p495) target = $region48
        $region47: #{a_call__.11} parent=43 // pred_region
          %s498 = smul.u32 2, %s25
          %p499 = scmp.lt.s32.totalorder %s24, 3
          %s500 = scalar_select %p499, %s24, 3
          %p501 = scmp.lt.s32.totalorder %s498, 3
          %s502 = scalar_select %p501, %s498, 3
          %s503 = smul.addr %s500, 4
          %s504 = sadd.s32 %s502, %s503
          %s505 = smul.addr %s504, 4
          %s506 = scalar_lea.vmem %s2, %s505
        $region48: #{a_call__.11} parent=43 // pred_fallthru
          _
        // Predicated region
        $region49: #{a_call__.11} parent=43 // pred_check
          %p507 = pneg %p138
        $region50: #{a_call__.11} parent=43 // pred_check_branch
          %509 = sbr.rel (%p507) target = $region52
        $region51: #{a_call__.11} parent=43 // pred_region
          %p510 = scmp.lt.s32.totalorder %s24, 3
          %s511 = scalar_select %p510, %s24, 3
          %p512 = scmp.lt.s32.totalorder %s25, 1
          %s513 = scalar_select %p512, %s25, 1
          %s514 = smul.addr %s511, 2
          %s515 = sadd.s32 %s513, %s514
          %s516 = smul.addr %s515, 2
          %s517 = scalar_lea.vmem %s3, %s516
        $region52: #{a_call__.11} parent=43 // pred_fallthru
          _
      $region44: #{a_call__.11} parent=5 // pred_fallthru
        _
    $region6: #{a_call__.11} parent=1 // loop_footer
      %s17 = sadd.s32 1, %s13
    $region7: #{a_call__.11} parent=1 // loop_footer_branch
      %12 = sbr.rel target = $region3
    $region8: #{a_call__.11} parent=1 // loop_exit
      _
    %518 = vsyncpa [#allocation3], 1
    %s519 = scalar_lea.sflag [#allocation3], 1
    %520 = vsyncpa %s519, 1

// kernel: a_call__.12
$region0: #{a_call__.12}
  #allocation0 [shape = 'u32[]', space=smem, size = 0x4, offset = 0x4, fixed_abs, tag = 'smem constant byte address 0x4 - core index']
  #allocation1 [shape = 'u32[72,128]{1,0:T(1,128)}', space=vmem, size = 0x9000, scoped, tag = 'internal scratch']
  %s0 = inlined_call_operand.vmem [shape: bf16[4,32,128], index: 0, kind: input, shape index: {}]
  %s1 = inlined_call_operand.vmem [shape: f32[1,128], index: 1, kind: input, shape index: {}]
  %s2 = inlined_call_operand.vmem [shape: f32[1,128], index: 2, kind: input, shape index: {}]
  %s3 = inlined_call_operand.vmem [shape: bf16[4,32,128], index: 3, kind: output, shape index: {}]
  %s4 = sld [smem:[#allocation0]]
  $region45: #{a_call__.12} parent=0
    _
  %s6 = ssub.s32 1, %s4
  %s7 = scalar_select 0, %s6, %s4
  loop: start=0, step=1, limit=10
  $region2: #{a_call__.12} parent=0 // loop_pre_header
    _
  $region3: #{a_call__.12} parent=0 // loop_header
    %s9 = sphi 0, %s13
    %p10 = scmp.ge.s32.totalorder %s9, 10
    %s16 = sphi 0, %s28
    %s17 = sphi 0, %s24
    %s18 = sphi 0, %s16
    %s19 = sphi 0, %s17
    %s20 = sphi 0, %s18
    %s21 = sphi 0, %s19
    %s33 = sphi 0, %s35
    %s36 = sphi 0, %s33
    %s37 = sphi 0, %s36
    %s53 = sphi 0, %s37
    %s57 = sphi 0, %s57
    %s59 = sphi 0, %s57
    %s60 = sphi 0, %s59
    %s74 = sphi 0, %s60
    %s78 = sphi 0, %s78
    %s80 = sphi 0, %s78
    %s81 = sphi 0, %s80
    %s95 = sphi 0, %s81
    %s103 = sphi 0, %s105
    %s106 = sphi 0, %s103
    %s107 = sphi 0, %s106
    %s123 = sphi 0, %s107
  $region4: #{a_call__.12} parent=0 // loop_header_branch
    %12 = sbr.rel (%p10) target = $region8
  $region5: #{a_call__.12} parent=0 // loop_body
    %s14 = ssub.s32 %s9, 1
    %s15 = ssub.s32 %s9, 2
    %s22 = sadd.s32 1, %s17
    %p23 = scmp.ge.s32.totalorder %s22, 2
    %s24 = scalar_select %p23, 0, %s22
    %s25 = sadd.s32 1, %s16
    %s26 = scalar_select %p23, %s25, %s16
    %p27 = scmp.ge.s32.totalorder %s26, 4
    %s28 = scalar_select %p27, 0, %s26
    %s29 = ssub.s32 %s16, %s28
    %s30 = ssub.s32 %s17, %s24
    %s31 = sor.u32 %s29, %s30
    %p32 = scmp.eq.s32.totalorder %s31, 0
    %s34 = sadd.s32 %s33, 1
    %s35 = scalar_select %p32, %s33, %s34
    %p38 = pneg %p32
    %p39 = scmp.eq.s32.totalorder %s9, 7
    %p40 = por %p38, %p39
    %p41 = scmp.ne.s32.totalorder %s33, %s36
    %p42 = scmp.eq.s32.totalorder %s9, 0
    %p43 = por %p41, %p42
    %p44 = scmp.ne.s32.totalorder %s33, %s36
    %p45 = scmp.eq.s32.totalorder %s14, 7
    %p46 = por %p44, %p45
    %p47 = scmp.ne.s32.totalorder %s36, %s37
    %p48 = scmp.eq.s32.totalorder %s14, 0
    %p49 = por %p47, %p48
    %p50 = scmp.ne.s32.totalorder %s36, %s37
    %p51 = scmp.eq.s32.totalorder %s15, 7
    %p52 = por %p50, %p51
    %p54 = scmp.ne.s32.totalorder %s37, %s53
    %p55 = scmp.eq.s32.totalorder %s15, 0
    %p56 = por %p54, %p55
    %s58 = sadd.s32 %s57, 1
    %p61 = scmp.eq.s32.totalorder %s9, 7
    %p62 = scmp.ne.s32.totalorder %s57, %s59
    %p63 = scmp.eq.s32.totalorder %s9, 0
    %p64 = por %p62, %p63
    %p65 = scmp.ne.s32.totalorder %s57, %s59
    %p66 = scmp.eq.s32.totalorder %s14, 7
    %p67 = por %p65, %p66
    %p68 = scmp.ne.s32.totalorder %s59, %s60
    %p69 = scmp.eq.s32.totalorder %s14, 0
    %p70 = por %p68, %p69
    %p71 = scmp.ne.s32.totalorder %s59, %s60
    %p72 = scmp.eq.s32.totalorder %s15, 7
    %p73 = por %p71, %p72
    %p75 = scmp.ne.s32.totalorder %s60, %s74
    %p76 = scmp.eq.s32.totalorder %s15, 0
    %p77 = por %p75, %p76
    %s79 = sadd.s32 %s78, 1
    %p82 = scmp.eq.s32.totalorder %s9, 7
    %p83 = scmp.ne.s32.totalorder %s78, %s80
    %p84 = scmp.eq.s32.totalorder %s9, 0
    %p85 = por %p83, %p84
    %p86 = scmp.ne.s32.totalorder %s78, %s80
    %p87 = scmp.eq.s32.totalorder %s14, 7
    %p88 = por %p86, %p87
    %p89 = scmp.ne.s32.totalorder %s80, %s81
    %p90 = scmp.eq.s32.totalorder %s14, 0
    %p91 = por %p89, %p90
    %p92 = scmp.ne.s32.totalorder %s80, %s81
    %p93 = scmp.eq.s32.totalorder %s15, 7
    %p94 = por %p92, %p93
    %p96 = scmp.ne.s32.totalorder %s81, %s95
    %p97 = scmp.eq.s32.totalorder %s15, 0
    %p98 = por %p96, %p97
    %s99 = ssub.s32 %s16, %s28
    %s100 = ssub.s32 %s17, %s24
    %s101 = sor.u32 %s99, %s100
    %p102 = scmp.eq.s32.totalorder %s101, 0
    %s104 = sadd.s32 %s103, 1
    %s105 = scalar_select %p102, %s103, %s104
    %p108 = pneg %p102
    %p109 = scmp.eq.s32.totalorder %s9, 7
    %p110 = por %p108, %p109
    %p111 = scmp.ne.s32.totalorder %s103, %s106
    %p112 = scmp.eq.s32.totalorder %s9, 0
    %p113 = por %p111, %p112
    %p114 = scmp.ne.s32.totalorder %s103, %s106
    %p115 = scmp.eq.s32.totalorder %s14, 7
    %p116 = por %p114, %p115
    %p117 = scmp.ne.s32.totalorder %s106, %s107
    %p118 = scmp.eq.s32.totalorder %s14, 0
    %p119 = por %p117, %p118
    %p120 = scmp.ne.s32.totalorder %s106, %s107
    %p121 = scmp.eq.s32.totalorder %s15, 7
    %p122 = por %p120, %p121
    %p124 = scmp.ne.s32.totalorder %s107, %s123
    %p125 = scmp.eq.s32.totalorder %s15, 0
    %p126 = por %p124, %p125
    %p127 = scmp.le.s32.totalorder 1, %s9
    %p128 = scmp.lt.s32.totalorder %s9, 9
    %p129 = pnand %p127, %p128
    %p130 = pneg %p129
    // Predicated region
    $region9: #{a_call__.12} parent=5 // pred_check
      _
    $region10: #{a_call__.12} parent=5 // pred_check_branch
      %132 = sbr.rel (%p129) target = $region12
    $region11: #{a_call__.12} parent=5 // pred_region
      %s133 = ssub.s32 %s9, 1
      // Predicated region
      $region13: #{a_call__.12} parent=11 // pred_check
        %p134 = pneg %p70
      $region14: #{a_call__.12} parent=11 // pred_check_branch
        %136 = sbr.rel (%p134) target = $region16
      $region15: #{a_call__.12} parent=11 // pred_region
        _
      $region16: #{a_call__.12} parent=11 // pred_fallthru
        _
      // Predicated region
      $region17: #{a_call__.12} parent=11 // pred_check
        %p137 = pneg %p91
      $region18: #{a_call__.12} parent=11 // pred_check_branch
        %139 = sbr.rel (%p137) target = $region20
      $region19: #{a_call__.12} parent=11 // pred_region
        _
      $region20: #{a_call__.12} parent=11 // pred_fallthru
        _
    $region12: #{a_call__.12} parent=5 // pred_fallthru
      _
    %p140 = scmp.lt.s32.totalorder %s9, 8
    // Predicated region
    $region21: #{a_call__.12} parent=5 // pred_check
      %p141 = pneg %p140
    $region22: #{a_call__.12} parent=5 // pred_check_branch
      %143 = sbr.rel (%p141) target = $region24
    $region23: #{a_call__.12} parent=5 // pred_region
      // Predicated region
      $region25: #{a_call__.12} parent=23 // pred_check
        %p144 = pneg %p43
      $region26: #{a_call__.12} parent=23 // pred_check_branch
        %146 = sbr.rel (%p144) target = $region28
      $region27: #{a_call__.12} parent=23 // pred_region
        %s147 = smul.u32 2, %s17
        %p148 = scmp.lt.s32.totalorder %s16, 3
        %s149 = scalar_select %p148, %s16, 3
        %p150 = scmp.lt.s32.totalorder %s147, 3
        %s151 = scalar_select %p150, %s147, 3
        %s152 = smul.addr %s149, 4
        %s153 = sadd.s32 %s151, %s152
        %s154 = smul.addr %s153, 4
        %s155 = scalar_lea.vmem %s0, %s154
        %s156 = smul.u32 2, %s17
      $region28: #{a_call__.12} parent=23 // pred_fallthru
        _
    $region24: #{a_call__.12} parent=5 // pred_fallthru
      _
    %p157 = scmp.le.s32.totalorder 1, %s9
    %p158 = scmp.lt.s32.totalorder %s9, 9
    %p159 = pnand %p157, %p158
    %p160 = pneg %p159
    // Predicated region
    $region29: #{a_call__.12} parent=5 // pred_check
      _
    $region30: #{a_call__.12} parent=5 // pred_check_branch
      %162 = sbr.rel (%p159) target = $region32
    $region31: #{a_call__.12} parent=5 // pred_region
      %s163 = ssub.s32 %s9, 1
      %s164 = smul.u32 2, %s19
      %p165 = scmp.lt.s32.totalorder %s18, 3
      %s166 = scalar_select %p165, %s18, 3
      %p167 = scmp.lt.s32.totalorder %s164, 3
      %s168 = scalar_select %p167, %s164, 3
      %s169 = smul.addr %s166, 4
      %s170 = sadd.s32 %s168, %s169
      %s171 = smul.addr %s170, 4
      %s172 = scalar_lea.vmem %s0, %s171
      %p173 = pneg %p49
      %p174 = pneg %p46
      %p175 = pneg %p70
      %p176 = pneg %p67
      %p177 = pneg %p91
      %p178 = pneg %p88
      %p179 = pneg %p119
      %p180 = pneg %p116
      %s181 = smul.u32 2, %s19
      %p182 = scmp.lt.s32.totalorder %s18, 3
      %s183 = scalar_select %p182, %s18, 3
      %p184 = scmp.lt.s32.totalorder %s181, 3
      %s185 = scalar_select %p184, %s181, 3
      %s186 = smul.addr %s183, 4
      %s187 = sadd.s32 %s185, %s186
      %s188 = smul.addr %s187, 4
      %s189 = scalar_lea.vmem %s3, %s188
      %s190 = smul.u32 2, %s19
      %p191 = scmp.lt.s32.totalorder %s18, 3
      %s192 = scalar_select %p191, %s18, 3
      %p193 = scmp.lt.s32.totalorder %s190, 3
      %s194 = scalar_select %p193, %s190, 3
      %s195 = smul.addr %s192, 4
      %s196 = sadd.s32 %s194, %s195
      %s197 = smul.addr %s196, 4
      %s198 = scalar_lea.vmem %s0, %s197
      %s199 = smul.u32 2, %s19
      %s200 = smul.u32 2, %s19
      %p201 = scmp.lt.s32.totalorder %s18, 3
      %s202 = scalar_select %p201, %s18, 3
      %p203 = scmp.lt.s32.totalorder %s200, 3
      %s204 = scalar_select %p203, %s200, 3
      %s205 = smul.addr %s202, 4
      %s206 = sadd.s32 %s204, %s205
      %s207 = smul.addr %s206, 4
      %s208 = scalar_lea.vmem %s3, %s207
      %s209 = smul.u32 2, %s19
      %v210 = vld [vmem:[%s198] sm:$0xf]
      %v211 = vld [vmem:[%s198 + $0x4] sm:$0xf]
      %v212 = vunpack.c.l.bf16 %v210
      %v213 = vunpack.c.l.bf16 %v211
      %v214 = vld [vmem:[%s1] sm:$0x1]
      %v216 = vperm.slane %v214, 0
      %v218 = vmul.f32 %v212, %v216
      %v219 = vmul.f32 %v213, %v216
      %v220 = vld [vmem:[%s2] sm:$0x1]
      %v222 = vperm.slane %v220, 0
      %v224 = vadd.f32 %v218, %v222
      %v225 = vadd.f32 %v219, %v222
      %v226 = vmax.f32 %v224, 0.0
      %v227 = vmax.f32 %v225, 0.0
      %v228 = vpack.c.bf16 %v226, %v226
      %v229 = vpack.c.bf16 %v227, %v227
      %230 = vst [vmem:[%s208] sm:$0xf] %v228
      %231 = vst [vmem:[%s208 + $0x4] sm:$0xf] %v229
      %s232 = smul.u32 2, %s19
      %p233 = scmp.lt.s32.totalorder %s18, 3
      %s234 = scalar_select %p233, %s18, 3
      %p235 = scmp.lt.s32.totalorder %s232, 3
      %s236 = scalar_select %p235, %s232, 3
      %s237 = smul.addr %s234, 4
      %s238 = sadd.s32 %s236, %s237
      %s239 = smul.addr %s238, 4
      %s240 = scalar_lea.vmem %s3, %s239
      // Predicated region
      $region33: #{a_call__.12} parent=31 // pred_check
        %p241 = pneg %p116
      $region34: #{a_call__.12} parent=31 // pred_check_branch
        %243 = sbr.rel (%p241) target = $region36
      $region35: #{a_call__.12} parent=31 // pred_region
        %s244 = smul.u32 2, %s19
      $region36: #{a_call__.12} parent=31 // pred_fallthru
        _
    $region32: #{a_call__.12} parent=5 // pred_fallthru
      _
    %p245 = scmp.le.s32.totalorder 2, %s9
    // Predicated region
    $region37: #{a_call__.12} parent=5 // pred_check
      %p246 = pneg %p245
    $region38: #{a_call__.12} parent=5 // pred_check_branch
      %248 = sbr.rel (%p246) target = $region40
    $region39: #{a_call__.12} parent=5 // pred_region
      %s249 = ssub.s32 %s9, 2
      // Predicated region
      $region41: #{a_call__.12} parent=39 // pred_check
        %p250 = pneg %p122
      $region42: #{a_call__.12} parent=39 // pred_check_branch
        %252 = sbr.rel (%p250) target = $region44
      $region43: #{a_call__.12} parent=39 // pred_region
        %s253 = smul.u32 2, %s21
        %p254 = scmp.lt.s32.totalorder %s20, 3
        %s255 = scalar_select %p254, %s20, 3
        %p256 = scmp.lt.s32.totalorder %s253, 3
        %s257 = scalar_select %p256, %s253, 3
        %s258 = smul.addr %s255, 4
        %s259 = sadd.s32 %s257, %s258
        %s260 = smul.addr %s259, 4
        %s261 = scalar_lea.vmem %s3, %s260
      $region44: #{a_call__.12} parent=39 // pred_fallthru
        _
    $region40: #{a_call__.12} parent=5 // pred_fallthru
      _
  $region6: #{a_call__.12} parent=0 // loop_footer
    %s13 = sadd.s32 1, %s9
  $region7: #{a_call__.12} parent=0 // loop_footer_branch
    %8 = sbr.rel target = $region3
  $region8: #{a_call__.12} parent=0 // loop_exit
    _

// kernel: a_call__.13
$region0: #{a_call__.13}
  #allocation0 [shape = 'u32[]', space=smem, size = 0x4, offset = 0x4, fixed_abs, tag = 'smem constant byte address 0x4 - core index']
  #allocation1 [shape = 'u32[72,128]{1,0:T(1,128)}', space=vmem, size = 0x9000, scoped, tag = 'internal scratch']
  %s0 = inlined_call_operand.vmem [shape: bf16[4,128,128], index: 0, kind: input, shape index: {}]
  %s1 = inlined_call_operand.vmem [shape: bf16[4,128,128], index: 1, kind: input, shape index: {}]
  %s2 = inlined_call_operand.vmem [shape: bf16[4,128,128], index: 2, kind: output, shape index: {0}]
  %s3 = inlined_call_operand.vmem [shape: f32[4,2,2,128], index: 3, kind: output, shape index: {1}]
  %4 = xla_tuple %s2, %s3
  %s5 = sld [smem:[#allocation0]]
  $region49: #{a_call__.13} parent=0
    _
  %s7 = ssub.s32 1, %s5
  %s8 = scalar_select 0, %s7, %s5
  loop: start=0, step=1, limit=10
  $region2: #{a_call__.13} parent=0 // loop_pre_header
    _
  $region3: #{a_call__.13} parent=0 // loop_header
    %s10 = sphi 0, %s14
    %p11 = scmp.ge.s32.totalorder %s10, 10
    %s17 = sphi 0, %s29
    %s18 = sphi 0, %s25
    %s19 = sphi 0, %s17
    %s20 = sphi 0, %s18
    %s21 = sphi 0, %s19
    %s22 = sphi 0, %s20
    %s34 = sphi 0, %s36
    %s37 = sphi 0, %s34
    %s38 = sphi 0, %s37
    %s54 = sphi 0, %s38
    %s60 = sphi 0, %s62
    %s63 = sphi 0, %s60
    %s64 = sphi 0, %s63
    %s80 = sphi 0, %s64
    %s88 = sphi 0, %s90
    %s91 = sphi 0, %s88
    %s92 = sphi 0, %s91
    %s108 = sphi 0, %s92
    %s116 = sphi 0, %s118
    %s119 = sphi 0, %s116
    %s120 = sphi 0, %s119
    %s136 = sphi 0, %s120
  $region4: #{a_call__.13} parent=0 // loop_header_branch
    %13 = sbr.rel (%p11) target = $region8
  $region5: #{a_call__.13} parent=0 // loop_body
    %s15 = ssub.s32 %s10, 1
    %s16 = ssub.s32 %s10, 2
    %s23 = sadd.s32 1, %s18
    %p24 = scmp.ge.s32.totalorder %s23, 2
    %s25 = scalar_select %p24, 0, %s23
    %s26 = sadd.s32 1, %s17
    %s27 = scalar_select %p24, %s26, %s17
    %p28 = scmp.ge.s32.totalorder %s27, 4
    %s29 = scalar_select %p28, 0, %s27
    %s30 = ssub.s32 %s17, %s29
    %s31 = ssub.s32 %s18, %s25
    %s32 = sor.u32 %s30, %s31
    %p33 = scmp.eq.s32.totalorder %s32, 0
    %s35 = sadd.s32 %s34, 1
    %s36 = scalar_select %p33, %s34, %s35
    %p39 = pneg %p33
    %p40 = scmp.eq.s32.totalorder %s10, 7
    %p41 = por %p39, %p40
    %p42 = scmp.ne.s32.totalorder %s34, %s37
    %p43 = scmp.eq.s32.totalorder %s10, 0
    %p44 = por %p42, %p43
    %p45 = scmp.ne.s32.totalorder %s34, %s37
    %p46 = scmp.eq.s32.totalorder %s15, 7
    %p47 = por %p45, %p46
    %p48 = scmp.ne.s32.totalorder %s37, %s38
    %p49 = scmp.eq.s32.totalorder %s15, 0
    %p50 = por %p48, %p49
    %p51 = scmp.ne.s32.totalorder %s37, %s38
    %p52 = scmp.eq.s32.totalorder %s16, 7
    %p53 = por %p51, %p52
    %p55 = scmp.ne.s32.totalorder %s38, %s54
    %p56 = scmp.eq.s32.totalorder %s16, 0
    %p57 = por %p55, %p56
    %s58 = ssub.s32 %s17, %s29
    %p59 = scmp.eq.s32.totalorder %s58, 0
    %s61 = sadd.s32 %s60, 1
    %s62 = scalar_select %p59, %s60, %s61
    %p65 = pneg %p59
    %p66 = scmp.eq.s32.totalorder %s10, 7
    %p67 = por %p65, %p66
    %p68 = scmp.ne.s32.totalorder %s60, %s63
    %p69 = scmp.eq.s32.totalorder %s10, 0
    %p70 = por %p68, %p69
    %p71 = scmp.ne.s32.totalorder %s60, %s63
    %p72 = scmp.eq.s32.totalorder %s15, 7
    %p73 = por %p71, %p72
    %p74 = scmp.ne.s32.totalorder %s63, %s64
    %p75 = scmp.eq.s32.totalorder %s15, 0
    %p76 = por %p74, %p75
    %p77 = scmp.ne.s32.totalorder %s63, %s64
    %p78 = scmp.eq.s32.totalorder %s16, 7
    %p79 = por %p77, %p78
    %p81 = scmp.ne.s32.totalorder %s64, %s80
    %p82 = scmp.eq.s32.totalorder %s16, 0
    %p83 = por %p81, %p82
    %s84 = ssub.s32 %s17, %s29
    %s85 = ssub.s32 %s18, %s25
    %s86 = sor.u32 %s84, %s85
    %p87 = scmp.eq.s32.totalorder %s86, 0
    %s89 = sadd.s32 %s88, 1
    %s90 = scalar_select %p87, %s88, %s89
    %p93 = pneg %p87
    %p94 = scmp.eq.s32.totalorder %s10, 7
    %p95 = por %p93, %p94
    %p96 = scmp.ne.s32.totalorder %s88, %s91
    %p97 = scmp.eq.s32.totalorder %s10, 0
    %p98 = por %p96, %p97
    %p99 = scmp.ne.s32.totalorder %s88, %s91
    %p100 = scmp.eq.s32.totalorder %s15, 7
    %p101 = por %p99, %p100
    %p102 = scmp.ne.s32.totalorder %s91, %s92
    %p103 = scmp.eq.s32.totalorder %s15, 0
    %p104 = por %p102, %p103
    %p105 = scmp.ne.s32.totalorder %s91, %s92
    %p106 = scmp.eq.s32.totalorder %s16, 7
    %p107 = por %p105, %p106
    %p109 = scmp.ne.s32.totalorder %s92, %s108
    %p110 = scmp.eq.s32.totalorder %s16, 0
    %p111 = por %p109, %p110
    %s112 = ssub.s32 %s17, %s29
    %s113 = ssub.s32 %s18, %s25
    %s114 = sor.u32 %s112, %s113
    %p115 = scmp.eq.s32.totalorder %s114, 0
    %s117 = sadd.s32 %s116, 1
    %s118 = scalar_select %p115, %s116, %s117
    %p121 = pneg %p115
    %p122 = scmp.eq.s32.totalorder %s10, 7
    %p123 = por %p121, %p122
    %p124 = scmp.ne.s32.totalorder %s116, %s119
    %p125 = scmp.eq.s32.totalorder %s10, 0
    %p126 = por %p124, %p125
    %p127 = scmp.ne.s32.totalorder %s116, %s119
    %p128 = scmp.eq.s32.totalorder %s15, 7
    %p129 = por %p127, %p128
    %p130 = scmp.ne.s32.totalorder %s119, %s120
    %p131 = scmp.eq.s32.totalorder %s15, 0
    %p132 = por %p130, %p131
    %p133 = scmp.ne.s32.totalorder %s119, %s120
    %p134 = scmp.eq.s32.totalorder %s16, 7
    %p135 = por %p133, %p134
    %p137 = scmp.ne.s32.totalorder %s120, %s136
    %p138 = scmp.eq.s32.totalorder %s16, 0
    %p139 = por %p137, %p138
    %p140 = scmp.le.s32.totalorder 1, %s10
    %p141 = scmp.lt.s32.totalorder %s10, 9
    %p142 = pnand %p140, %p141
    %p143 = pneg %p142
    // Predicated region
    $region9: #{a_call__.13} parent=5 // pred_check
      _
    $region10: #{a_call__.13} parent=5 // pred_check_branch
      %145 = sbr.rel (%p142) target = $region12
    $region11: #{a_call__.13} parent=5 // pred_region
      %s146 = ssub.s32 %s10, 1
    $region12: #{a_call__.13} parent=5 // pred_fallthru
      _
    %p147 = scmp.lt.s32.totalorder %s10, 8
    // Predicated region
    $region13: #{a_call__.13} parent=5 // pred_check
      %p148 = pneg %p147
    $region14: #{a_call__.13} parent=5 // pred_check_branch
      %150 = sbr.rel (%p148) target = $region16
    $region15: #{a_call__.13} parent=5 // pred_region
      // Predicated region
      $region17: #{a_call__.13} parent=15 // pred_check
        %p151 = pneg %p44
      $region18: #{a_call__.13} parent=15 // pred_check_branch
        %153 = sbr.rel (%p151) target = $region20
      $region19: #{a_call__.13} parent=15 // pred_region
        %s154 = smul.u32 8, %s18
        %p155 = scmp.lt.s32.totalorder %s17, 3
        %s156 = scalar_select %p155, %s17, 3
        %p157 = scmp.lt.s32.totalorder %s154, 15
        %s158 = scalar_select %p157, %s154, 15
        %s159 = smul.addr %s156, 16
        %s160 = sadd.s32 %s158, %s159
        %s161 = smul.addr %s160, 4
        %s162 = scalar_lea.vmem %s0, %s161
        %s163 = smul.u32 8, %s18
      $region20: #{a_call__.13} parent=15 // pred_fallthru
        _
      // Predicated region
      $region21: #{a_call__.13} parent=15 // pred_check
        %p164 = pneg %p70
      $region22: #{a_call__.13} parent=15 // pred_check_branch
        %166 = sbr.rel (%p164) target = $region24
      $region23: #{a_call__.13} parent=15 // pred_region
        %p167 = scmp.lt.s32.totalorder %s17, 3
        %s168 = scalar_select %p167, %s17, 3
        %s169 = smul.addr %s168, 16
        %s170 = smul.addr %s169, 4
        %s171 = scalar_lea.vmem %s1, %s170
      $region24: #{a_call__.13} parent=15 // pred_fallthru
        _
    $region16: #{a_call__.13} parent=5 // pred_fallthru
      _
    %p172 = scmp.le.s32.totalorder 1, %s10
    %p173 = scmp.lt.s32.totalorder %s10, 9
    %p174 = pnand %p172, %p173
    %p175 = pneg %p174
    // Predicated region
    $region25: #{a_call__.13} parent=5 // pred_check
      _
    $region26: #{a_call__.13} parent=5 // pred_check_branch
      %177 = sbr.rel (%p174) target = $region28
    $region27: #{a_call__.13} parent=5 // pred_region
      %s178 = ssub.s32 %s10, 1
      %s179 = smul.u32 8, %s20
      %p180 = scmp.lt.s32.totalorder %s19, 3
      %s181 = scalar_select %p180, %s19, 3
      %p182 = scmp.lt.s32.totalorder %s179, 15
      %s183 = scalar_select %p182, %s179, 15
      %s184 = smul.addr %s181, 16
      %s185 = sadd.s32 %s183, %s184
      %s186 = smul.addr %s185, 4
      %s187 = scalar_lea.vmem %s0, %s186
      %p188 = pneg %p50
      %p189 = pneg %p47
      %p190 = scmp.lt.s32.totalorder %s19, 3
      %s191 = scalar_select %p190, %s19, 3
      %s192 = smul.addr %s191, 16
      %s193 = smul.addr %s192, 4
      %s194 = scalar_lea.vmem %s1, %s193
      %p195 = pneg %p76
      %p196 = pneg %p73
      %p197 = pneg %p104
      %p198 = pneg %p101
      %s199 = smul.u32 8, %s20
      %p200 = scmp.lt.s32.totalorder %s19, 3
      %s201 = scalar_select %p200, %s19, 3
      %p202 = scmp.lt.s32.totalorder %s199, 15
      %s203 = scalar_select %p202, %s199, 15
      %s204 = smul.addr %s201, 16
      %s205 = sadd.s32 %s203, %s204
      %s206 = smul.addr %s205, 4
      %s207 = scalar_lea.vmem %s2, %s206
      %p208 = pneg %p132
      %p209 = pneg %p129
      %p210 = scmp.lt.s32.totalorder %s19, 3
      %s211 = scalar_select %p210, %s19, 3
      %p212 = scmp.lt.s32.totalorder %s20, 1
      %s213 = scalar_select %p212, %s20, 1
      %s214 = smul.addr %s211, 2
      %s215 = sadd.s32 %s213, %s214
      %s216 = smul.addr %s215, 2
      %s217 = scalar_lea.vmem %s3, %s216
      %s218 = smul.u32 8, %s20
      %p219 = scmp.lt.s32.totalorder %s19, 3
      %s220 = scalar_select %p219, %s19, 3
      %p221 = scmp.lt.s32.totalorder %s218, 15
      %s222 = scalar_select %p221, %s218, 15
      %s223 = smul.addr %s220, 16
      %s224 = sadd.s32 %s222, %s223
      %s225 = smul.addr %s224, 4
      %s226 = scalar_lea.vmem %s0, %s225
      %s227 = smul.u32 8, %s20
      %p228 = scmp.lt.s32.totalorder %s19, 3
      %s229 = scalar_select %p228, %s19, 3
      %s230 = smul.addr %s229, 16
      %s231 = smul.addr %s230, 4
      %s232 = scalar_lea.vmem %s1, %s231
      %s233 = smul.u32 8, %s20
      %p234 = scmp.lt.s32.totalorder %s19, 3
      %s235 = scalar_select %p234, %s19, 3
      %p236 = scmp.lt.s32.totalorder %s233, 15
      %s237 = scalar_select %p236, %s233, 15
      %s238 = smul.addr %s235, 16
      %s239 = sadd.s32 %s237, %s238
      %s240 = smul.addr %s239, 4
      %s241 = scalar_lea.vmem %s2, %s240
      %s242 = smul.u32 8, %s20
      %p243 = scmp.lt.s32.totalorder %s19, 3
      %s244 = scalar_select %p243, %s19, 3
      %p245 = scmp.lt.s32.totalorder %s20, 1
      %s246 = scalar_select %p245, %s20, 1
      %s247 = smul.addr %s244, 2
      %s248 = sadd.s32 %s246, %s247
      %s249 = smul.addr %s248, 2
      %s250 = scalar_lea.vmem %s3, %s249
      %v251 = vld [vmem:[%s226] sm:$0xf]
      %v252 = vld [vmem:[%s226 + $0x4] sm:$0xf]
      %v253 = vld [vmem:[%s226 + $0x8] sm:$0xf]
      %v254 = vld [vmem:[%s226 + $0xc] sm:$0xf]
      %v255 = vld [vmem:[%s226 + $0x10] sm:$0xf]
      %v256 = vld [vmem:[%s226 + $0x14] sm:$0xf]
      %v257 = vld [vmem:[%s226 + $0x18] sm:$0xf]
      %v258 = vld [vmem:[%s226 + $0x1c] sm:$0xf]
      %v259 = vld [vmem:[%s232] sm:$0xf]
      %v260 = vld [vmem:[%s232 + $0x4] sm:$0xf]
      %v261 = vld [vmem:[%s232 + $0x8] sm:$0xf]
      %v262 = vld [vmem:[%s232 + $0xc] sm:$0xf]
      %v263 = vld [vmem:[%s232 + $0x10] sm:$0xf]
      %v264 = vld [vmem:[%s232 + $0x14] sm:$0xf]
      %v265 = vld [vmem:[%s232 + $0x18] sm:$0xf]
      %v266 = vld [vmem:[%s232 + $0x1c] sm:$0xf]
      %v267 = vld [vmem:[%s232 + $0x20] sm:$0xf]
      %v268 = vld [vmem:[%s232 + $0x24] sm:$0xf]
      %v269 = vld [vmem:[%s232 + $0x28] sm:$0xf]
      %v270 = vld [vmem:[%s232 + $0x2c] sm:$0xf]
      %v271 = vld [vmem:[%s232 + $0x30] sm:$0xf]
      %v272 = vld [vmem:[%s232 + $0x34] sm:$0xf]
      %v273 = vld [vmem:[%s232 + $0x38] sm:$0xf]
      %v274 = vld [vmem:[%s232 + $0x3c] sm:$0xf]
      %v283 = vunpack.c.l.b16 %v251
      %v284 = vunpack.c.l.b16 %v252
      %v285 = vunpack.c.l.b16 %v253
      %v286 = vunpack.c.l.b16 %v254
      %v287 = vunpack.c.l.b16 %v255
      %v288 = vunpack.c.l.b16 %v256
      %v289 = vunpack.c.l.b16 %v257
      %v290 = vunpack.c.l.b16 %v258
      %v291 = vpack.c.b16 %v284, %v283
      %v292 = vpack.c.b16 %v286, %v285
      %v293 = vpack.c.b16 %v288, %v287
      %v294 = vpack.c.b16 %v290, %v289
      %v315 = vunpack.c.l.b16 %v259
      %v316 = vunpack.c.l.b16 %v260
      %v317 = vunpack.c.l.b16 %v261
      %v318 = vunpack.c.l.b16 %v262
      %v319 = vunpack.c.l.b16 %v263
      %v320 = vunpack.c.l.b16 %v264
      %v321 = vunpack.c.l.b16 %v265
      %v322 = vunpack.c.l.b16 %v266
      %v323 = vunpack.c.l.b16 %v267
      %v324 = vunpack.c.l.b16 %v268
      %v325 = vunpack.c.l.b16 %v269
      %v326 = vunpack.c.l.b16 %v270
      %v327 = vunpack.c.l.b16 %v271
      %v328 = vunpack.c.l.b16 %v272
      %v329 = vunpack.c.l.b16 %v273
      %v330 = vunpack.c.l.b16 %v274
      %v331 = vpack.c.b16 %v316, %v315
      %v332 = vpack.c.b16 %v318, %v317
      %v333 = vpack.c.b16 %v320, %v319
      %v334 = vpack.c.b16 %v322, %v321
      %v335 = vpack.c.b16 %v324, %v323
      %v336 = vpack.c.b16 %v326, %v325
      %v337 = vpack.c.b16 %v328, %v327
      %v338 = vpack.c.b16 %v330, %v329
      %347 = vmatpush.bf16.msra.mxu0 %v338
      %348 = vmatpush.bf16.msra.mxu0 %v337
      %349 = vmatpush.bf16.msra.mxu0 %v336
      %350 = vmatpush.bf16.msra.mxu0 %v335
      %351 = vmatpush.bf16.msra.mxu0 %v334
      %352 = vmatpush.bf16.msra.mxu0 %v333
      %353 = vmatpush.bf16.msra.mxu0 %v332
      %354 = vmatpush.bf16.msra.mxu0 %v331
      %355 = vmatmul.bf16.gmra.mxu0 %v291
      %v356 = vpop.f32.mrf.mxu0
      %v357 = vadd.f32 0.0, %v356
      %v358 = vpop.f32.mrf.mxu0
      %v359 = vadd.f32 0.0, %v358
      %360 = vmatmul.bf16.gmra.mxu0 %v292
      %v361 = vpop.f32.mrf.mxu0
      %v362 = vadd.f32 0.0, %v361
      %v363 = vpop.f32.mrf.mxu0
      %v364 = vadd.f32 0.0, %v363
      %365 = vmatmul.bf16.gmra.mxu0 %v293
      %v366 = vpop.f32.mrf.mxu0
      %v367 = vadd.f32 0.0, %v366
      %v368 = vpop.f32.mrf.mxu0
      %v369 = vadd.f32 0.0, %v368
      %370 = vmatmul.bf16.gmra.mxu0 %v294
      %v371 = vpop.f32.mrf.mxu0
      %v372 = vadd.f32 0.0, %v371
      %v373 = vpop.f32.mrf.mxu0
      %v374 = vadd.f32 0.0, %v373
      %375 = vdwg.mxu0
      %v376 = vpack.c.bf16 %v357, %v357
      %v377 = vpack.c.bf16 %v359, %v359
      %v378 = vpack.c.bf16 %v362, %v362
      %v379 = vpack.c.bf16 %v364, %v364
      %v380 = vpack.c.bf16 %v367, %v367
      %v381 = vpack.c.bf16 %v369, %v369
      %v382 = vpack.c.bf16 %v372, %v372
      %v383 = vpack.c.bf16 %v374, %v374
      %384 = vst [vmem:[%s241] sm:$0xf] %v376
      %385 = vst [vmem:[%s241 + $0x4] sm:$0xf] %v377
      %386 = vst [vmem:[%s241 + $0x8] sm:$0xf] %v378
      %387 = vst [vmem:[%s241 + $0xc] sm:$0xf] %v379
      %388 = vst [vmem:[%s241 + $0x10] sm:$0xf] %v380
      %389 = vst [vmem:[%s241 + $0x14] sm:$0xf] %v381
      %390 = vst [vmem:[%s241 + $0x18] sm:$0xf] %v382
      %391 = vst [vmem:[%s241 + $0x1c] sm:$0xf] %v383
      %v392 = vadd.f32 %v357, %v359
      %v393 = vadd.f32 %v392, %v362
      %v394 = vadd.f32 %v393, %v364
      %v395 = vadd.f32 %v394, %v367
      %v396 = vadd.f32 %v395, %v369
      %v397 = vadd.f32 %v396, %v372
      %v398 = vadd.f32 %v397, %v374
      %v399 = vrot.slane %v398, 4
      %v400 = vadd.f32 %v398, %v399
      %v401 = vrot.slane %v400, 2
      %v402 = vadd.f32 %v400, %v401
      %v403 = vrot.slane %v402, 1
      %v404 = vadd.f32 %v402, %v403
      %405 = vst [vmem:[%s250] sm:$0x1] %v404
      %v406 = vmul.f32 %v357, %v357
      %v407 = vmul.f32 %v359, %v359
      %v408 = vmul.f32 %v362, %v362
      %v409 = vmul.f32 %v364, %v364
      %v410 = vmul.f32 %v367, %v367
      %v411 = vmul.f32 %v369, %v369
      %v412 = vmul.f32 %v372, %v372
      %v413 = vmul.f32 %v374, %v374
      %v414 = vadd.f32 %v406, %v407
      %v415 = vadd.f32 %v414, %v408
      %v416 = vadd.f32 %v415, %v409
      %v417 = vadd.f32 %v416, %v410
      %v418 = vadd.f32 %v417, %v411
      %v419 = vadd.f32 %v418, %v412
      %v420 = vadd.f32 %v419, %v413
      %v421 = vrot.slane %v420, 4
      %v422 = vadd.f32 %v420, %v421
      %v423 = vrot.slane %v422, 2
      %v424 = vadd.f32 %v422, %v423
      %v425 = vrot.slane %v424, 1
      %v426 = vadd.f32 %v424, %v425
      %427 = vst [vmem:[%s250 + $0x1] sm:$0x1] %v426
      %s428 = smul.u32 8, %s20
      %p429 = scmp.lt.s32.totalorder %s19, 3
      %s430 = scalar_select %p429, %s19, 3
      %p431 = scmp.lt.s32.totalorder %s428, 15
      %s432 = scalar_select %p431, %s428, 15
      %s433 = smul.addr %s430, 16
      %s434 = sadd.s32 %s432, %s433
      %s435 = smul.addr %s434, 4
      %s436 = scalar_lea.vmem %s2, %s435
      %p437 = scmp.lt.s32.totalorder %s19, 3
      %s438 = scalar_select %p437, %s19, 3
      %p439 = scmp.lt.s32.totalorder %s20, 1
      %s440 = scalar_select %p439, %s20, 1
      %s441 = smul.addr %s438, 2
      %s442 = sadd.s32 %s440, %s441
      %s443 = smul.addr %s442, 2
      %s444 = scalar_lea.vmem %s3, %s443
      // Predicated region
      $region29: #{a_call__.13} parent=27 // pred_check
        %p445 = pneg %p101
      $region30: #{a_call__.13} parent=27 // pred_check_branch
        %447 = sbr.rel (%p445) target = $region32
      $region31: #{a_call__.13} parent=27 // pred_region
        %s448 = smul.u32 8, %s20
      $region32: #{a_call__.13} parent=27 // pred_fallthru
        _
      // Predicated region
      $region33: #{a_call__.13} parent=27 // pred_check
        %p449 = pneg %p129
      $region34: #{a_call__.13} parent=27 // pred_check_branch
        %451 = sbr.rel (%p449) target = $region36
      $region35: #{a_call__.13} parent=27 // pred_region
        _
      $region36: #{a_call__.13} parent=27 // pred_fallthru
        _
    $region28: #{a_call__.13} parent=5 // pred_fallthru
      _
    %p452 = scmp.le.s32.totalorder 2, %s10
    // Predicated region
    $region37: #{a_call__.13} parent=5 // pred_check
      %p453 = pneg %p452
    $region38: #{a_call__.13} parent=5 // pred_check_branch
      %455 = sbr.rel (%p453) target = $region40
    $region39: #{a_call__.13} parent=5 // pred_region
      %s456 = ssub.s32 %s10, 2
      // Predicated region
      $region41: #{a_call__.13} parent=39 // pred_check
        %p457 = pneg %p107
      $region42: #{a_call__.13} parent=39 // pred_check_branch
        %459 = sbr.rel (%p457) target = $region44
      $region43: #{a_call__.13} parent=39 // pred_region
        %s460 = smul.u32 8, %s22
        %p461 = scmp.lt.s32.totalorder %s21, 3
        %s462 = scalar_select %p461, %s21, 3
        %p463 = scmp.lt.s32.totalorder %s460, 15
        %s464 = scalar_select %p463, %s460, 15
        %s465 = smul.addr %s462, 16
        %s466 = sadd.s32 %s464, %s465
        %s467 = smul.addr %s466, 4
        %s468 = scalar_lea.vmem %s2, %s467
      $region44: #{a_call__.13} parent=39 // pred_fallthru
        _
      // Predicated region
      $region45: #{a_call__.13} parent=39 // pred_check
        %p469 = pneg %p135
      $region46: #{a_call__.13} parent=39 // pred_check_branch
        %471 = sbr.rel (%p469) target = $region48
      $region47: #{a_call__.13} parent=39 // pred_region
        %p472 = scmp.lt.s32.totalorder %s21, 3
        %s473 = scalar_select %p472, %s21, 3
        %p474 = scmp.lt.s32.totalorder %s22, 1
        %s475 = scalar_select %p474, %s22, 1
        %s476 = smul.addr %s473, 2
        %s477 = sadd.s32 %s475, %s476
        %s478 = smul.addr %s477, 2
        %s479 = scalar_lea.vmem %s3, %s478
      $region48: #{a_call__.13} parent=39 // pred_fallthru
        _
    $region40: #{a_call__.13} parent=5 // pred_fallthru
      _
  $region6: #{a_call__.13} parent=0 // loop_footer
    %s14 = sadd.s32 1, %s10
  $region7: #{a_call__.13} parent=0 // loop_footer_branch
    %9 = sbr.rel target = $region3
  $region8: #{a_call__.13} parent=0 // loop_exit
    _

// kernel: a_call__.14
$region0: #{a_call__.14}
  #allocation0 [shape = 'u32[]', space=smem, size = 0x4, offset = 0x4, fixed_abs, tag = 'smem constant byte address 0x4 - core index']
  #allocation1 [shape = 'u32[72,128]{1,0:T(1,128)}', space=vmem, size = 0x9000, scoped, tag = 'internal scratch']
  %s0 = inlined_call_operand.vmem [shape: bf16[4,128,128], index: 0, kind: input, shape index: {}]
  %s1 = inlined_call_operand.vmem [shape: f32[1,128], index: 1, kind: input, shape index: {}]
  %s2 = inlined_call_operand.vmem [shape: f32[1,128], index: 2, kind: input, shape index: {}]
  %s3 = inlined_call_operand.vmem [shape: bf16[4,128,128], index: 3, kind: output, shape index: {}]
  %s4 = sld [smem:[#allocation0]]
  $region45: #{a_call__.14} parent=0
    _
  %s6 = ssub.s32 1, %s4
  %s7 = scalar_select 0, %s6, %s4
  loop: start=0, step=1, limit=10
  $region2: #{a_call__.14} parent=0 // loop_pre_header
    _
  $region3: #{a_call__.14} parent=0 // loop_header
    %s9 = sphi 0, %s13
    %p10 = scmp.ge.s32.totalorder %s9, 10
    %s16 = sphi 0, %s28
    %s17 = sphi 0, %s24
    %s18 = sphi 0, %s16
    %s19 = sphi 0, %s17
    %s20 = sphi 0, %s18
    %s21 = sphi 0, %s19
    %s33 = sphi 0, %s35
    %s36 = sphi 0, %s33
    %s37 = sphi 0, %s36
    %s53 = sphi 0, %s37
    %s57 = sphi 0, %s57
    %s59 = sphi 0, %s57
    %s60 = sphi 0, %s59
    %s74 = sphi 0, %s60
    %s78 = sphi 0, %s78
    %s80 = sphi 0, %s78
    %s81 = sphi 0, %s80
    %s95 = sphi 0, %s81
    %s103 = sphi 0, %s105
    %s106 = sphi 0, %s103
    %s107 = sphi 0, %s106
    %s123 = sphi 0, %s107
  $region4: #{a_call__.14} parent=0 // loop_header_branch
    %12 = sbr.rel (%p10) target = $region8
  $region5: #{a_call__.14} parent=0 // loop_body
    %s14 = ssub.s32 %s9, 1
    %s15 = ssub.s32 %s9, 2
    %s22 = sadd.s32 1, %s17
    %p23 = scmp.ge.s32.totalorder %s22, 2
    %s24 = scalar_select %p23, 0, %s22
    %s25 = sadd.s32 1, %s16
    %s26 = scalar_select %p23, %s25, %s16
    %p27 = scmp.ge.s32.totalorder %s26, 4
    %s28 = scalar_select %p27, 0, %s26
    %s29 = ssub.s32 %s16, %s28
    %s30 = ssub.s32 %s17, %s24
    %s31 = sor.u32 %s29, %s30
    %p32 = scmp.eq.s32.totalorder %s31, 0
    %s34 = sadd.s32 %s33, 1
    %s35 = scalar_select %p32, %s33, %s34
    %p38 = pneg %p32
    %p39 = scmp.eq.s32.totalorder %s9, 7
    %p40 = por %p38, %p39
    %p41 = scmp.ne.s32.totalorder %s33, %s36
    %p42 = scmp.eq.s32.totalorder %s9, 0
    %p43 = por %p41, %p42
    %p44 = scmp.ne.s32.totalorder %s33, %s36
    %p45 = scmp.eq.s32.totalorder %s14, 7
    %p46 = por %p44, %p45
    %p47 = scmp.ne.s32.totalorder %s36, %s37
    %p48 = scmp.eq.s32.totalorder %s14, 0
    %p49 = por %p47, %p48
    %p50 = scmp.ne.s32.totalorder %s36, %s37
    %p51 = scmp.eq.s32.totalorder %s15, 7
    %p52 = por %p50, %p51
    %p54 = scmp.ne.s32.totalorder %s37, %s53
    %p55 = scmp.eq.s32.totalorder %s15, 0
    %p56 = por %p54, %p55
    %s58 = sadd.s32 %s57, 1
    %p61 = scmp.eq.s32.totalorder %s9, 7
    %p62 = scmp.ne.s32.totalorder %s57, %s59
    %p63 = scmp.eq.s32.totalorder %s9, 0
    %p64 = por %p62, %p63
    %p65 = scmp.ne.s32.totalorder %s57, %s59
    %p66 = scmp.eq.s32.totalorder %s14, 7
    %p67 = por %p65, %p66
    %p68 = scmp.ne.s32.totalorder %s59, %s60
    %p69 = scmp.eq.s32.totalorder %s14, 0
    %p70 = por %p68, %p69
    %p71 = scmp.ne.s32.totalorder %s59, %s60
    %p72 = scmp.eq.s32.totalorder %s15, 7
    %p73 = por %p71, %p72
    %p75 = scmp.ne.s32.totalorder %s60, %s74
    %p76 = scmp.eq.s32.totalorder %s15, 0
    %p77 = por %p75, %p76
    %s79 = sadd.s32 %s78, 1
    %p82 = scmp.eq.s32.totalorder %s9, 7
    %p83 = scmp.ne.s32.totalorder %s78, %s80
    %p84 = scmp.eq.s32.totalorder %s9, 0
    %p85 = por %p83, %p84
    %p86 = scmp.ne.s32.totalorder %s78, %s80
    %p87 = scmp.eq.s32.totalorder %s14, 7
    %p88 = por %p86, %p87
    %p89 = scmp.ne.s32.totalorder %s80, %s81
    %p90 = scmp.eq.s32.totalorder %s14, 0
    %p91 = por %p89, %p90
    %p92 = scmp.ne.s32.totalorder %s80, %s81
    %p93 = scmp.eq.s32.totalorder %s15, 7
    %p94 = por %p92, %p93
    %p96 = scmp.ne.s32.totalorder %s81, %s95
    %p97 = scmp.eq.s32.totalorder %s15, 0
    %p98 = por %p96, %p97
    %s99 = ssub.s32 %s16, %s28
    %s100 = ssub.s32 %s17, %s24
    %s101 = sor.u32 %s99, %s100
    %p102 = scmp.eq.s32.totalorder %s101, 0
    %s104 = sadd.s32 %s103, 1
    %s105 = scalar_select %p102, %s103, %s104
    %p108 = pneg %p102
    %p109 = scmp.eq.s32.totalorder %s9, 7
    %p110 = por %p108, %p109
    %p111 = scmp.ne.s32.totalorder %s103, %s106
    %p112 = scmp.eq.s32.totalorder %s9, 0
    %p113 = por %p111, %p112
    %p114 = scmp.ne.s32.totalorder %s103, %s106
    %p115 = scmp.eq.s32.totalorder %s14, 7
    %p116 = por %p114, %p115
    %p117 = scmp.ne.s32.totalorder %s106, %s107
    %p118 = scmp.eq.s32.totalorder %s14, 0
    %p119 = por %p117, %p118
    %p120 = scmp.ne.s32.totalorder %s106, %s107
    %p121 = scmp.eq.s32.totalorder %s15, 7
    %p122 = por %p120, %p121
    %p124 = scmp.ne.s32.totalorder %s107, %s123
    %p125 = scmp.eq.s32.totalorder %s15, 0
    %p126 = por %p124, %p125
    %p127 = scmp.le.s32.totalorder 1, %s9
    %p128 = scmp.lt.s32.totalorder %s9, 9
    %p129 = pnand %p127, %p128
    %p130 = pneg %p129
    // Predicated region
    $region9: #{a_call__.14} parent=5 // pred_check
      _
    $region10: #{a_call__.14} parent=5 // pred_check_branch
      %132 = sbr.rel (%p129) target = $region12
    $region11: #{a_call__.14} parent=5 // pred_region
      %s133 = ssub.s32 %s9, 1
      // Predicated region
      $region13: #{a_call__.14} parent=11 // pred_check
        %p134 = pneg %p70
      $region14: #{a_call__.14} parent=11 // pred_check_branch
        %136 = sbr.rel (%p134) target = $region16
      $region15: #{a_call__.14} parent=11 // pred_region
        _
      $region16: #{a_call__.14} parent=11 // pred_fallthru
        _
      // Predicated region
      $region17: #{a_call__.14} parent=11 // pred_check
        %p137 = pneg %p91
      $region18: #{a_call__.14} parent=11 // pred_check_branch
        %139 = sbr.rel (%p137) target = $region20
      $region19: #{a_call__.14} parent=11 // pred_region
        _
      $region20: #{a_call__.14} parent=11 // pred_fallthru
        _
    $region12: #{a_call__.14} parent=5 // pred_fallthru
      _
    %p140 = scmp.lt.s32.totalorder %s9, 8
    // Predicated region
    $region21: #{a_call__.14} parent=5 // pred_check
      %p141 = pneg %p140
    $region22: #{a_call__.14} parent=5 // pred_check_branch
      %143 = sbr.rel (%p141) target = $region24
    $region23: #{a_call__.14} parent=5 // pred_region
      // Predicated region
      $region25: #{a_call__.14} parent=23 // pred_check
        %p144 = pneg %p43
      $region26: #{a_call__.14} parent=23 // pred_check_branch
        %146 = sbr.rel (%p144) target = $region28
      $region27: #{a_call__.14} parent=23 // pred_region
        %s147 = smul.u32 8, %s17
        %p148 = scmp.lt.s32.totalorder %s16, 3
        %s149 = scalar_select %p148, %s16, 3
        %p150 = scmp.lt.s32.totalorder %s147, 15
        %s151 = scalar_select %p150, %s147, 15
        %s152 = smul.addr %s149, 16
        %s153 = sadd.s32 %s151, %s152
        %s154 = smul.addr %s153, 4
        %s155 = scalar_lea.vmem %s0, %s154
        %s156 = smul.u32 8, %s17
      $region28: #{a_call__.14} parent=23 // pred_fallthru
        _
    $region24: #{a_call__.14} parent=5 // pred_fallthru
      _
    %p157 = scmp.le.s32.totalorder 1, %s9
    %p158 = scmp.lt.s32.totalorder %s9, 9
    %p159 = pnand %p157, %p158
    %p160 = pneg %p159
    // Predicated region
    $region29: #{a_call__.14} parent=5 // pred_check
      _
    $region30: #{a_call__.14} parent=5 // pred_check_branch
      %162 = sbr.rel (%p159) target = $region32
    $region31: #{a_call__.14} parent=5 // pred_region
      %s163 = ssub.s32 %s9, 1
      %s164 = smul.u32 8, %s19
      %p165 = scmp.lt.s32.totalorder %s18, 3
      %s166 = scalar_select %p165, %s18, 3
      %p167 = scmp.lt.s32.totalorder %s164, 15
      %s168 = scalar_select %p167, %s164, 15
      %s169 = smul.addr %s166, 16
      %s170 = sadd.s32 %s168, %s169
      %s171 = smul.addr %s170, 4
      %s172 = scalar_lea.vmem %s0, %s171
      %p173 = pneg %p49
      %p174 = pneg %p46
      %p175 = pneg %p70
      %p176 = pneg %p67
      %p177 = pneg %p91
      %p178 = pneg %p88
      %p179 = pneg %p119
      %p180 = pneg %p116
      %s181 = smul.u32 8, %s19
      %p182 = scmp.lt.s32.totalorder %s18, 3
      %s183 = scalar_select %p182, %s18, 3
      %p184 = scmp.lt.s32.totalorder %s181, 15
      %s185 = scalar_select %p184, %s181, 15
      %s186 = smul.addr %s183, 16
      %s187 = sadd.s32 %s185, %s186
      %s188 = smul.addr %s187, 4
      %s189 = scalar_lea.vmem %s3, %s188
      %s190 = smul.u32 8, %s19
      %p191 = scmp.lt.s32.totalorder %s18, 3
      %s192 = scalar_select %p191, %s18, 3
      %p193 = scmp.lt.s32.totalorder %s190, 15
      %s194 = scalar_select %p193, %s190, 15
      %s195 = smul.addr %s192, 16
      %s196 = sadd.s32 %s194, %s195
      %s197 = smul.addr %s196, 4
      %s198 = scalar_lea.vmem %s0, %s197
      %s199 = smul.u32 8, %s19
      %s200 = smul.u32 8, %s19
      %p201 = scmp.lt.s32.totalorder %s18, 3
      %s202 = scalar_select %p201, %s18, 3
      %p203 = scmp.lt.s32.totalorder %s200, 15
      %s204 = scalar_select %p203, %s200, 15
      %s205 = smul.addr %s202, 16
      %s206 = sadd.s32 %s204, %s205
      %s207 = smul.addr %s206, 4
      %s208 = scalar_lea.vmem %s3, %s207
      %s209 = smul.u32 8, %s19
      %v210 = vld [vmem:[%s198] sm:$0xf]
      %v211 = vld [vmem:[%s198 + $0x4] sm:$0xf]
      %v212 = vld [vmem:[%s198 + $0x8] sm:$0xf]
      %v213 = vld [vmem:[%s198 + $0xc] sm:$0xf]
      %v214 = vld [vmem:[%s198 + $0x10] sm:$0xf]
      %v215 = vld [vmem:[%s198 + $0x14] sm:$0xf]
      %v216 = vld [vmem:[%s198 + $0x18] sm:$0xf]
      %v217 = vld [vmem:[%s198 + $0x1c] sm:$0xf]
      %v218 = vunpack.c.l.bf16 %v210
      %v219 = vunpack.c.l.bf16 %v211
      %v220 = vunpack.c.l.bf16 %v212
      %v221 = vunpack.c.l.bf16 %v213
      %v222 = vunpack.c.l.bf16 %v214
      %v223 = vunpack.c.l.bf16 %v215
      %v224 = vunpack.c.l.bf16 %v216
      %v225 = vunpack.c.l.bf16 %v217
      %v226 = vld [vmem:[%s1] sm:$0x1]
      %v228 = vperm.slane %v226, 0
      %v230 = vmul.f32 %v218, %v228
      %v231 = vmul.f32 %v219, %v228
      %v232 = vmul.f32 %v220, %v228
      %v233 = vmul.f32 %v221, %v228
      %v234 = vmul.f32 %v222, %v228
      %v235 = vmul.f32 %v223, %v228
      %v236 = vmul.f32 %v224, %v228
      %v237 = vmul.f32 %v225, %v228
      %v238 = vld [vmem:[%s2] sm:$0x1]
      %v240 = vperm.slane %v238, 0
      %v242 = vadd.f32 %v230, %v240
      %v243 = vadd.f32 %v231, %v240
      %v244 = vadd.f32 %v232, %v240
      %v245 = vadd.f32 %v233, %v240
      %v246 = vadd.f32 %v234, %v240
      %v247 = vadd.f32 %v235, %v240
      %v248 = vadd.f32 %v236, %v240
      %v249 = vadd.f32 %v237, %v240
      %v250 = vmax.f32 %v242, 0.0
      %v251 = vmax.f32 %v243, 0.0
      %v252 = vmax.f32 %v244, 0.0
      %v253 = vmax.f32 %v245, 0.0
      %v254 = vmax.f32 %v246, 0.0
      %v255 = vmax.f32 %v247, 0.0
      %v256 = vmax.f32 %v248, 0.0
      %v257 = vmax.f32 %v249, 0.0
      %v258 = vpack.c.bf16 %v250, %v250
      %v259 = vpack.c.bf16 %v251, %v251
      %v260 = vpack.c.bf16 %v252, %v252
      %v261 = vpack.c.bf16 %v253, %v253
      %v262 = vpack.c.bf16 %v254, %v254
      %v263 = vpack.c.bf16 %v255, %v255
      %v264 = vpack.c.bf16 %v256, %v256
      %v265 = vpack.c.bf16 %v257, %v257
      %266 = vst [vmem:[%s208] sm:$0xf] %v258
      %267 = vst [vmem:[%s208 + $0x4] sm:$0xf] %v259
      %268 = vst [vmem:[%s208 + $0x8] sm:$0xf] %v260
      %269 = vst [vmem:[%s208 + $0xc] sm:$0xf] %v261
      %270 = vst [vmem:[%s208 + $0x10] sm:$0xf] %v262
      %271 = vst [vmem:[%s208 + $0x14] sm:$0xf] %v263
      %272 = vst [vmem:[%s208 + $0x18] sm:$0xf] %v264
      %273 = vst [vmem:[%s208 + $0x1c] sm:$0xf] %v265
      %s274 = smul.u32 8, %s19
      %p275 = scmp.lt.s32.totalorder %s18, 3
      %s276 = scalar_select %p275, %s18, 3
      %p277 = scmp.lt.s32.totalorder %s274, 15
      %s278 = scalar_select %p277, %s274, 15
      %s279 = smul.addr %s276, 16
      %s280 = sadd.s32 %s278, %s279
      %s281 = smul.addr %s280, 4
      %s282 = scalar_lea.vmem %s3, %s281
      // Predicated region
      $region33: #{a_call__.14} parent=31 // pred_check
        %p283 = pneg %p116
      $region34: #{a_call__.14} parent=31 // pred_check_branch
        %285 = sbr.rel (%p283) target = $region36
      $region35: #{a_call__.14} parent=31 // pred_region
        %s286 = smul.u32 8, %s19
      $region36: #{a_call__.14} parent=31 // pred_fallthru
        _
    $region32: #{a_call__.14} parent=5 // pred_fallthru
      _
    %p287 = scmp.le.s32.totalorder 2, %s9
    // Predicated region
    $region37: #{a_call__.14} parent=5 // pred_check
      %p288 = pneg %p287
    $region38: #{a_call__.14} parent=5 // pred_check_branch
      %290 = sbr.rel (%p288) target = $region40
    $region39: #{a_call__.14} parent=5 // pred_region
      %s291 = ssub.s32 %s9, 2
      // Predicated region
      $region41: #{a_call__.14} parent=39 // pred_check
        %p292 = pneg %p122
      $region42: #{a_call__.14} parent=39 // pred_check_branch
        %294 = sbr.rel (%p292) target = $region44
      $region43: #{a_call__.14} parent=39 // pred_region
        %s295 = smul.u32 8, %s21
        %p296 = scmp.lt.s32.totalorder %s20, 3
        %s297 = scalar_select %p296, %s20, 3
        %p298 = scmp.lt.s32.totalorder %s295, 15
        %s299 = scalar_select %p298, %s295, 15
        %s300 = smul.addr %s297, 16
        %s301 = sadd.s32 %s299, %s300
        %s302 = smul.addr %s301, 4
        %s303 = scalar_lea.vmem %s3, %s302
      $region44: #{a_call__.14} parent=39 // pred_fallthru
        _
    $region40: #{a_call__.14} parent=5 // pred_fallthru
      _
  $region6: #{a_call__.14} parent=0 // loop_footer
    %s13 = sadd.s32 1, %s9
  $region7: #{a_call__.14} parent=0 // loop_footer_branch
    %8 = sbr.rel target = $region3
  $region8: #{a_call__.14} parent=0 // loop_exit
    _

// kernel: a_call__.15
$region0: #{a_call__.15}
  #allocation0 [shape = 'u32[]', space=smem, size = 0x4, offset = 0x4, fixed_abs, tag = 'smem constant byte address 0x4 - core index']
  #allocation1 [shape = 'u32[72,128]{1,0:T(1,128)}', space=vmem, size = 0x9000, scoped, tag = 'internal scratch']
  %s0 = inlined_call_operand.vmem [shape: bf16[4,512,64], index: 0, kind: input, shape index: {}]
  %s1 = inlined_call_operand.vmem [shape: bf16[4,64,128], index: 1, kind: input, shape index: {}]
  %s2 = inlined_call_operand.vmem [shape: bf16[4,512,128], index: 2, kind: output, shape index: {0}]
  %s3 = inlined_call_operand.vmem [shape: f32[4,2,2,128], index: 3, kind: output, shape index: {1}]
  %4 = xla_tuple %s2, %s3
  %s5 = sld [smem:[#allocation0]]
  $region49: #{a_call__.15} parent=0
    _
  %s7 = ssub.s32 1, %s5
  %s8 = scalar_select 0, %s7, %s5
  loop: start=0, step=1, limit=10
  $region2: #{a_call__.15} parent=0 // loop_pre_header
    _
  $region3: #{a_call__.15} parent=0 // loop_header
    %s10 = sphi 0, %s14
    %p11 = scmp.ge.s32.totalorder %s10, 10
    %s17 = sphi 0, %s29
    %s18 = sphi 0, %s25
    %s19 = sphi 0, %s17
    %s20 = sphi 0, %s18
    %s21 = sphi 0, %s19
    %s22 = sphi 0, %s20
    %s34 = sphi 0, %s36
    %s37 = sphi 0, %s34
    %s38 = sphi 0, %s37
    %s54 = sphi 0, %s38
    %s60 = sphi 0, %s62
    %s63 = sphi 0, %s60
    %s64 = sphi 0, %s63
    %s80 = sphi 0, %s64
    %s88 = sphi 0, %s90
    %s91 = sphi 0, %s88
    %s92 = sphi 0, %s91
    %s108 = sphi 0, %s92
    %s116 = sphi 0, %s118
    %s119 = sphi 0, %s116
    %s120 = sphi 0, %s119
    %s136 = sphi 0, %s120
  $region4: #{a_call__.15} parent=0 // loop_header_branch
    %13 = sbr.rel (%p11) target = $region8
  $region5: #{a_call__.15} parent=0 // loop_body
    %s15 = ssub.s32 %s10, 1
    %s16 = ssub.s32 %s10, 2
    %s23 = sadd.s32 1, %s18
    %p24 = scmp.ge.s32.totalorder %s23, 2
    %s25 = scalar_select %p24, 0, %s23
    %s26 = sadd.s32 1, %s17
    %s27 = scalar_select %p24, %s26, %s17
    %p28 = scmp.ge.s32.totalorder %s27, 4
    %s29 = scalar_select %p28, 0, %s27
    %s30 = ssub.s32 %s17, %s29
    %s31 = ssub.s32 %s18, %s25
    %s32 = sor.u32 %s30, %s31
    %p33 = scmp.eq.s32.totalorder %s32, 0
    %s35 = sadd.s32 %s34, 1
    %s36 = scalar_select %p33, %s34, %s35
    %p39 = pneg %p33
    %p40 = scmp.eq.s32.totalorder %s10, 7
    %p41 = por %p39, %p40
    %p42 = scmp.ne.s32.totalorder %s34, %s37
    %p43 = scmp.eq.s32.totalorder %s10, 0
    %p44 = por %p42, %p43
    %p45 = scmp.ne.s32.totalorder %s34, %s37
    %p46 = scmp.eq.s32.totalorder %s15, 7
    %p47 = por %p45, %p46
    %p48 = scmp.ne.s32.totalorder %s37, %s38
    %p49 = scmp.eq.s32.totalorder %s15, 0
    %p50 = por %p48, %p49
    %p51 = scmp.ne.s32.totalorder %s37, %s38
    %p52 = scmp.eq.s32.totalorder %s16, 7
    %p53 = por %p51, %p52
    %p55 = scmp.ne.s32.totalorder %s38, %s54
    %p56 = scmp.eq.s32.totalorder %s16, 0
    %p57 = por %p55, %p56
    %s58 = ssub.s32 %s17, %s29
    %p59 = scmp.eq.s32.totalorder %s58, 0
    %s61 = sadd.s32 %s60, 1
    %s62 = scalar_select %p59, %s60, %s61
    %p65 = pneg %p59
    %p66 = scmp.eq.s32.totalorder %s10, 7
    %p67 = por %p65, %p66
    %p68 = scmp.ne.s32.totalorder %s60, %s63
    %p69 = scmp.eq.s32.totalorder %s10, 0
    %p70 = por %p68, %p69
    %p71 = scmp.ne.s32.totalorder %s60, %s63
    %p72 = scmp.eq.s32.totalorder %s15, 7
    %p73 = por %p71, %p72
    %p74 = scmp.ne.s32.totalorder %s63, %s64
    %p75 = scmp.eq.s32.totalorder %s15, 0
    %p76 = por %p74, %p75
    %p77 = scmp.ne.s32.totalorder %s63, %s64
    %p78 = scmp.eq.s32.totalorder %s16, 7
    %p79 = por %p77, %p78
    %p81 = scmp.ne.s32.totalorder %s64, %s80
    %p82 = scmp.eq.s32.totalorder %s16, 0
    %p83 = por %p81, %p82
    %s84 = ssub.s32 %s17, %s29
    %s85 = ssub.s32 %s18, %s25
    %s86 = sor.u32 %s84, %s85
    %p87 = scmp.eq.s32.totalorder %s86, 0
    %s89 = sadd.s32 %s88, 1
    %s90 = scalar_select %p87, %s88, %s89
    %p93 = pneg %p87
    %p94 = scmp.eq.s32.totalorder %s10, 7
    %p95 = por %p93, %p94
    %p96 = scmp.ne.s32.totalorder %s88, %s91
    %p97 = scmp.eq.s32.totalorder %s10, 0
    %p98 = por %p96, %p97
    %p99 = scmp.ne.s32.totalorder %s88, %s91
    %p100 = scmp.eq.s32.totalorder %s15, 7
    %p101 = por %p99, %p100
    %p102 = scmp.ne.s32.totalorder %s91, %s92
    %p103 = scmp.eq.s32.totalorder %s15, 0
    %p104 = por %p102, %p103
    %p105 = scmp.ne.s32.totalorder %s91, %s92
    %p106 = scmp.eq.s32.totalorder %s16, 7
    %p107 = por %p105, %p106
    %p109 = scmp.ne.s32.totalorder %s92, %s108
    %p110 = scmp.eq.s32.totalorder %s16, 0
    %p111 = por %p109, %p110
    %s112 = ssub.s32 %s17, %s29
    %s113 = ssub.s32 %s18, %s25
    %s114 = sor.u32 %s112, %s113
    %p115 = scmp.eq.s32.totalorder %s114, 0
    %s117 = sadd.s32 %s116, 1
    %s118 = scalar_select %p115, %s116, %s117
    %p121 = pneg %p115
    %p122 = scmp.eq.s32.totalorder %s10, 7
    %p123 = por %p121, %p122
    %p124 = scmp.ne.s32.totalorder %s116, %s119
    %p125 = scmp.eq.s32.totalorder %s10, 0
    %p126 = por %p124, %p125
    %p127 = scmp.ne.s32.totalorder %s116, %s119
    %p128 = scmp.eq.s32.totalorder %s15, 7
    %p129 = por %p127, %p128
    %p130 = scmp.ne.s32.totalorder %s119, %s120
    %p131 = scmp.eq.s32.totalorder %s15, 0
    %p132 = por %p130, %p131
    %p133 = scmp.ne.s32.totalorder %s119, %s120
    %p134 = scmp.eq.s32.totalorder %s16, 7
    %p135 = por %p133, %p134
    %p137 = scmp.ne.s32.totalorder %s120, %s136
    %p138 = scmp.eq.s32.totalorder %s16, 0
    %p139 = por %p137, %p138
    %p140 = scmp.le.s32.totalorder 1, %s10
    %p141 = scmp.lt.s32.totalorder %s10, 9
    %p142 = pnand %p140, %p141
    %p143 = pneg %p142
    // Predicated region
    $region9: #{a_call__.15} parent=5 // pred_check
      _
    $region10: #{a_call__.15} parent=5 // pred_check_branch
      %145 = sbr.rel (%p142) target = $region12
    $region11: #{a_call__.15} parent=5 // pred_region
      %s146 = ssub.s32 %s10, 1
    $region12: #{a_call__.15} parent=5 // pred_fallthru
      _
    %p147 = scmp.lt.s32.totalorder %s10, 8
    // Predicated region
    $region13: #{a_call__.15} parent=5 // pred_check
      %p148 = pneg %p147
    $region14: #{a_call__.15} parent=5 // pred_check_branch
      %150 = sbr.rel (%p148) target = $region16
    $region15: #{a_call__.15} parent=5 // pred_region
      // Predicated region
      $region17: #{a_call__.15} parent=15 // pred_check
        %p151 = pneg %p44
      $region18: #{a_call__.15} parent=15 // pred_check_branch
        %153 = sbr.rel (%p151) target = $region20
      $region19: #{a_call__.15} parent=15 // pred_region
        %s154 = smul.u32 32, %s18
        %p155 = scmp.lt.s32.totalorder %s17, 3
        %s156 = scalar_select %p155, %s17, 3
        %p157 = scmp.lt.s32.totalorder %s154, 63
        %s158 = scalar_select %p157, %s154, 63
        %s159 = smul.addr %s156, 64
        %s160 = sadd.s32 %s158, %s159
        %s161 = smul.addr %s160, 4
        %s162 = scalar_lea.vmem %s0, %s161
        %s163 = smul.u32 32, %s18
      $region20: #{a_call__.15} parent=15 // pred_fallthru
        _
      // Predicated region
      $region21: #{a_call__.15} parent=15 // pred_check
        %p164 = pneg %p70
      $region22: #{a_call__.15} parent=15 // pred_check_branch
        %166 = sbr.rel (%p164) target = $region24
      $region23: #{a_call__.15} parent=15 // pred_region
        %p167 = scmp.lt.s32.totalorder %s17, 3
        %s168 = scalar_select %p167, %s17, 3
        %s169 = smul.addr %s168, 8
        %s170 = smul.addr %s169, 4
        %s171 = scalar_lea.vmem %s1, %s170
      $region24: #{a_call__.15} parent=15 // pred_fallthru
        _
    $region16: #{a_call__.15} parent=5 // pred_fallthru
      _
    %p172 = scmp.le.s32.totalorder 1, %s10
    %p173 = scmp.lt.s32.totalorder %s10, 9
    %p174 = pnand %p172, %p173
    %p175 = pneg %p174
    // Predicated region
    $region25: #{a_call__.15} parent=5 // pred_check
      _
    $region26: #{a_call__.15} parent=5 // pred_check_branch
      %177 = sbr.rel (%p174) target = $region28
    $region27: #{a_call__.15} parent=5 // pred_region
      %s178 = ssub.s32 %s10, 1
      %s179 = smul.u32 32, %s20
      %p180 = scmp.lt.s32.totalorder %s19, 3
      %s181 = scalar_select %p180, %s19, 3
      %p182 = scmp.lt.s32.totalorder %s179, 63
      %s183 = scalar_select %p182, %s179, 63
      %s184 = smul.addr %s181, 64
      %s185 = sadd.s32 %s183, %s184
      %s186 = smul.addr %s185, 4
      %s187 = scalar_lea.vmem %s0, %s186
      %p188 = pneg %p50
      %p189 = pneg %p47
      %p190 = scmp.lt.s32.totalorder %s19, 3
      %s191 = scalar_select %p190, %s19, 3
      %s192 = smul.addr %s191, 8
      %s193 = smul.addr %s192, 4
      %s194 = scalar_lea.vmem %s1, %s193
      %p195 = pneg %p76
      %p196 = pneg %p73
      %p197 = pneg %p104
      %p198 = pneg %p101
      %s199 = smul.u32 32, %s20
      %p200 = scmp.lt.s32.totalorder %s19, 3
      %s201 = scalar_select %p200, %s19, 3
      %p202 = scmp.lt.s32.totalorder %s199, 63
      %s203 = scalar_select %p202, %s199, 63
      %s204 = smul.addr %s201, 64
      %s205 = sadd.s32 %s203, %s204
      %s206 = smul.addr %s205, 4
      %s207 = scalar_lea.vmem %s2, %s206
      %p208 = pneg %p132
      %p209 = pneg %p129
      %p210 = scmp.lt.s32.totalorder %s19, 3
      %s211 = scalar_select %p210, %s19, 3
      %p212 = scmp.lt.s32.totalorder %s20, 1
      %s213 = scalar_select %p212, %s20, 1
      %s214 = smul.addr %s211, 2
      %s215 = sadd.s32 %s213, %s214
      %s216 = smul.addr %s215, 2
      %s217 = scalar_lea.vmem %s3, %s216
      %s218 = smul.u32 32, %s20
      %p219 = scmp.lt.s32.totalorder %s19, 3
      %s220 = scalar_select %p219, %s19, 3
      %p221 = scmp.lt.s32.totalorder %s218, 63
      %s222 = scalar_select %p221, %s218, 63
      %s223 = smul.addr %s220, 64
      %s224 = sadd.s32 %s222, %s223
      %s225 = smul.addr %s224, 4
      %s226 = scalar_lea.vmem %s0, %s225
      %s227 = smul.u32 32, %s20
      %p228 = scmp.lt.s32.totalorder %s19, 3
      %s229 = scalar_select %p228, %s19, 3
      %s230 = smul.addr %s229, 8
      %s231 = smul.addr %s230, 4
      %s232 = scalar_lea.vmem %s1, %s231
      %s233 = smul.u32 32, %s20
      %p234 = scmp.lt.s32.totalorder %s19, 3
      %s235 = scalar_select %p234, %s19, 3
      %p236 = scmp.lt.s32.totalorder %s233, 63
      %s237 = scalar_select %p236, %s233, 63
      %s238 = smul.addr %s235, 64
      %s239 = sadd.s32 %s237, %s238
      %s240 = smul.addr %s239, 4
      %s241 = scalar_lea.vmem %s2, %s240
      %s242 = smul.u32 32, %s20
      %p243 = scmp.lt.s32.totalorder %s19, 3
      %s244 = scalar_select %p243, %s19, 3
      %p245 = scmp.lt.s32.totalorder %s20, 1
      %s246 = scalar_select %p245, %s20, 1
      %s247 = smul.addr %s244, 2
      %s248 = sadd.s32 %s246, %s247
      %s249 = smul.addr %s248, 2
      %s250 = scalar_lea.vmem %s3, %s249
      %v252 = vld [vmem:[%s226] sm:$0xf]
      %v253 = vld [vmem:[%s226 + $0x4] sm:$0xf]
      %v254 = vld [vmem:[%s226 + $0x8] sm:$0xf]
      %v255 = vld [vmem:[%s226 + $0xc] sm:$0xf]
      %v256 = vld [vmem:[%s226 + $0x10] sm:$0xf]
      %v257 = vld [vmem:[%s226 + $0x14] sm:$0xf]
      %v258 = vld [vmem:[%s226 + $0x18] sm:$0xf]
      %v259 = vld [vmem:[%s226 + $0x1c] sm:$0xf]
      %v260 = vld [vmem:[%s226 + $0x20] sm:$0xf]
      %v261 = vld [vmem:[%s226 + $0x24] sm:$0xf]
      %v262 = vld [vmem:[%s226 + $0x28] sm:$0xf]
      %v263 = vld [vmem:[%s226 + $0x2c] sm:$0xf]
      %v264 = vld [vmem:[%s226 + $0x30] sm:$0xf]
      %v265 = vld [vmem:[%s226 + $0x34] sm:$0xf]
      %v266 = vld [vmem:[%s226 + $0x38] sm:$0xf]
      %v267 = vld [vmem:[%s226 + $0x3c] sm:$0xf]
      %v268 = vld [vmem:[%s226 + $0x40] sm:$0xf]
      %v269 = vld [vmem:[%s226 + $0x44] sm:$0xf]
      %v270 = vld [vmem:[%s226 + $0x48] sm:$0xf]
      %v271 = vld [vmem:[%s226 + $0x4c] sm:$0xf]
      %v272 = vld [vmem:[%s226 + $0x50] sm:$0xf]
      %v273 = vld [vmem:[%s226 + $0x54] sm:$0xf]
      %v274 = vld [vmem:[%s226 + $0x58] sm:$0xf]
      %v275 = vld [vmem:[%s226 + $0x5c] sm:$0xf]
      %v276 = vld [vmem:[%s226 + $0x60] sm:$0xf]
      %v277 = vld [vmem:[%s226 + $0x64] sm:$0xf]
      %v278 = vld [vmem:[%s226 + $0x68] sm:$0xf]
      %v279 = vld [vmem:[%s226 + $0x6c] sm:$0xf]
      %v280 = vld [vmem:[%s226 + $0x70] sm:$0xf]
      %v281 = vld [vmem:[%s226 + $0x74] sm:$0xf]
      %v282 = vld [vmem:[%s226 + $0x78] sm:$0xf]
      %v283 = vld [vmem:[%s226 + $0x7c] sm:$0xf]
      %v284 = vld [vmem:[%s232] sm:$0xf]
      %v285 = vld [vmem:[%s232 + $0x4] sm:$0xf]
      %v286 = vld [vmem:[%s232 + $0x8] sm:$0xf]
      %v287 = vld [vmem:[%s232 + $0xc] sm:$0xf]
      %v288 = vld [vmem:[%s232 + $0x10] sm:$0xf]
      %v289 = vld [vmem:[%s232 + $0x14] sm:$0xf]
      %v290 = vld [vmem:[%s232 + $0x18] sm:$0xf]
      %v291 = vld [vmem:[%s232 + $0x1c] sm:$0xf]
      %v324 = vunpack.c.l.b16 %v252
      %v325 = vunpack.c.l.b16 %v253
      %v326 = vunpack.c.l.b16 %v254
      %v327 = vunpack.c.l.b16 %v255
      %v328 = vunpack.c.l.b16 %v256
      %v329 = vunpack.c.l.b16 %v257
      %v330 = vunpack.c.l.b16 %v258
      %v331 = vunpack.c.l.b16 %v259
      %v332 = vunpack.c.l.b16 %v260
      %v333 = vunpack.c.l.b16 %v261
      %v334 = vunpack.c.l.b16 %v262
      %v335 = vunpack.c.l.b16 %v263
      %v336 = vunpack.c.l.b16 %v264
      %v337 = vunpack.c.l.b16 %v265
      %v338 = vunpack.c.l.b16 %v266
      %v339 = vunpack.c.l.b16 %v267
      %v340 = vunpack.c.l.b16 %v268
      %v341 = vunpack.c.l.b16 %v269
      %v342 = vunpack.c.l.b16 %v270
      %v343 = vunpack.c.l.b16 %v271
      %v344 = vunpack.c.l.b16 %v272
      %v345 = vunpack.c.l.b16 %v273
      %v346 = vunpack.c.l.b16 %v274
      %v347 = vunpack.c.l.b16 %v275
      %v348 = vunpack.c.l.b16 %v276
      %v349 = vunpack.c.l.b16 %v277
      %v350 = vunpack.c.l.b16 %v278
      %v351 = vunpack.c.l.b16 %v279
      %v352 = vunpack.c.l.b16 %v280
      %v353 = vunpack.c.l.b16 %v281
      %v354 = vunpack.c.l.b16 %v282
      %v355 = vunpack.c.l.b16 %v283
      %v356 = vpack.c.b16 %v325, %v324
      %v357 = vpack.c.b16 %v327, %v326
      %v358 = vpack.c.b16 %v329, %v328
      %v359 = vpack.c.b16 %v331, %v330
      %v360 = vpack.c.b16 %v333, %v332
      %v361 = vpack.c.b16 %v335, %v334
      %v362 = vpack.c.b16 %v337, %v336
      %v363 = vpack.c.b16 %v339, %v338
      %v364 = vpack.c.b16 %v341, %v340
      %v365 = vpack.c.b16 %v343, %v342
      %v366 = vpack.c.b16 %v345, %v344
      %v367 = vpack.c.b16 %v347, %v346
      %v368 = vpack.c.b16 %v349, %v348
      %v369 = vpack.c.b16 %v351, %v350
      %v370 = vpack.c.b16 %v353, %v352
      %v371 = vpack.c.b16 %v355, %v354
      %v380 = vunpack.c.l.b16 %v284
      %v381 = vunpack.c.l.b16 %v285
      %v382 = vunpack.c.l.b16 %v286
      %v383 = vunpack.c.l.b16 %v287
      %v384 = vunpack.c.l.b16 %v288
      %v385 = vunpack.c.l.b16 %v289
      %v386 = vunpack.c.l.b16 %v290
      %v387 = vunpack.c.l.b16 %v291
      %v388 = vpack.c.b16 %v381, %v380
      %v389 = vpack.c.b16 %v383, %v382
      %v390 = vpack.c.b16 %v385, %v384
      %v391 = vpack.c.b16 %v387, %v386
      %vm396 = vcmask 523264
      %v398 = vsel %vm396, %v356, 0
      %v401 = vsel %vm396, %v357, 0
      %v404 = vsel %vm396, %v358, 0
      %v407 = vsel %vm396, %v359, 0
      %v410 = vsel %vm396, %v360, 0
      %v413 = vsel %vm396, %v361, 0
      %v416 = vsel %vm396, %v362, 0
      %v419 = vsel %vm396, %v363, 0
      %v422 = vsel %vm396, %v364, 0
      %v425 = vsel %vm396, %v365, 0
      %v428 = vsel %vm396, %v366, 0
      %v431 = vsel %vm396, %v367, 0
      %v434 = vsel %vm396, %v368, 0
      %v437 = vsel %vm396, %v369, 0
      %v440 = vsel %vm396, %v370, 0
      %v443 = vsel %vm396, %v371, 0
      %445 = vmatpush.bf16.msra.mxu0 0
      %446 = vmatpush.bf16.msra.mxu0 0
      %447 = vmatpush.bf16.msra.mxu0 0
      %448 = vmatpush.bf16.msra.mxu0 0
      %449 = vmatpush.bf16.msra.mxu0 %v391
      %450 = vmatpush.bf16.msra.mxu0 %v390
      %451 = vmatpush.bf16.msra.mxu0 %v389
      %452 = vmatpush.bf16.msra.mxu0 %v388
      %453 = vmatmul.bf16.gmra.mxu0 %v398
      %v454 = vpop.f32.mrf.mxu0
      %v455 = vadd.f32 0.0, %v454
      %v456 = vpop.f32.mrf.mxu0
      %v457 = vadd.f32 0.0, %v456
      %458 = vmatmul.bf16.gmra.mxu0 %v401
      %v459 = vpop.f32.mrf.mxu0
      %v460 = vadd.f32 0.0, %v459
      %v461 = vpop.f32.mrf.mxu0
      %v462 = vadd.f32 0.0, %v461
      %463 = vmatmul.bf16.gmra.mxu0 %v404
      %v464 = vpop.f32.mrf.mxu0
      %v465 = vadd.f32 0.0, %v464
      %v466 = vpop.f32.mrf.mxu0
      %v467 = vadd.f32 0.0, %v466
      %468 = vmatmul.bf16.gmra.mxu0 %v407
      %v469 = vpop.f32.mrf.mxu0
      %v470 = vadd.f32 0.0, %v469
      %v471 = vpop.f32.mrf.mxu0
      %v472 = vadd.f32 0.0, %v471
      %473 = vmatmul.bf16.gmra.mxu0 %v410
      %v474 = vpop.f32.mrf.mxu0
      %v475 = vadd.f32 0.0, %v474
      %v476 = vpop.f32.mrf.mxu0
      %v477 = vadd.f32 0.0, %v476
      %478 = vmatmul.bf16.gmra.mxu0 %v413
      %v479 = vpop.f32.mrf.mxu0
      %v480 = vadd.f32 0.0, %v479
      %v481 = vpop.f32.mrf.mxu0
      %v482 = vadd.f32 0.0, %v481
      %483 = vmatmul.bf16.gmra.mxu0 %v416
      %v484 = vpop.f32.mrf.mxu0
      %v485 = vadd.f32 0.0, %v484
      %v486 = vpop.f32.mrf.mxu0
      %v487 = vadd.f32 0.0, %v486
      %488 = vmatmul.bf16.gmra.mxu0 %v419
      %v489 = vpop.f32.mrf.mxu0
      %v490 = vadd.f32 0.0, %v489
      %v491 = vpop.f32.mrf.mxu0
      %v492 = vadd.f32 0.0, %v491
      %493 = vmatmul.bf16.gmra.mxu0 %v422
      %v494 = vpop.f32.mrf.mxu0
      %v495 = vadd.f32 0.0, %v494
      %v496 = vpop.f32.mrf.mxu0
      %v497 = vadd.f32 0.0, %v496
      %498 = vmatmul.bf16.gmra.mxu0 %v425
      %v499 = vpop.f32.mrf.mxu0
      %v500 = vadd.f32 0.0, %v499
      %v501 = vpop.f32.mrf.mxu0
      %v502 = vadd.f32 0.0, %v501
      %503 = vmatmul.bf16.gmra.mxu0 %v428
      %v504 = vpop.f32.mrf.mxu0
      %v505 = vadd.f32 0.0, %v504
      %v506 = vpop.f32.mrf.mxu0
      %v507 = vadd.f32 0.0, %v506
      %508 = vmatmul.bf16.gmra.mxu0 %v431
      %v509 = vpop.f32.mrf.mxu0
      %v510 = vadd.f32 0.0, %v509
      %v511 = vpop.f32.mrf.mxu0
      %v512 = vadd.f32 0.0, %v511
      %513 = vmatmul.bf16.gmra.mxu0 %v434
      %v514 = vpop.f32.mrf.mxu0
      %v515 = vadd.f32 0.0, %v514
      %v516 = vpop.f32.mrf.mxu0
      %v517 = vadd.f32 0.0, %v516
      %518 = vmatmul.bf16.gmra.mxu0 %v437
      %v519 = vpop.f32.mrf.mxu0
      %v520 = vadd.f32 0.0, %v519
      %v521 = vpop.f32.mrf.mxu0
      %v522 = vadd.f32 0.0, %v521
      %523 = vmatmul.bf16.gmra.mxu0 %v440
      %v524 = vpop.f32.mrf.mxu0
      %v525 = vadd.f32 0.0, %v524
      %v526 = vpop.f32.mrf.mxu0
      %v527 = vadd.f32 0.0, %v526
      %528 = vmatmul.bf16.gmra.mxu0 %v443
      %v529 = vpop.f32.mrf.mxu0
      %v530 = vadd.f32 0.0, %v529
      %v531 = vpop.f32.mrf.mxu0
      %v532 = vadd.f32 0.0, %v531
      %533 = vdwg.mxu0
      %v534 = vpack.c.bf16 %v455, %v455
      %v535 = vpack.c.bf16 %v457, %v457
      %v536 = vpack.c.bf16 %v460, %v460
      %v537 = vpack.c.bf16 %v462, %v462
      %v538 = vpack.c.bf16 %v465, %v465
      %v539 = vpack.c.bf16 %v467, %v467
      %v540 = vpack.c.bf16 %v470, %v470
      %v541 = vpack.c.bf16 %v472, %v472
      %v542 = vpack.c.bf16 %v475, %v475
      %v543 = vpack.c.bf16 %v477, %v477
      %v544 = vpack.c.bf16 %v480, %v480
      %v545 = vpack.c.bf16 %v482, %v482
      %v546 = vpack.c.bf16 %v485, %v485
      %v547 = vpack.c.bf16 %v487, %v487
      %v548 = vpack.c.bf16 %v490, %v490
      %v549 = vpack.c.bf16 %v492, %v492
      %v550 = vpack.c.bf16 %v495, %v495
      %v551 = vpack.c.bf16 %v497, %v497
      %v552 = vpack.c.bf16 %v500, %v500
      %v553 = vpack.c.bf16 %v502, %v502
      %v554 = vpack.c.bf16 %v505, %v505
      %v555 = vpack.c.bf16 %v507, %v507
      %v556 = vpack.c.bf16 %v510, %v510
      %v557 = vpack.c.bf16 %v512, %v512
      %v558 = vpack.c.bf16 %v515, %v515
      %v559 = vpack.c.bf16 %v517, %v517
      %v560 = vpack.c.bf16 %v520, %v520
      %v561 = vpack.c.bf16 %v522, %v522
      %v562 = vpack.c.bf16 %v525, %v525
      %v563 = vpack.c.bf16 %v527, %v527
      %v564 = vpack.c.bf16 %v530, %v530
      %v565 = vpack.c.bf16 %v532, %v532
      %566 = vst [vmem:[%s241] sm:$0xf] %v534
      %567 = vst [vmem:[%s241 + $0x4] sm:$0xf] %v535
      %568 = vst [vmem:[%s241 + $0x8] sm:$0xf] %v536
      %569 = vst [vmem:[%s241 + $0xc] sm:$0xf] %v537
      %570 = vst [vmem:[%s241 + $0x10] sm:$0xf] %v538
      %571 = vst [vmem:[%s241 + $0x14] sm:$0xf] %v539
      %572 = vst [vmem:[%s241 + $0x18] sm:$0xf] %v540
      %573 = vst [vmem:[%s241 + $0x1c] sm:$0xf] %v541
      %574 = vst [vmem:[%s241 + $0x20] sm:$0xf] %v542
      %575 = vst [vmem:[%s241 + $0x24] sm:$0xf] %v543
      %576 = vst [vmem:[%s241 + $0x28] sm:$0xf] %v544
      %577 = vst [vmem:[%s241 + $0x2c] sm:$0xf] %v545
      %578 = vst [vmem:[%s241 + $0x30] sm:$0xf] %v546
      %579 = vst [vmem:[%s241 + $0x34] sm:$0xf] %v547
      %580 = vst [vmem:[%s241 + $0x38] sm:$0xf] %v548
      %581 = vst [vmem:[%s241 + $0x3c] sm:$0xf] %v549
      %582 = vst [vmem:[%s241 + $0x40] sm:$0xf] %v550
      %583 = vst [vmem:[%s241 + $0x44] sm:$0xf] %v551
      %584 = vst [vmem:[%s241 + $0x48] sm:$0xf] %v552
      %585 = vst [vmem:[%s241 + $0x4c] sm:$0xf] %v553
      %586 = vst [vmem:[%s241 + $0x50] sm:$0xf] %v554
      %587 = vst [vmem:[%s241 + $0x54] sm:$0xf] %v555
      %588 = vst [vmem:[%s241 + $0x58] sm:$0xf] %v556
      %589 = vst [vmem:[%s241 + $0x5c] sm:$0xf] %v557
      %590 = vst [vmem:[%s241 + $0x60] sm:$0xf] %v558
      %591 = vst [vmem:[%s241 + $0x64] sm:$0xf] %v559
      %592 = vst [vmem:[%s241 + $0x68] sm:$0xf] %v560
      %593 = vst [vmem:[%s241 + $0x6c] sm:$0xf] %v561
      %594 = vst [vmem:[%s241 + $0x70] sm:$0xf] %v562
      %595 = vst [vmem:[%s241 + $0x74] sm:$0xf] %v563
      %596 = vst [vmem:[%s241 + $0x78] sm:$0xf] %v564
      %597 = vst [vmem:[%s241 + $0x7c] sm:$0xf] %v565
      %v598 = vadd.f32 %v455, %v457
      %v599 = vadd.f32 %v598, %v460
      %v600 = vadd.f32 %v599, %v462
      %v601 = vadd.f32 %v600, %v465
      %v602 = vadd.f32 %v601, %v467
      %v603 = vadd.f32 %v602, %v470
      %v604 = vadd.f32 %v603, %v472
      %v605 = vadd.f32 %v604, %v475
      %v606 = vadd.f32 %v605, %v477
      %v607 = vadd.f32 %v606, %v480
      %v608 = vadd.f32 %v607, %v482
      %v609 = vadd.f32 %v608, %v485
      %v610 = vadd.f32 %v609, %v487
      %v611 = vadd.f32 %v610, %v490
      %v612 = vadd.f32 %v611, %v492
      %v613 = vadd.f32 %v612, %v495
      %v614 = vadd.f32 %v613, %v497
      %v615 = vadd.f32 %v614, %v500
      %v616 = vadd.f32 %v615, %v502
      %v617 = vadd.f32 %v616, %v505
      %v618 = vadd.f32 %v617, %v507
      %v619 = vadd.f32 %v618, %v510
      %v620 = vadd.f32 %v619, %v512
      %v621 = vadd.f32 %v620, %v515
      %v622 = vadd.f32 %v621, %v517
      %v623 = vadd.f32 %v622, %v520
      %v624 = vadd.f32 %v623, %v522
      %v625 = vadd.f32 %v624, %v525
      %v626 = vadd.f32 %v625, %v527
      %v627 = vadd.f32 %v626, %v530
      %v628 = vadd.f32 %v627, %v532
      %v629 = vrot.slane %v628, 4
      %v630 = vadd.f32 %v628, %v629
      %v631 = vrot.slane %v630, 2
      %v632 = vadd.f32 %v630, %v631
      %v633 = vrot.slane %v632, 1
      %v634 = vadd.f32 %v632, %v633
      %635 = vst [vmem:[%s250] sm:$0x1] %v634
      %v636 = vmul.f32 %v455, %v455
      %v637 = vmul.f32 %v457, %v457
      %v638 = vmul.f32 %v460, %v460
      %v639 = vmul.f32 %v462, %v462
      %v640 = vmul.f32 %v465, %v465
      %v641 = vmul.f32 %v467, %v467
      %v642 = vmul.f32 %v470, %v470
      %v643 = vmul.f32 %v472, %v472
      %v644 = vmul.f32 %v475, %v475
      %v645 = vmul.f32 %v477, %v477
      %v646 = vmul.f32 %v480, %v480
      %v647 = vmul.f32 %v482, %v482
      %v648 = vmul.f32 %v485, %v485
      %v649 = vmul.f32 %v487, %v487
      %v650 = vmul.f32 %v490, %v490
      %v651 = vmul.f32 %v492, %v492
      %v652 = vmul.f32 %v495, %v495
      %v653 = vmul.f32 %v497, %v497
      %v654 = vmul.f32 %v500, %v500
      %v655 = vmul.f32 %v502, %v502
      %v656 = vmul.f32 %v505, %v505
      %v657 = vmul.f32 %v507, %v507
      %v658 = vmul.f32 %v510, %v510
      %v659 = vmul.f32 %v512, %v512
      %v660 = vmul.f32 %v515, %v515
      %v661 = vmul.f32 %v517, %v517
      %v662 = vmul.f32 %v520, %v520
      %v663 = vmul.f32 %v522, %v522
      %v664 = vmul.f32 %v525, %v525
      %v665 = vmul.f32 %v527, %v527
      %v666 = vmul.f32 %v530, %v530
      %v667 = vmul.f32 %v532, %v532
      %v668 = vadd.f32 %v636, %v637
      %v669 = vadd.f32 %v668, %v638
      %v670 = vadd.f32 %v669, %v639
      %v671 = vadd.f32 %v670, %v640
      %v672 = vadd.f32 %v671, %v641
      %v673 = vadd.f32 %v672, %v642
      %v674 = vadd.f32 %v673, %v643
      %v675 = vadd.f32 %v674, %v644
      %v676 = vadd.f32 %v675, %v645
      %v677 = vadd.f32 %v676, %v646
      %v678 = vadd.f32 %v677, %v647
      %v679 = vadd.f32 %v678, %v648
      %v680 = vadd.f32 %v679, %v649
      %v681 = vadd.f32 %v680, %v650
      %v682 = vadd.f32 %v681, %v651
      %v683 = vadd.f32 %v682, %v652
      %v684 = vadd.f32 %v683, %v653
      %v685 = vadd.f32 %v684, %v654
      %v686 = vadd.f32 %v685, %v655
      %v687 = vadd.f32 %v686, %v656
      %v688 = vadd.f32 %v687, %v657
      %v689 = vadd.f32 %v688, %v658
      %v690 = vadd.f32 %v689, %v659
      %v691 = vadd.f32 %v690, %v660
      %v692 = vadd.f32 %v691, %v661
      %v693 = vadd.f32 %v692, %v662
      %v694 = vadd.f32 %v693, %v663
      %v695 = vadd.f32 %v694, %v664
      %v696 = vadd.f32 %v695, %v665
      %v697 = vadd.f32 %v696, %v666
      %v698 = vadd.f32 %v697, %v667
      %v699 = vrot.slane %v698, 4
      %v700 = vadd.f32 %v698, %v699
      %v701 = vrot.slane %v700, 2
      %v702 = vadd.f32 %v700, %v701
      %v703 = vrot.slane %v702, 1
      %v704 = vadd.f32 %v702, %v703
      %705 = vst [vmem:[%s250 + $0x1] sm:$0x1] %v704
      %s706 = smul.u32 32, %s20
      %p707 = scmp.lt.s32.totalorder %s19, 3
      %s708 = scalar_select %p707, %s19, 3
      %p709 = scmp.lt.s32.totalorder %s706, 63
      %s710 = scalar_select %p709, %s706, 63
      %s711 = smul.addr %s708, 64
      %s712 = sadd.s32 %s710, %s711
      %s713 = smul.addr %s712, 4
      %s714 = scalar_lea.vmem %s2, %s713
      %p715 = scmp.lt.s32.totalorder %s19, 3
      %s716 = scalar_select %p715, %s19, 3
      %p717 = scmp.lt.s32.totalorder %s20, 1
      %s718 = scalar_select %p717, %s20, 1
      %s719 = smul.addr %s716, 2
      %s720 = sadd.s32 %s718, %s719
      %s721 = smul.addr %s720, 2
      %s722 = scalar_lea.vmem %s3, %s721
      // Predicated region
      $region29: #{a_call__.15} parent=27 // pred_check
        %p723 = pneg %p101
      $region30: #{a_call__.15} parent=27 // pred_check_branch
        %725 = sbr.rel (%p723) target = $region32
      $region31: #{a_call__.15} parent=27 // pred_region
        %s726 = smul.u32 32, %s20
      $region32: #{a_call__.15} parent=27 // pred_fallthru
        _
      // Predicated region
      $region33: #{a_call__.15} parent=27 // pred_check
        %p727 = pneg %p129
      $region34: #{a_call__.15} parent=27 // pred_check_branch
        %729 = sbr.rel (%p727) target = $region36
      $region35: #{a_call__.15} parent=27 // pred_region
        _
      $region36: #{a_call__.15} parent=27 // pred_fallthru
        _
    $region28: #{a_call__.15} parent=5 // pred_fallthru
      _
    %p730 = scmp.le.s32.totalorder 2, %s10
    // Predicated region
    $region37: #{a_call__.15} parent=5 // pred_check
      %p731 = pneg %p730
    $region38: #{a_call__.15} parent=5 // pred_check_branch
      %733 = sbr.rel (%p731) target = $region40
    $region39: #{a_call__.15} parent=5 // pred_region
      %s734 = ssub.s32 %s10, 2
      // Predicated region
      $region41: #{a_call__.15} parent=39 // pred_check
        %p735 = pneg %p107
      $region42: #{a_call__.15} parent=39 // pred_check_branch
        %737 = sbr.rel (%p735) target = $region44
      $region43: #{a_call__.15} parent=39 // pred_region
        %s738 = smul.u32 32, %s22
        %p739 = scmp.lt.s32.totalorder %s21, 3
        %s740 = scalar_select %p739, %s21, 3
        %p741 = scmp.lt.s32.totalorder %s738, 63
        %s742 = scalar_select %p741, %s738, 63
        %s743 = smul.addr %s740, 64
        %s744 = sadd.s32 %s742, %s743
        %s745 = smul.addr %s744, 4
        %s746 = scalar_lea.vmem %s2, %s745
      $region44: #{a_call__.15} parent=39 // pred_fallthru
        _
      // Predicated region
      $region45: #{a_call__.15} parent=39 // pred_check
        %p747 = pneg %p135
      $region46: #{a_call__.15} parent=39 // pred_check_branch
        %749 = sbr.rel (%p747) target = $region48
      $region47: #{a_call__.15} parent=39 // pred_region
        %p750 = scmp.lt.s32.totalorder %s21, 3
        %s751 = scalar_select %p750, %s21, 3
        %p752 = scmp.lt.s32.totalorder %s22, 1
        %s753 = scalar_select %p752, %s22, 1
        %s754 = smul.addr %s751, 2
        %s755 = sadd.s32 %s753, %s754
        %s756 = smul.addr %s755, 2
        %s757 = scalar_lea.vmem %s3, %s756
      $region48: #{a_call__.15} parent=39 // pred_fallthru
        _
    $region40: #{a_call__.15} parent=5 // pred_fallthru
      _
  $region6: #{a_call__.15} parent=0 // loop_footer
    %s14 = sadd.s32 1, %s10
  $region7: #{a_call__.15} parent=0 // loop_footer_branch
    %9 = sbr.rel target = $region3
  $region8: #{a_call__.15} parent=0 // loop_exit
    _

// kernel: a_call__.16
$region0: #{a_call__.16}
  #allocation0 [shape = 'u32[]', space=smem, size = 0x4, offset = 0x4, fixed_abs, tag = 'smem constant byte address 0x4 - core index']
  #allocation1 [shape = 'u32[72,128]{1,0:T(1,128)}', space=vmem, size = 0x9000, scoped, tag = 'internal scratch']
  %s0 = inlined_call_operand.vmem [shape: bf16[4,512,128], index: 0, kind: input, shape index: {}]
  %s1 = inlined_call_operand.vmem [shape: f32[1,128], index: 1, kind: input, shape index: {}]
  %s2 = inlined_call_operand.vmem [shape: f32[1,128], index: 2, kind: input, shape index: {}]
  %s3 = inlined_call_operand.vmem [shape: bf16[4,512,128], index: 3, kind: output, shape index: {}]
  %s4 = sld [smem:[#allocation0]]
  $region45: #{a_call__.16} parent=0
    _
  %s6 = ssub.s32 1, %s4
  %s7 = scalar_select 0, %s6, %s4
  loop: start=0, step=1, limit=10
  $region2: #{a_call__.16} parent=0 // loop_pre_header
    _
  $region3: #{a_call__.16} parent=0 // loop_header
    %s9 = sphi 0, %s13
    %p10 = scmp.ge.s32.totalorder %s9, 10
    %s16 = sphi 0, %s28
    %s17 = sphi 0, %s24
    %s18 = sphi 0, %s16
    %s19 = sphi 0, %s17
    %s20 = sphi 0, %s18
    %s21 = sphi 0, %s19
    %s33 = sphi 0, %s35
    %s36 = sphi 0, %s33
    %s37 = sphi 0, %s36
    %s53 = sphi 0, %s37
    %s57 = sphi 0, %s57
    %s59 = sphi 0, %s57
    %s60 = sphi 0, %s59
    %s74 = sphi 0, %s60
    %s78 = sphi 0, %s78
    %s80 = sphi 0, %s78
    %s81 = sphi 0, %s80
    %s95 = sphi 0, %s81
    %s103 = sphi 0, %s105
    %s106 = sphi 0, %s103
    %s107 = sphi 0, %s106
    %s123 = sphi 0, %s107
  $region4: #{a_call__.16} parent=0 // loop_header_branch
    %12 = sbr.rel (%p10) target = $region8
  $region5: #{a_call__.16} parent=0 // loop_body
    %s14 = ssub.s32 %s9, 1
    %s15 = ssub.s32 %s9, 2
    %s22 = sadd.s32 1, %s17
    %p23 = scmp.ge.s32.totalorder %s22, 2
    %s24 = scalar_select %p23, 0, %s22
    %s25 = sadd.s32 1, %s16
    %s26 = scalar_select %p23, %s25, %s16
    %p27 = scmp.ge.s32.totalorder %s26, 4
    %s28 = scalar_select %p27, 0, %s26
    %s29 = ssub.s32 %s16, %s28
    %s30 = ssub.s32 %s17, %s24
    %s31 = sor.u32 %s29, %s30
    %p32 = scmp.eq.s32.totalorder %s31, 0
    %s34 = sadd.s32 %s33, 1
    %s35 = scalar_select %p32, %s33, %s34
    %p38 = pneg %p32
    %p39 = scmp.eq.s32.totalorder %s9, 7
    %p40 = por %p38, %p39
    %p41 = scmp.ne.s32.totalorder %s33, %s36
    %p42 = scmp.eq.s32.totalorder %s9, 0
    %p43 = por %p41, %p42
    %p44 = scmp.ne.s32.totalorder %s33, %s36
    %p45 = scmp.eq.s32.totalorder %s14, 7
    %p46 = por %p44, %p45
    %p47 = scmp.ne.s32.totalorder %s36, %s37
    %p48 = scmp.eq.s32.totalorder %s14, 0
    %p49 = por %p47, %p48
    %p50 = scmp.ne.s32.totalorder %s36, %s37
    %p51 = scmp.eq.s32.totalorder %s15, 7
    %p52 = por %p50, %p51
    %p54 = scmp.ne.s32.totalorder %s37, %s53
    %p55 = scmp.eq.s32.totalorder %s15, 0
    %p56 = por %p54, %p55
    %s58 = sadd.s32 %s57, 1
    %p61 = scmp.eq.s32.totalorder %s9, 7
    %p62 = scmp.ne.s32.totalorder %s57, %s59
    %p63 = scmp.eq.s32.totalorder %s9, 0
    %p64 = por %p62, %p63
    %p65 = scmp.ne.s32.totalorder %s57, %s59
    %p66 = scmp.eq.s32.totalorder %s14, 7
    %p67 = por %p65, %p66
    %p68 = scmp.ne.s32.totalorder %s59, %s60
    %p69 = scmp.eq.s32.totalorder %s14, 0
    %p70 = por %p68, %p69
    %p71 = scmp.ne.s32.totalorder %s59, %s60
    %p72 = scmp.eq.s32.totalorder %s15, 7
    %p73 = por %p71, %p72
    %p75 = scmp.ne.s32.totalorder %s60, %s74
    %p76 = scmp.eq.s32.totalorder %s15, 0
    %p77 = por %p75, %p76
    %s79 = sadd.s32 %s78, 1
    %p82 = scmp.eq.s32.totalorder %s9, 7
    %p83 = scmp.ne.s32.totalorder %s78, %s80
    %p84 = scmp.eq.s32.totalorder %s9, 0
    %p85 = por %p83, %p84
    %p86 = scmp.ne.s32.totalorder %s78, %s80
    %p87 = scmp.eq.s32.totalorder %s14, 7
    %p88 = por %p86, %p87
    %p89 = scmp.ne.s32.totalorder %s80, %s81
    %p90 = scmp.eq.s32.totalorder %s14, 0
    %p91 = por %p89, %p90
    %p92 = scmp.ne.s32.totalorder %s80, %s81
    %p93 = scmp.eq.s32.totalorder %s15, 7
    %p94 = por %p92, %p93
    %p96 = scmp.ne.s32.totalorder %s81, %s95
    %p97 = scmp.eq.s32.totalorder %s15, 0
    %p98 = por %p96, %p97
    %s99 = ssub.s32 %s16, %s28
    %s100 = ssub.s32 %s17, %s24
    %s101 = sor.u32 %s99, %s100
    %p102 = scmp.eq.s32.totalorder %s101, 0
    %s104 = sadd.s32 %s103, 1
    %s105 = scalar_select %p102, %s103, %s104
    %p108 = pneg %p102
    %p109 = scmp.eq.s32.totalorder %s9, 7
    %p110 = por %p108, %p109
    %p111 = scmp.ne.s32.totalorder %s103, %s106
    %p112 = scmp.eq.s32.totalorder %s9, 0
    %p113 = por %p111, %p112
    %p114 = scmp.ne.s32.totalorder %s103, %s106
    %p115 = scmp.eq.s32.totalorder %s14, 7
    %p116 = por %p114, %p115
    %p117 = scmp.ne.s32.totalorder %s106, %s107
    %p118 = scmp.eq.s32.totalorder %s14, 0
    %p119 = por %p117, %p118
    %p120 = scmp.ne.s32.totalorder %s106, %s107
    %p121 = scmp.eq.s32.totalorder %s15, 7
    %p122 = por %p120, %p121
    %p124 = scmp.ne.s32.totalorder %s107, %s123
    %p125 = scmp.eq.s32.totalorder %s15, 0
    %p126 = por %p124, %p125
    %p127 = scmp.le.s32.totalorder 1, %s9
    %p128 = scmp.lt.s32.totalorder %s9, 9
    %p129 = pnand %p127, %p128
    %p130 = pneg %p129
    // Predicated region
    $region9: #{a_call__.16} parent=5 // pred_check
      _
    $region10: #{a_call__.16} parent=5 // pred_check_branch
      %132 = sbr.rel (%p129) target = $region12
    $region11: #{a_call__.16} parent=5 // pred_region
      %s133 = ssub.s32 %s9, 1
      // Predicated region
      $region13: #{a_call__.16} parent=11 // pred_check
        %p134 = pneg %p70
      $region14: #{a_call__.16} parent=11 // pred_check_branch
        %136 = sbr.rel (%p134) target = $region16
      $region15: #{a_call__.16} parent=11 // pred_region
        _
      $region16: #{a_call__.16} parent=11 // pred_fallthru
        _
      // Predicated region
      $region17: #{a_call__.16} parent=11 // pred_check
        %p137 = pneg %p91
      $region18: #{a_call__.16} parent=11 // pred_check_branch
        %139 = sbr.rel (%p137) target = $region20
      $region19: #{a_call__.16} parent=11 // pred_region
        _
      $region20: #{a_call__.16} parent=11 // pred_fallthru
        _
    $region12: #{a_call__.16} parent=5 // pred_fallthru
      _
    %p140 = scmp.lt.s32.totalorder %s9, 8
    // Predicated region
    $region21: #{a_call__.16} parent=5 // pred_check
      %p141 = pneg %p140
    $region22: #{a_call__.16} parent=5 // pred_check_branch
      %143 = sbr.rel (%p141) target = $region24
    $region23: #{a_call__.16} parent=5 // pred_region
      // Predicated region
      $region25: #{a_call__.16} parent=23 // pred_check
        %p144 = pneg %p43
      $region26: #{a_call__.16} parent=23 // pred_check_branch
        %146 = sbr.rel (%p144) target = $region28
      $region27: #{a_call__.16} parent=23 // pred_region
        %s147 = smul.u32 32, %s17
        %p148 = scmp.lt.s32.totalorder %s16, 3
        %s149 = scalar_select %p148, %s16, 3
        %p150 = scmp.lt.s32.totalorder %s147, 63
        %s151 = scalar_select %p150, %s147, 63
        %s152 = smul.addr %s149, 64
        %s153 = sadd.s32 %s151, %s152
        %s154 = smul.addr %s153, 4
        %s155 = scalar_lea.vmem %s0, %s154
        %s156 = smul.u32 32, %s17
      $region28: #{a_call__.16} parent=23 // pred_fallthru
        _
    $region24: #{a_call__.16} parent=5 // pred_fallthru
      _
    %p157 = scmp.le.s32.totalorder 1, %s9
    %p158 = scmp.lt.s32.totalorder %s9, 9
    %p159 = pnand %p157, %p158
    %p160 = pneg %p159
    // Predicated region
    $region29: #{a_call__.16} parent=5 // pred_check
      _
    $region30: #{a_call__.16} parent=5 // pred_check_branch
      %162 = sbr.rel (%p159) target = $region32
    $region31: #{a_call__.16} parent=5 // pred_region
      %s163 = ssub.s32 %s9, 1
      %s164 = smul.u32 32, %s19
      %p165 = scmp.lt.s32.totalorder %s18, 3
      %s166 = scalar_select %p165, %s18, 3
      %p167 = scmp.lt.s32.totalorder %s164, 63
      %s168 = scalar_select %p167, %s164, 63
      %s169 = smul.addr %s166, 64
      %s170 = sadd.s32 %s168, %s169
      %s171 = smul.addr %s170, 4
      %s172 = scalar_lea.vmem %s0, %s171
      %p173 = pneg %p49
      %p174 = pneg %p46
      %p175 = pneg %p70
      %p176 = pneg %p67
      %p177 = pneg %p91
      %p178 = pneg %p88
      %p179 = pneg %p119
      %p180 = pneg %p116
      %s181 = smul.u32 32, %s19
      %p182 = scmp.lt.s32.totalorder %s18, 3
      %s183 = scalar_select %p182, %s18, 3
      %p184 = scmp.lt.s32.totalorder %s181, 63
      %s185 = scalar_select %p184, %s181, 63
      %s186 = smul.addr %s183, 64
      %s187 = sadd.s32 %s185, %s186
      %s188 = smul.addr %s187, 4
      %s189 = scalar_lea.vmem %s3, %s188
      %s190 = smul.u32 32, %s19
      %p191 = scmp.lt.s32.totalorder %s18, 3
      %s192 = scalar_select %p191, %s18, 3
      %p193 = scmp.lt.s32.totalorder %s190, 63
      %s194 = scalar_select %p193, %s190, 63
      %s195 = smul.addr %s192, 64
      %s196 = sadd.s32 %s194, %s195
      %s197 = smul.addr %s196, 4
      %s198 = scalar_lea.vmem %s0, %s197
      %s199 = smul.u32 32, %s19
      %s200 = smul.u32 32, %s19
      %p201 = scmp.lt.s32.totalorder %s18, 3
      %s202 = scalar_select %p201, %s18, 3
      %p203 = scmp.lt.s32.totalorder %s200, 63
      %s204 = scalar_select %p203, %s200, 63
      %s205 = smul.addr %s202, 64
      %s206 = sadd.s32 %s204, %s205
      %s207 = smul.addr %s206, 4
      %s208 = scalar_lea.vmem %s3, %s207
      %s209 = smul.u32 32, %s19
      %v210 = vld [vmem:[%s198] sm:$0xf]
      %v211 = vld [vmem:[%s198 + $0x4] sm:$0xf]
      %v212 = vld [vmem:[%s198 + $0x8] sm:$0xf]
      %v213 = vld [vmem:[%s198 + $0xc] sm:$0xf]
      %v214 = vld [vmem:[%s198 + $0x10] sm:$0xf]
      %v215 = vld [vmem:[%s198 + $0x14] sm:$0xf]
      %v216 = vld [vmem:[%s198 + $0x18] sm:$0xf]
      %v217 = vld [vmem:[%s198 + $0x1c] sm:$0xf]
      %v218 = vld [vmem:[%s198 + $0x20] sm:$0xf]
      %v219 = vld [vmem:[%s198 + $0x24] sm:$0xf]
      %v220 = vld [vmem:[%s198 + $0x28] sm:$0xf]
      %v221 = vld [vmem:[%s198 + $0x2c] sm:$0xf]
      %v222 = vld [vmem:[%s198 + $0x30] sm:$0xf]
      %v223 = vld [vmem:[%s198 + $0x34] sm:$0xf]
      %v224 = vld [vmem:[%s198 + $0x38] sm:$0xf]
      %v225 = vld [vmem:[%s198 + $0x3c] sm:$0xf]
      %v226 = vld [vmem:[%s198 + $0x40] sm:$0xf]
      %v227 = vld [vmem:[%s198 + $0x44] sm:$0xf]
      %v228 = vld [vmem:[%s198 + $0x48] sm:$0xf]
      %v229 = vld [vmem:[%s198 + $0x4c] sm:$0xf]
      %v230 = vld [vmem:[%s198 + $0x50] sm:$0xf]
      %v231 = vld [vmem:[%s198 + $0x54] sm:$0xf]
      %v232 = vld [vmem:[%s198 + $0x58] sm:$0xf]
      %v233 = vld [vmem:[%s198 + $0x5c] sm:$0xf]
      %v234 = vld [vmem:[%s198 + $0x60] sm:$0xf]
      %v235 = vld [vmem:[%s198 + $0x64] sm:$0xf]
      %v236 = vld [vmem:[%s198 + $0x68] sm:$0xf]
      %v237 = vld [vmem:[%s198 + $0x6c] sm:$0xf]
      %v238 = vld [vmem:[%s198 + $0x70] sm:$0xf]
      %v239 = vld [vmem:[%s198 + $0x74] sm:$0xf]
      %v240 = vld [vmem:[%s198 + $0x78] sm:$0xf]
      %v241 = vld [vmem:[%s198 + $0x7c] sm:$0xf]
      %v242 = vunpack.c.l.bf16 %v210
      %v243 = vunpack.c.l.bf16 %v211
      %v244 = vunpack.c.l.bf16 %v212
      %v245 = vunpack.c.l.bf16 %v213
      %v246 = vunpack.c.l.bf16 %v214
      %v247 = vunpack.c.l.bf16 %v215
      %v248 = vunpack.c.l.bf16 %v216
      %v249 = vunpack.c.l.bf16 %v217
      %v250 = vunpack.c.l.bf16 %v218
      %v251 = vunpack.c.l.bf16 %v219
      %v252 = vunpack.c.l.bf16 %v220
      %v253 = vunpack.c.l.bf16 %v221
      %v254 = vunpack.c.l.bf16 %v222
      %v255 = vunpack.c.l.bf16 %v223
      %v256 = vunpack.c.l.bf16 %v224
      %v257 = vunpack.c.l.bf16 %v225
      %v258 = vunpack.c.l.bf16 %v226
      %v259 = vunpack.c.l.bf16 %v227
      %v260 = vunpack.c.l.bf16 %v228
      %v261 = vunpack.c.l.bf16 %v229
      %v262 = vunpack.c.l.bf16 %v230
      %v263 = vunpack.c.l.bf16 %v231
      %v264 = vunpack.c.l.bf16 %v232
      %v265 = vunpack.c.l.bf16 %v233
      %v266 = vunpack.c.l.bf16 %v234
      %v267 = vunpack.c.l.bf16 %v235
      %v268 = vunpack.c.l.bf16 %v236
      %v269 = vunpack.c.l.bf16 %v237
      %v270 = vunpack.c.l.bf16 %v238
      %v271 = vunpack.c.l.bf16 %v239
      %v272 = vunpack.c.l.bf16 %v240
      %v273 = vunpack.c.l.bf16 %v241
      %v274 = vld [vmem:[%s1] sm:$0x1]
      %v276 = vperm.slane %v274, 0
      %v278 = vmul.f32 %v242, %v276
      %v279 = vmul.f32 %v243, %v276
      %v280 = vmul.f32 %v244, %v276
      %v281 = vmul.f32 %v245, %v276
      %v282 = vmul.f32 %v246, %v276
      %v283 = vmul.f32 %v247, %v276
      %v284 = vmul.f32 %v248, %v276
      %v285 = vmul.f32 %v249, %v276
      %v286 = vmul.f32 %v250, %v276
      %v287 = vmul.f32 %v251, %v276
      %v288 = vmul.f32 %v252, %v276
      %v289 = vmul.f32 %v253, %v276
      %v290 = vmul.f32 %v254, %v276
      %v291 = vmul.f32 %v255, %v276
      %v292 = vmul.f32 %v256, %v276
      %v293 = vmul.f32 %v257, %v276
      %v294 = vmul.f32 %v258, %v276
      %v295 = vmul.f32 %v259, %v276
      %v296 = vmul.f32 %v260, %v276
      %v297 = vmul.f32 %v261, %v276
      %v298 = vmul.f32 %v262, %v276
      %v299 = vmul.f32 %v263, %v276
      %v300 = vmul.f32 %v264, %v276
      %v301 = vmul.f32 %v265, %v276
      %v302 = vmul.f32 %v266, %v276
      %v303 = vmul.f32 %v267, %v276
      %v304 = vmul.f32 %v268, %v276
      %v305 = vmul.f32 %v269, %v276
      %v306 = vmul.f32 %v270, %v276
      %v307 = vmul.f32 %v271, %v276
      %v308 = vmul.f32 %v272, %v276
      %v309 = vmul.f32 %v273, %v276
      %v310 = vld [vmem:[%s2] sm:$0x1]
      %v312 = vperm.slane %v310, 0
      %v314 = vadd.f32 %v278, %v312
      %v315 = vadd.f32 %v279, %v312
      %v316 = vadd.f32 %v280, %v312
      %v317 = vadd.f32 %v281, %v312
      %v318 = vadd.f32 %v282, %v312
      %v319 = vadd.f32 %v283, %v312
      %v320 = vadd.f32 %v284, %v312
      %v321 = vadd.f32 %v285, %v312
      %v322 = vadd.f32 %v286, %v312
      %v323 = vadd.f32 %v287, %v312
      %v324 = vadd.f32 %v288, %v312
      %v325 = vadd.f32 %v289, %v312
      %v326 = vadd.f32 %v290, %v312
      %v327 = vadd.f32 %v291, %v312
      %v328 = vadd.f32 %v292, %v312
      %v329 = vadd.f32 %v293, %v312
      %v330 = vadd.f32 %v294, %v312
      %v331 = vadd.f32 %v295, %v312
      %v332 = vadd.f32 %v296, %v312
      %v333 = vadd.f32 %v297, %v312
      %v334 = vadd.f32 %v298, %v312
      %v335 = vadd.f32 %v299, %v312
      %v336 = vadd.f32 %v300, %v312
      %v337 = vadd.f32 %v301, %v312
      %v338 = vadd.f32 %v302, %v312
      %v339 = vadd.f32 %v303, %v312
      %v340 = vadd.f32 %v304, %v312
      %v341 = vadd.f32 %v305, %v312
      %v342 = vadd.f32 %v306, %v312
      %v343 = vadd.f32 %v307, %v312
      %v344 = vadd.f32 %v308, %v312
      %v345 = vadd.f32 %v309, %v312
      %v346 = vmax.f32 %v314, 0.0
      %v347 = vmax.f32 %v315, 0.0
      %v348 = vmax.f32 %v316, 0.0
      %v349 = vmax.f32 %v317, 0.0
      %v350 = vmax.f32 %v318, 0.0
      %v351 = vmax.f32 %v319, 0.0
      %v352 = vmax.f32 %v320, 0.0
      %v353 = vmax.f32 %v321, 0.0
      %v354 = vmax.f32 %v322, 0.0
      %v355 = vmax.f32 %v323, 0.0
      %v356 = vmax.f32 %v324, 0.0
      %v357 = vmax.f32 %v325, 0.0
      %v358 = vmax.f32 %v326, 0.0
      %v359 = vmax.f32 %v327, 0.0
      %v360 = vmax.f32 %v328, 0.0
      %v361 = vmax.f32 %v329, 0.0
      %v362 = vmax.f32 %v330, 0.0
      %v363 = vmax.f32 %v331, 0.0
      %v364 = vmax.f32 %v332, 0.0
      %v365 = vmax.f32 %v333, 0.0
      %v366 = vmax.f32 %v334, 0.0
      %v367 = vmax.f32 %v335, 0.0
      %v368 = vmax.f32 %v336, 0.0
      %v369 = vmax.f32 %v337, 0.0
      %v370 = vmax.f32 %v338, 0.0
      %v371 = vmax.f32 %v339, 0.0
      %v372 = vmax.f32 %v340, 0.0
      %v373 = vmax.f32 %v341, 0.0
      %v374 = vmax.f32 %v342, 0.0
      %v375 = vmax.f32 %v343, 0.0
      %v376 = vmax.f32 %v344, 0.0
      %v377 = vmax.f32 %v345, 0.0
      %v378 = vpack.c.bf16 %v346, %v346
      %v379 = vpack.c.bf16 %v347, %v347
      %v380 = vpack.c.bf16 %v348, %v348
      %v381 = vpack.c.bf16 %v349, %v349
      %v382 = vpack.c.bf16 %v350, %v350
      %v383 = vpack.c.bf16 %v351, %v351
      %v384 = vpack.c.bf16 %v352, %v352
      %v385 = vpack.c.bf16 %v353, %v353
      %v386 = vpack.c.bf16 %v354, %v354
      %v387 = vpack.c.bf16 %v355, %v355
      %v388 = vpack.c.bf16 %v356, %v356
      %v389 = vpack.c.bf16 %v357, %v357
      %v390 = vpack.c.bf16 %v358, %v358
      %v391 = vpack.c.bf16 %v359, %v359
      %v392 = vpack.c.bf16 %v360, %v360
      %v393 = vpack.c.bf16 %v361, %v361
      %v394 = vpack.c.bf16 %v362, %v362
      %v395 = vpack.c.bf16 %v363, %v363
      %v396 = vpack.c.bf16 %v364, %v364
      %v397 = vpack.c.bf16 %v365, %v365
      %v398 = vpack.c.bf16 %v366, %v366
      %v399 = vpack.c.bf16 %v367, %v367
      %v400 = vpack.c.bf16 %v368, %v368
      %v401 = vpack.c.bf16 %v369, %v369
      %v402 = vpack.c.bf16 %v370, %v370
      %v403 = vpack.c.bf16 %v371, %v371
      %v404 = vpack.c.bf16 %v372, %v372
      %v405 = vpack.c.bf16 %v373, %v373
      %v406 = vpack.c.bf16 %v374, %v374
      %v407 = vpack.c.bf16 %v375, %v375
      %v408 = vpack.c.bf16 %v376, %v376
      %v409 = vpack.c.bf16 %v377, %v377
      %410 = vst [vmem:[%s208] sm:$0xf] %v378
      %411 = vst [vmem:[%s208 + $0x4] sm:$0xf] %v379
      %412 = vst [vmem:[%s208 + $0x8] sm:$0xf] %v380
      %413 = vst [vmem:[%s208 + $0xc] sm:$0xf] %v381
      %414 = vst [vmem:[%s208 + $0x10] sm:$0xf] %v382
      %415 = vst [vmem:[%s208 + $0x14] sm:$0xf] %v383
      %416 = vst [vmem:[%s208 + $0x18] sm:$0xf] %v384
      %417 = vst [vmem:[%s208 + $0x1c] sm:$0xf] %v385
      %418 = vst [vmem:[%s208 + $0x20] sm:$0xf] %v386
      %419 = vst [vmem:[%s208 + $0x24] sm:$0xf] %v387
      %420 = vst [vmem:[%s208 + $0x28] sm:$0xf] %v388
      %421 = vst [vmem:[%s208 + $0x2c] sm:$0xf] %v389
      %422 = vst [vmem:[%s208 + $0x30] sm:$0xf] %v390
      %423 = vst [vmem:[%s208 + $0x34] sm:$0xf] %v391
      %424 = vst [vmem:[%s208 + $0x38] sm:$0xf] %v392
      %425 = vst [vmem:[%s208 + $0x3c] sm:$0xf] %v393
      %426 = vst [vmem:[%s208 + $0x40] sm:$0xf] %v394
      %427 = vst [vmem:[%s208 + $0x44] sm:$0xf] %v395
      %428 = vst [vmem:[%s208 + $0x48] sm:$0xf] %v396
      %429 = vst [vmem:[%s208 + $0x4c] sm:$0xf] %v397
      %430 = vst [vmem:[%s208 + $0x50] sm:$0xf] %v398
      %431 = vst [vmem:[%s208 + $0x54] sm:$0xf] %v399
      %432 = vst [vmem:[%s208 + $0x58] sm:$0xf] %v400
      %433 = vst [vmem:[%s208 + $0x5c] sm:$0xf] %v401
      %434 = vst [vmem:[%s208 + $0x60] sm:$0xf] %v402
      %435 = vst [vmem:[%s208 + $0x64] sm:$0xf] %v403
      %436 = vst [vmem:[%s208 + $0x68] sm:$0xf] %v404
      %437 = vst [vmem:[%s208 + $0x6c] sm:$0xf] %v405
      %438 = vst [vmem:[%s208 + $0x70] sm:$0xf] %v406
      %439 = vst [vmem:[%s208 + $0x74] sm:$0xf] %v407
      %440 = vst [vmem:[%s208 + $0x78] sm:$0xf] %v408
      %441 = vst [vmem:[%s208 + $0x7c] sm:$0xf] %v409
      %s442 = smul.u32 32, %s19
      %p443 = scmp.lt.s32.totalorder %s18, 3
      %s444 = scalar_select %p443, %s18, 3
      %p445 = scmp.lt.s32.totalorder %s442, 63
      %s446 = scalar_select %p445, %s442, 63
      %s447 = smul.addr %s444, 64
      %s448 = sadd.s32 %s446, %s447
      %s449 = smul.addr %s448, 4
      %s450 = scalar_lea.vmem %s3, %s449
      // Predicated region
      $region33: #{a_call__.16} parent=31 // pred_check
        %p451 = pneg %p116
      $region34: #{a_call__.16} parent=31 // pred_check_branch
        %453 = sbr.rel (%p451) target = $region36
      $region35: #{a_call__.16} parent=31 // pred_region
        %s454 = smul.u32 32, %s19
      $region36: #{a_call__.16} parent=31 // pred_fallthru
        _
    $region32: #{a_call__.16} parent=5 // pred_fallthru
      _
    %p455 = scmp.le.s32.totalorder 2, %s9
    // Predicated region
    $region37: #{a_call__.16} parent=5 // pred_check
      %p456 = pneg %p455
    $region38: #{a_call__.16} parent=5 // pred_check_branch
      %458 = sbr.rel (%p456) target = $region40
    $region39: #{a_call__.16} parent=5 // pred_region
      %s459 = ssub.s32 %s9, 2
      // Predicated region
      $region41: #{a_call__.16} parent=39 // pred_check
        %p460 = pneg %p122
      $region42: #{a_call__.16} parent=39 // pred_check_branch
        %462 = sbr.rel (%p460) target = $region44
      $region43: #{a_call__.16} parent=39 // pred_region
        %s463 = smul.u32 32, %s21
        %p464 = scmp.lt.s32.totalorder %s20, 3
        %s465 = scalar_select %p464, %s20, 3
        %p466 = scmp.lt.s32.totalorder %s463, 63
        %s467 = scalar_select %p466, %s463, 63
        %s468 = smul.addr %s465, 64
        %s469 = sadd.s32 %s467, %s468
        %s470 = smul.addr %s469, 4
        %s471 = scalar_lea.vmem %s3, %s470
      $region44: #{a_call__.16} parent=39 // pred_fallthru
        _
    $region40: #{a_call__.16} parent=5 // pred_fallthru
      _
  $region6: #{a_call__.16} parent=0 // loop_footer
    %s13 = sadd.s32 1, %s9
  $region7: #{a_call__.16} parent=0 // loop_footer_branch
    %8 = sbr.rel target = $region3
  $region8: #{a_call__.16} parent=0 // loop_exit
    _

// kernel: a_call__.17
$region0: #{a_call__.17}
  #allocation0 [shape = 'u32[]', space=smem, size = 0x4, offset = 0x4, fixed_abs, tag = 'smem constant byte address 0x4 - core index']
  #allocation1 [shape = 'u32[72,128]{1,0:T(1,128)}', space=vmem, size = 0x9000, scoped, tag = 'internal scratch']
  %s0 = inlined_call_operand.vmem [shape: bf16[4,2048,32], index: 0, kind: input, shape index: {}]
  %s1 = inlined_call_operand.vmem [shape: bf16[4,32,128], index: 1, kind: input, shape index: {}]
  %s2 = inlined_call_operand.vmem [shape: bf16[4,2048,128], index: 2, kind: output, shape index: {}]
  %s3 = sld [smem:[#allocation0]]
  $region41: #{a_call__.17} parent=0
    _
  %s5 = ssub.s32 1, %s3
  %s6 = scalar_select 0, %s5, %s3
  loop: start=0, step=1, limit=10
  $region2: #{a_call__.17} parent=0 // loop_pre_header
    _
  $region3: #{a_call__.17} parent=0 // loop_header
    %s8 = sphi 0, %s12
    %p9 = scmp.ge.s32.totalorder %s8, 10
    %s15 = sphi 0, %s27
    %s16 = sphi 0, %s23
    %s17 = sphi 0, %s15
    %s18 = sphi 0, %s16
    %s19 = sphi 0, %s17
    %s20 = sphi 0, %s18
    %s32 = sphi 0, %s34
    %s35 = sphi 0, %s32
    %s36 = sphi 0, %s35
    %s52 = sphi 0, %s36
    %s58 = sphi 0, %s60
    %s61 = sphi 0, %s58
    %s62 = sphi 0, %s61
    %s78 = sphi 0, %s62
    %s86 = sphi 0, %s88
    %s89 = sphi 0, %s86
    %s90 = sphi 0, %s89
    %s106 = sphi 0, %s90
  $region4: #{a_call__.17} parent=0 // loop_header_branch
    %11 = sbr.rel (%p9) target = $region8
  $region5: #{a_call__.17} parent=0 // loop_body
    %s13 = ssub.s32 %s8, 1
    %s14 = ssub.s32 %s8, 2
    %s21 = sadd.s32 1, %s16
    %p22 = scmp.ge.s32.totalorder %s21, 2
    %s23 = scalar_select %p22, 0, %s21
    %s24 = sadd.s32 1, %s15
    %s25 = scalar_select %p22, %s24, %s15
    %p26 = scmp.ge.s32.totalorder %s25, 4
    %s27 = scalar_select %p26, 0, %s25
    %s28 = ssub.s32 %s15, %s27
    %s29 = ssub.s32 %s16, %s23
    %s30 = sor.u32 %s28, %s29
    %p31 = scmp.eq.s32.totalorder %s30, 0
    %s33 = sadd.s32 %s32, 1
    %s34 = scalar_select %p31, %s32, %s33
    %p37 = pneg %p31
    %p38 = scmp.eq.s32.totalorder %s8, 7
    %p39 = por %p37, %p38
    %p40 = scmp.ne.s32.totalorder %s32, %s35
    %p41 = scmp.eq.s32.totalorder %s8, 0
    %p42 = por %p40, %p41
    %p43 = scmp.ne.s32.totalorder %s32, %s35
    %p44 = scmp.eq.s32.totalorder %s13, 7
    %p45 = por %p43, %p44
    %p46 = scmp.ne.s32.totalorder %s35, %s36
    %p47 = scmp.eq.s32.totalorder %s13, 0
    %p48 = por %p46, %p47
    %p49 = scmp.ne.s32.totalorder %s35, %s36
    %p50 = scmp.eq.s32.totalorder %s14, 7
    %p51 = por %p49, %p50
    %p53 = scmp.ne.s32.totalorder %s36, %s52
    %p54 = scmp.eq.s32.totalorder %s14, 0
    %p55 = por %p53, %p54
    %s56 = ssub.s32 %s15, %s27
    %p57 = scmp.eq.s32.totalorder %s56, 0
    %s59 = sadd.s32 %s58, 1
    %s60 = scalar_select %p57, %s58, %s59
    %p63 = pneg %p57
    %p64 = scmp.eq.s32.totalorder %s8, 7
    %p65 = por %p63, %p64
    %p66 = scmp.ne.s32.totalorder %s58, %s61
    %p67 = scmp.eq.s32.totalorder %s8, 0
    %p68 = por %p66, %p67
    %p69 = scmp.ne.s32.totalorder %s58, %s61
    %p70 = scmp.eq.s32.totalorder %s13, 7
    %p71 = por %p69, %p70
    %p72 = scmp.ne.s32.totalorder %s61, %s62
    %p73 = scmp.eq.s32.totalorder %s13, 0
    %p74 = por %p72, %p73
    %p75 = scmp.ne.s32.totalorder %s61, %s62
    %p76 = scmp.eq.s32.totalorder %s14, 7
    %p77 = por %p75, %p76
    %p79 = scmp.ne.s32.totalorder %s62, %s78
    %p80 = scmp.eq.s32.totalorder %s14, 0
    %p81 = por %p79, %p80
    %s82 = ssub.s32 %s15, %s27
    %s83 = ssub.s32 %s16, %s23
    %s84 = sor.u32 %s82, %s83
    %p85 = scmp.eq.s32.totalorder %s84, 0
    %s87 = sadd.s32 %s86, 1
    %s88 = scalar_select %p85, %s86, %s87
    %p91 = pneg %p85
    %p92 = scmp.eq.s32.totalorder %s8, 7
    %p93 = por %p91, %p92
    %p94 = scmp.ne.s32.totalorder %s86, %s89
    %p95 = scmp.eq.s32.totalorder %s8, 0
    %p96 = por %p94, %p95
    %p97 = scmp.ne.s32.totalorder %s86, %s89
    %p98 = scmp.eq.s32.totalorder %s13, 7
    %p99 = por %p97, %p98
    %p100 = scmp.ne.s32.totalorder %s89, %s90
    %p101 = scmp.eq.s32.totalorder %s13, 0
    %p102 = por %p100, %p101
    %p103 = scmp.ne.s32.totalorder %s89, %s90
    %p104 = scmp.eq.s32.totalorder %s14, 7
    %p105 = por %p103, %p104
    %p107 = scmp.ne.s32.totalorder %s90, %s106
    %p108 = scmp.eq.s32.totalorder %s14, 0
    %p109 = por %p107, %p108
    %p110 = scmp.le.s32.totalorder 1, %s8
    %p111 = scmp.lt.s32.totalorder %s8, 9
    %p112 = pnand %p110, %p111
    %p113 = pneg %p112
    // Predicated region
    $region9: #{a_call__.17} parent=5 // pred_check
      _
    $region10: #{a_call__.17} parent=5 // pred_check_branch
      %115 = sbr.rel (%p112) target = $region12
    $region11: #{a_call__.17} parent=5 // pred_region
      %s116 = ssub.s32 %s8, 1
    $region12: #{a_call__.17} parent=5 // pred_fallthru
      _
    %p117 = scmp.lt.s32.totalorder %s8, 8
    // Predicated region
    $region13: #{a_call__.17} parent=5 // pred_check
      %p118 = pneg %p117
    $region14: #{a_call__.17} parent=5 // pred_check_branch
      %120 = sbr.rel (%p118) target = $region16
    $region15: #{a_call__.17} parent=5 // pred_region
      // Predicated region
      $region17: #{a_call__.17} parent=15 // pred_check
        %p121 = pneg %p42
      $region18: #{a_call__.17} parent=15 // pred_check_branch
        %123 = sbr.rel (%p121) target = $region20
      $region19: #{a_call__.17} parent=15 // pred_region
        %s124 = smul.u32 128, %s16
        %p125 = scmp.lt.s32.totalorder %s15, 3
        %s126 = scalar_select %p125, %s15, 3
        %p127 = scmp.lt.s32.totalorder %s124, 255
        %s128 = scalar_select %p127, %s124, 255
        %s129 = smul.addr %s126, 256
        %s130 = sadd.s32 %s128, %s129
        %s131 = smul.addr %s130, 4
        %s132 = scalar_lea.vmem %s0, %s131
        %s133 = smul.u32 128, %s16
      $region20: #{a_call__.17} parent=15 // pred_fallthru
        _
      // Predicated region
      $region21: #{a_call__.17} parent=15 // pred_check
        %p134 = pneg %p68
      $region22: #{a_call__.17} parent=15 // pred_check_branch
        %136 = sbr.rel (%p134) target = $region24
      $region23: #{a_call__.17} parent=15 // pred_region
        %p137 = scmp.lt.s32.totalorder %s15, 3
        %s138 = scalar_select %p137, %s15, 3
        %s139 = smul.addr %s138, 4
        %s140 = smul.addr %s139, 4
        %s141 = scalar_lea.vmem %s1, %s140
      $region24: #{a_call__.17} parent=15 // pred_fallthru
        _
    $region16: #{a_call__.17} parent=5 // pred_fallthru
      _
    %p142 = scmp.le.s32.totalorder 1, %s8
    %p143 = scmp.lt.s32.totalorder %s8, 9
    %p144 = pnand %p142, %p143
    %p145 = pneg %p144
    // Predicated region
    $region25: #{a_call__.17} parent=5 // pred_check
      _
    $region26: #{a_call__.17} parent=5 // pred_check_branch
      %147 = sbr.rel (%p144) target = $region28
    $region27: #{a_call__.17} parent=5 // pred_region
      %s148 = ssub.s32 %s8, 1
      %s149 = smul.u32 128, %s18
      %p150 = scmp.lt.s32.totalorder %s17, 3
      %s151 = scalar_select %p150, %s17, 3
      %p152 = scmp.lt.s32.totalorder %s149, 255
      %s153 = scalar_select %p152, %s149, 255
      %s154 = smul.addr %s151, 256
      %s155 = sadd.s32 %s153, %s154
      %s156 = smul.addr %s155, 4
      %s157 = scalar_lea.vmem %s0, %s156
      %p158 = pneg %p48
      %p159 = pneg %p45
      %p160 = scmp.lt.s32.totalorder %s17, 3
      %s161 = scalar_select %p160, %s17, 3
      %s162 = smul.addr %s161, 4
      %s163 = smul.addr %s162, 4
      %s164 = scalar_lea.vmem %s1, %s163
      %p165 = pneg %p74
      %p166 = pneg %p71
      %p167 = pneg %p102
      %p168 = pneg %p99
      %s169 = smul.u32 128, %s18
      %p170 = scmp.lt.s32.totalorder %s17, 3
      %s171 = scalar_select %p170, %s17, 3
      %p172 = scmp.lt.s32.totalorder %s169, 255
      %s173 = scalar_select %p172, %s169, 255
      %s174 = smul.addr %s171, 256
      %s175 = sadd.s32 %s173, %s174
      %s176 = smul.addr %s175, 4
      %s177 = scalar_lea.vmem %s2, %s176
      %s178 = smul.u32 128, %s18
      %p179 = scmp.lt.s32.totalorder %s17, 3
      %s180 = scalar_select %p179, %s17, 3
      %p181 = scmp.lt.s32.totalorder %s178, 255
      %s182 = scalar_select %p181, %s178, 255
      %s183 = smul.addr %s180, 256
      %s184 = sadd.s32 %s182, %s183
      %s185 = smul.addr %s184, 4
      %s186 = scalar_lea.vmem %s0, %s185
      %s187 = smul.u32 128, %s18
      %p188 = scmp.lt.s32.totalorder %s17, 3
      %s189 = scalar_select %p188, %s17, 3
      %s190 = smul.addr %s189, 4
      %s191 = smul.addr %s190, 4
      %s192 = scalar_lea.vmem %s1, %s191
      %s193 = smul.u32 128, %s18
      %p194 = scmp.lt.s32.totalorder %s17, 3
      %s195 = scalar_select %p194, %s17, 3
      %p196 = scmp.lt.s32.totalorder %s193, 255
      %s197 = scalar_select %p196, %s193, 255
      %s198 = smul.addr %s195, 256
      %s199 = sadd.s32 %s197, %s198
      %s200 = smul.addr %s199, 4
      %s201 = scalar_lea.vmem %s2, %s200
      %s202 = smul.u32 128, %s18
      %v204 = vld [vmem:[%s186] sm:$0xf]
      %v205 = vld [vmem:[%s186 + $0x4] sm:$0xf]
      %v206 = vld [vmem:[%s186 + $0x8] sm:$0xf]
      %v207 = vld [vmem:[%s186 + $0xc] sm:$0xf]
      %v208 = vld [vmem:[%s186 + $0x10] sm:$0xf]
      %v209 = vld [vmem:[%s186 + $0x14] sm:$0xf]
      %v210 = vld [vmem:[%s186 + $0x18] sm:$0xf]
      %v211 = vld [vmem:[%s186 + $0x1c] sm:$0xf]
      %v212 = vld [vmem:[%s186 + $0x20] sm:$0xf]
      %v213 = vld [vmem:[%s186 + $0x24] sm:$0xf]
      %v214 = vld [vmem:[%s186 + $0x28] sm:$0xf]
      %v215 = vld [vmem:[%s186 + $0x2c] sm:$0xf]
      %v216 = vld [vmem:[%s186 + $0x30] sm:$0xf]
      %v217 = vld [vmem:[%s186 + $0x34] sm:$0xf]
      %v218 = vld [vmem:[%s186 + $0x38] sm:$0xf]
      %v219 = vld [vmem:[%s186 + $0x3c] sm:$0xf]
      %v220 = vld [vmem:[%s186 + $0x40] sm:$0xf]
      %v221 = vld [vmem:[%s186 + $0x44] sm:$0xf]
      %v222 = vld [vmem:[%s186 + $0x48] sm:$0xf]
      %v223 = vld [vmem:[%s186 + $0x4c] sm:$0xf]
      %v224 = vld [vmem:[%s186 + $0x50] sm:$0xf]
      %v225 = vld [vmem:[%s186 + $0x54] sm:$0xf]
      %v226 = vld [vmem:[%s186 + $0x58] sm:$0xf]
      %v227 = vld [vmem:[%s186 + $0x5c] sm:$0xf]
      %v228 = vld [vmem:[%s186 + $0x60] sm:$0xf]
      %v229 = vld [vmem:[%s186 + $0x64] sm:$0xf]
      %v230 = vld [vmem:[%s186 + $0x68] sm:$0xf]
      %v231 = vld [vmem:[%s186 + $0x6c] sm:$0xf]
      %v232 = vld [vmem:[%s186 + $0x70] sm:$0xf]
      %v233 = vld [vmem:[%s186 + $0x74] sm:$0xf]
      %v234 = vld [vmem:[%s186 + $0x78] sm:$0xf]
      %v235 = vld [vmem:[%s186 + $0x7c] sm:$0xf]
      %v236 = vld [vmem:[%s186 + $0x80] sm:$0xf]
      %v237 = vld [vmem:[%s186 + $0x84] sm:$0xf]
      %v238 = vld [vmem:[%s186 + $0x88] sm:$0xf]
      %v239 = vld [vmem:[%s186 + $0x8c] sm:$0xf]
      %v240 = vld [vmem:[%s186 + $0x90] sm:$0xf]
      %v241 = vld [vmem:[%s186 + $0x94] sm:$0xf]
      %v242 = vld [vmem:[%s186 + $0x98] sm:$0xf]
      %v243 = vld [vmem:[%s186 + $0x9c] sm:$0xf]
      %v244 = vld [vmem:[%s186 + $0xa0] sm:$0xf]
      %v245 = vld [vmem:[%s186 + $0xa4] sm:$0xf]
      %v246 = vld [vmem:[%s186 + $0xa8] sm:$0xf]
      %v247 = vld [vmem:[%s186 + $0xac] sm:$0xf]
      %v248 = vld [vmem:[%s186 + $0xb0] sm:$0xf]
      %v249 = vld [vmem:[%s186 + $0xb4] sm:$0xf]
      %v250 = vld [vmem:[%s186 + $0xb8] sm:$0xf]
      %v251 = vld [vmem:[%s186 + $0xbc] sm:$0xf]
      %v252 = vld [vmem:[%s186 + $0xc0] sm:$0xf]
      %v253 = vld [vmem:[%s186 + $0xc4] sm:$0xf]
      %v254 = vld [vmem:[%s186 + $0xc8] sm:$0xf]
      %v255 = vld [vmem:[%s186 + $0xcc] sm:$0xf]
      %v256 = vld [vmem:[%s186 + $0xd0] sm:$0xf]
      %v257 = vld [vmem:[%s186 + $0xd4] sm:$0xf]
      %v258 = vld [vmem:[%s186 + $0xd8] sm:$0xf]
      %v259 = vld [vmem:[%s186 + $0xdc] sm:$0xf]
      %v260 = vld [vmem:[%s186 + $0xe0] sm:$0xf]
      %v261 = vld [vmem:[%s186 + $0xe4] sm:$0xf]
      %v262 = vld [vmem:[%s186 + $0xe8] sm:$0xf]
      %v263 = vld [vmem:[%s186 + $0xec] sm:$0xf]
      %v264 = vld [vmem:[%s186 + $0xf0] sm:$0xf]
      %v265 = vld [vmem:[%s186 + $0xf4] sm:$0xf]
      %v266 = vld [vmem:[%s186 + $0xf8] sm:$0xf]
      %v267 = vld [vmem:[%s186 + $0xfc] sm:$0xf]
      %v268 = vld [vmem:[%s186 + $0x100] sm:$0xf]
      %v269 = vld [vmem:[%s186 + $0x104] sm:$0xf]
      %v270 = vld [vmem:[%s186 + $0x108] sm:$0xf]
      %v271 = vld [vmem:[%s186 + $0x10c] sm:$0xf]
      %v272 = vld [vmem:[%s186 + $0x110] sm:$0xf]
      %v273 = vld [vmem:[%s186 + $0x114] sm:$0xf]
      %v274 = vld [vmem:[%s186 + $0x118] sm:$0xf]
      %v275 = vld [vmem:[%s186 + $0x11c] sm:$0xf]
      %v276 = vld [vmem:[%s186 + $0x120] sm:$0xf]
      %v277 = vld [vmem:[%s186 + $0x124] sm:$0xf]
      %v278 = vld [vmem:[%s186 + $0x128] sm:$0xf]
      %v279 = vld [vmem:[%s186 + $0x12c] sm:$0xf]
      %v280 = vld [vmem:[%s186 + $0x130] sm:$0xf]
      %v281 = vld [vmem:[%s186 + $0x134] sm:$0xf]
      %v282 = vld [vmem:[%s186 + $0x138] sm:$0xf]
      %v283 = vld [vmem:[%s186 + $0x13c] sm:$0xf]
      %v284 = vld [vmem:[%s186 + $0x140] sm:$0xf]
      %v285 = vld [vmem:[%s186 + $0x144] sm:$0xf]
      %v286 = vld [vmem:[%s186 + $0x148] sm:$0xf]
      %v287 = vld [vmem:[%s186 + $0x14c] sm:$0xf]
      %v288 = vld [vmem:[%s186 + $0x150] sm:$0xf]
      %v289 = vld [vmem:[%s186 + $0x154] sm:$0xf]
      %v290 = vld [vmem:[%s186 + $0x158] sm:$0xf]
      %v291 = vld [vmem:[%s186 + $0x15c] sm:$0xf]
      %v292 = vld [vmem:[%s186 + $0x160] sm:$0xf]
      %v293 = vld [vmem:[%s186 + $0x164] sm:$0xf]
      %v294 = vld [vmem:[%s186 + $0x168] sm:$0xf]
      %v295 = vld [vmem:[%s186 + $0x16c] sm:$0xf]
      %v296 = vld [vmem:[%s186 + $0x170] sm:$0xf]
      %v297 = vld [vmem:[%s186 + $0x174] sm:$0xf]
      %v298 = vld [vmem:[%s186 + $0x178] sm:$0xf]
      %v299 = vld [vmem:[%s186 + $0x17c] sm:$0xf]
      %v300 = vld [vmem:[%s186 + $0x180] sm:$0xf]
      %v301 = vld [vmem:[%s186 + $0x184] sm:$0xf]
      %v302 = vld [vmem:[%s186 + $0x188] sm:$0xf]
      %v303 = vld [vmem:[%s186 + $0x18c] sm:$0xf]
      %v304 = vld [vmem:[%s186 + $0x190] sm:$0xf]
      %v305 = vld [vmem:[%s186 + $0x194] sm:$0xf]
      %v306 = vld [vmem:[%s186 + $0x198] sm:$0xf]
      %v307 = vld [vmem:[%s186 + $0x19c] sm:$0xf]
      %v308 = vld [vmem:[%s186 + $0x1a0] sm:$0xf]
      %v309 = vld [vmem:[%s186 + $0x1a4] sm:$0xf]
      %v310 = vld [vmem:[%s186 + $0x1a8] sm:$0xf]
      %v311 = vld [vmem:[%s186 + $0x1ac] sm:$0xf]
      %v312 = vld [vmem:[%s186 + $0x1b0] sm:$0xf]
      %v313 = vld [vmem:[%s186 + $0x1b4] sm:$0xf]
      %v314 = vld [vmem:[%s186 + $0x1b8] sm:$0xf]
      %v315 = vld [vmem:[%s186 + $0x1bc] sm:$0xf]
      %v316 = vld [vmem:[%s186 + $0x1c0] sm:$0xf]
      %v317 = vld [vmem:[%s186 + $0x1c4] sm:$0xf]
      %v318 = vld [vmem:[%s186 + $0x1c8] sm:$0xf]
      %v319 = vld [vmem:[%s186 + $0x1cc] sm:$0xf]
      %v320 = vld [vmem:[%s186 + $0x1d0] sm:$0xf]
      %v321 = vld [vmem:[%s186 + $0x1d4] sm:$0xf]
      %v322 = vld [vmem:[%s186 + $0x1d8] sm:$0xf]
      %v323 = vld [vmem:[%s186 + $0x1dc] sm:$0xf]
      %v324 = vld [vmem:[%s186 + $0x1e0] sm:$0xf]
      %v325 = vld [vmem:[%s186 + $0x1e4] sm:$0xf]
      %v326 = vld [vmem:[%s186 + $0x1e8] sm:$0xf]
      %v327 = vld [vmem:[%s186 + $0x1ec] sm:$0xf]
      %v328 = vld [vmem:[%s186 + $0x1f0] sm:$0xf]
      %v329 = vld [vmem:[%s186 + $0x1f4] sm:$0xf]
      %v330 = vld [vmem:[%s186 + $0x1f8] sm:$0xf]
      %v331 = vld [vmem:[%s186 + $0x1fc] sm:$0xf]
      %v332 = vld [vmem:[%s192] sm:$0xf]
      %v333 = vld [vmem:[%s192 + $0x4] sm:$0xf]
      %v334 = vld [vmem:[%s192 + $0x8] sm:$0xf]
      %v335 = vld [vmem:[%s192 + $0xc] sm:$0xf]
      %v464 = vunpack.c.l.b16 %v204
      %v465 = vunpack.c.l.b16 %v205
      %v466 = vunpack.c.l.b16 %v206
      %v467 = vunpack.c.l.b16 %v207
      %v468 = vunpack.c.l.b16 %v208
      %v469 = vunpack.c.l.b16 %v209
      %v470 = vunpack.c.l.b16 %v210
      %v471 = vunpack.c.l.b16 %v211
      %v472 = vunpack.c.l.b16 %v212
      %v473 = vunpack.c.l.b16 %v213
      %v474 = vunpack.c.l.b16 %v214
      %v475 = vunpack.c.l.b16 %v215
      %v476 = vunpack.c.l.b16 %v216
      %v477 = vunpack.c.l.b16 %v217
      %v478 = vunpack.c.l.b16 %v218
      %v479 = vunpack.c.l.b16 %v219
      %v480 = vunpack.c.l.b16 %v220
      %v481 = vunpack.c.l.b16 %v221
      %v482 = vunpack.c.l.b16 %v222
      %v483 = vunpack.c.l.b16 %v223
      %v484 = vunpack.c.l.b16 %v224
      %v485 = vunpack.c.l.b16 %v225
      %v486 = vunpack.c.l.b16 %v226
      %v487 = vunpack.c.l.b16 %v227
      %v488 = vunpack.c.l.b16 %v228
      %v489 = vunpack.c.l.b16 %v229
      %v490 = vunpack.c.l.b16 %v230
      %v491 = vunpack.c.l.b16 %v231
      %v492 = vunpack.c.l.b16 %v232
      %v493 = vunpack.c.l.b16 %v233
      %v494 = vunpack.c.l.b16 %v234
      %v495 = vunpack.c.l.b16 %v235
      %v496 = vunpack.c.l.b16 %v236
      %v497 = vunpack.c.l.b16 %v237
      %v498 = vunpack.c.l.b16 %v238
      %v499 = vunpack.c.l.b16 %v239
      %v500 = vunpack.c.l.b16 %v240
      %v501 = vunpack.c.l.b16 %v241
      %v502 = vunpack.c.l.b16 %v242
      %v503 = vunpack.c.l.b16 %v243
      %v504 = vunpack.c.l.b16 %v244
      %v505 = vunpack.c.l.b16 %v245
      %v506 = vunpack.c.l.b16 %v246
      %v507 = vunpack.c.l.b16 %v247
      %v508 = vunpack.c.l.b16 %v248
      %v509 = vunpack.c.l.b16 %v249
      %v510 = vunpack.c.l.b16 %v250
      %v511 = vunpack.c.l.b16 %v251
      %v512 = vunpack.c.l.b16 %v252
      %v513 = vunpack.c.l.b16 %v253
      %v514 = vunpack.c.l.b16 %v254
      %v515 = vunpack.c.l.b16 %v255
      %v516 = vunpack.c.l.b16 %v256
      %v517 = vunpack.c.l.b16 %v257
      %v518 = vunpack.c.l.b16 %v258
      %v519 = vunpack.c.l.b16 %v259
      %v520 = vunpack.c.l.b16 %v260
      %v521 = vunpack.c.l.b16 %v261
      %v522 = vunpack.c.l.b16 %v262
      %v523 = vunpack.c.l.b16 %v263
      %v524 = vunpack.c.l.b16 %v264
      %v525 = vunpack.c.l.b16 %v265
      %v526 = vunpack.c.l.b16 %v266
      %v527 = vunpack.c.l.b16 %v267
      %v528 = vunpack.c.l.b16 %v268
      %v529 = vunpack.c.l.b16 %v269
      %v530 = vunpack.c.l.b16 %v270
      %v531 = vunpack.c.l.b16 %v271
      %v532 = vunpack.c.l.b16 %v272
      %v533 = vunpack.c.l.b16 %v273
      %v534 = vunpack.c.l.b16 %v274
      %v535 = vunpack.c.l.b16 %v275
      %v536 = vunpack.c.l.b16 %v276
      %v537 = vunpack.c.l.b16 %v277
      %v538 = vunpack.c.l.b16 %v278
      %v539 = vunpack.c.l.b16 %v279
      %v540 = vunpack.c.l.b16 %v280
      %v541 = vunpack.c.l.b16 %v281
      %v542 = vunpack.c.l.b16 %v282
      %v543 = vunpack.c.l.b16 %v283
      %v544 = vunpack.c.l.b16 %v284
      %v545 = vunpack.c.l.b16 %v285
      %v546 = vunpack.c.l.b16 %v286
      %v547 = vunpack.c.l.b16 %v287
      %v548 = vunpack.c.l.b16 %v288
      %v549 = vunpack.c.l.b16 %v289
      %v550 = vunpack.c.l.b16 %v290
      %v551 = vunpack.c.l.b16 %v291
      %v552 = vunpack.c.l.b16 %v292
      %v553 = vunpack.c.l.b16 %v293
      %v554 = vunpack.c.l.b16 %v294
      %v555 = vunpack.c.l.b16 %v295
      %v556 = vunpack.c.l.b16 %v296
      %v557 = vunpack.c.l.b16 %v297
      %v558 = vunpack.c.l.b16 %v298
      %v559 = vunpack.c.l.b16 %v299
      %v560 = vunpack.c.l.b16 %v300
      %v561 = vunpack.c.l.b16 %v301
      %v562 = vunpack.c.l.b16 %v302
      %v563 = vunpack.c.l.b16 %v303
      %v564 = vunpack.c.l.b16 %v304
      %v565 = vunpack.c.l.b16 %v305
      %v566 = vunpack.c.l.b16 %v306
      %v567 = vunpack.c.l.b16 %v307
      %v568 = vunpack.c.l.b16 %v308
      %v569 = vunpack.c.l.b16 %v309
      %v570 = vunpack.c.l.b16 %v310
      %v571 = vunpack.c.l.b16 %v311
      %v572 = vunpack.c.l.b16 %v312
      %v573 = vunpack.c.l.b16 %v313
      %v574 = vunpack.c.l.b16 %v314
      %v575 = vunpack.c.l.b16 %v315
      %v576 = vunpack.c.l.b16 %v316
      %v577 = vunpack.c.l.b16 %v317
      %v578 = vunpack.c.l.b16 %v318
      %v579 = vunpack.c.l.b16 %v319
      %v580 = vunpack.c.l.b16 %v320
      %v581 = vunpack.c.l.b16 %v321
      %v582 = vunpack.c.l.b16 %v322
      %v583 = vunpack.c.l.b16 %v323
      %v584 = vunpack.c.l.b16 %v324
      %v585 = vunpack.c.l.b16 %v325
      %v586 = vunpack.c.l.b16 %v326
      %v587 = vunpack.c.l.b16 %v327
      %v588 = vunpack.c.l.b16 %v328
      %v589 = vunpack.c.l.b16 %v329
      %v590 = vunpack.c.l.b16 %v330
      %v591 = vunpack.c.l.b16 %v331
      %v592 = vpack.c.b16 %v465, %v464
      %v593 = vpack.c.b16 %v467, %v466
      %v594 = vpack.c.b16 %v469, %v468
      %v595 = vpack.c.b16 %v471, %v470
      %v596 = vpack.c.b16 %v473, %v472
      %v597 = vpack.c.b16 %v475, %v474
      %v598 = vpack.c.b16 %v477, %v476
      %v599 = vpack.c.b16 %v479, %v478
      %v600 = vpack.c.b16 %v481, %v480
      %v601 = vpack.c.b16 %v483, %v482
      %v602 = vpack.c.b16 %v485, %v484
      %v603 = vpack.c.b16 %v487, %v486
      %v604 = vpack.c.b16 %v489, %v488
      %v605 = vpack.c.b16 %v491, %v490
      %v606 = vpack.c.b16 %v493, %v492
      %v607 = vpack.c.b16 %v495, %v494
      %v608 = vpack.c.b16 %v497, %v496
      %v609 = vpack.c.b16 %v499, %v498
      %v610 = vpack.c.b16 %v501, %v500
      %v611 = vpack.c.b16 %v503, %v502
      %v612 = vpack.c.b16 %v505, %v504
      %v613 = vpack.c.b16 %v507, %v506
      %v614 = vpack.c.b16 %v509, %v508
      %v615 = vpack.c.b16 %v511, %v510
      %v616 = vpack.c.b16 %v513, %v512
      %v617 = vpack.c.b16 %v515, %v514
      %v618 = vpack.c.b16 %v517, %v516
      %v619 = vpack.c.b16 %v519, %v518
      %v620 = vpack.c.b16 %v521, %v520
      %v621 = vpack.c.b16 %v523, %v522
      %v622 = vpack.c.b16 %v525, %v524
      %v623 = vpack.c.b16 %v527, %v526
      %v624 = vpack.c.b16 %v529, %v528
      %v625 = vpack.c.b16 %v531, %v530
      %v626 = vpack.c.b16 %v533, %v532
      %v627 = vpack.c.b16 %v535, %v534
      %v628 = vpack.c.b16 %v537, %v536
      %v629 = vpack.c.b16 %v539, %v538
      %v630 = vpack.c.b16 %v541, %v540
      %v631 = vpack.c.b16 %v543, %v542
      %v632 = vpack.c.b16 %v545, %v544
      %v633 = vpack.c.b16 %v547, %v546
      %v634 = vpack.c.b16 %v549, %v548
      %v635 = vpack.c.b16 %v551, %v550
      %v636 = vpack.c.b16 %v553, %v552
      %v637 = vpack.c.b16 %v555, %v554
      %v638 = vpack.c.b16 %v557, %v556
      %v639 = vpack.c.b16 %v559, %v558
      %v640 = vpack.c.b16 %v561, %v560
      %v641 = vpack.c.b16 %v563, %v562
      %v642 = vpack.c.b16 %v565, %v564
      %v643 = vpack.c.b16 %v567, %v566
      %v644 = vpack.c.b16 %v569, %v568
      %v645 = vpack.c.b16 %v571, %v570
      %v646 = vpack.c.b16 %v573, %v572
      %v647 = vpack.c.b16 %v575, %v574
      %v648 = vpack.c.b16 %v577, %v576
      %v649 = vpack.c.b16 %v579, %v578
      %v650 = vpack.c.b16 %v581, %v580
      %v651 = vpack.c.b16 %v583, %v582
      %v652 = vpack.c.b16 %v585, %v584
      %v653 = vpack.c.b16 %v587, %v586
      %v654 = vpack.c.b16 %v589, %v588
      %v655 = vpack.c.b16 %v591, %v590
      %v660 = vunpack.c.l.b16 %v332
      %v661 = vunpack.c.l.b16 %v333
      %v662 = vunpack.c.l.b16 %v334
      %v663 = vunpack.c.l.b16 %v335
      %v664 = vpack.c.b16 %v661, %v660
      %v665 = vpack.c.b16 %v663, %v662
      %vm668 = vcmask 261120
      %v670 = vsel %vm668, %v592, 0
      %v673 = vsel %vm668, %v593, 0
      %v676 = vsel %vm668, %v594, 0
      %v679 = vsel %vm668, %v595, 0
      %v682 = vsel %vm668, %v596, 0
      %v685 = vsel %vm668, %v597, 0
      %v688 = vsel %vm668, %v598, 0
      %v691 = vsel %vm668, %v599, 0
      %v694 = vsel %vm668, %v600, 0
      %v697 = vsel %vm668, %v601, 0
      %v700 = vsel %vm668, %v602, 0
      %v703 = vsel %vm668, %v603, 0
      %v706 = vsel %vm668, %v604, 0
      %v709 = vsel %vm668, %v605, 0
      %v712 = vsel %vm668, %v606, 0
      %v715 = vsel %vm668, %v607, 0
      %v718 = vsel %vm668, %v608, 0
      %v721 = vsel %vm668, %v609, 0
      %v724 = vsel %vm668, %v610, 0
      %v727 = vsel %vm668, %v611, 0
      %v730 = vsel %vm668, %v612, 0
      %v733 = vsel %vm668, %v613, 0
      %v736 = vsel %vm668, %v614, 0
      %v739 = vsel %vm668, %v615, 0
      %v742 = vsel %vm668, %v616, 0
      %v745 = vsel %vm668, %v617, 0
      %v748 = vsel %vm668, %v618, 0
      %v751 = vsel %vm668, %v619, 0
      %v754 = vsel %vm668, %v620, 0
      %v757 = vsel %vm668, %v621, 0
      %v760 = vsel %vm668, %v622, 0
      %v763 = vsel %vm668, %v623, 0
      %v766 = vsel %vm668, %v624, 0
      %v769 = vsel %vm668, %v625, 0
      %v772 = vsel %vm668, %v626, 0
      %v775 = vsel %vm668, %v627, 0
      %v778 = vsel %vm668, %v628, 0
      %v781 = vsel %vm668, %v629, 0
      %v784 = vsel %vm668, %v630, 0
      %v787 = vsel %vm668, %v631, 0
      %v790 = vsel %vm668, %v632, 0
      %v793 = vsel %vm668, %v633, 0
      %v796 = vsel %vm668, %v634, 0
      %v799 = vsel %vm668, %v635, 0
      %v802 = vsel %vm668, %v636, 0
      %v805 = vsel %vm668, %v637, 0
      %v808 = vsel %vm668, %v638, 0
      %v811 = vsel %vm668, %v639, 0
      %v814 = vsel %vm668, %v640, 0
      %v817 = vsel %vm668, %v641, 0
      %v820 = vsel %vm668, %v642, 0
      %v823 = vsel %vm668, %v643, 0
      %v826 = vsel %vm668, %v644, 0
      %v829 = vsel %vm668, %v645, 0
      %v832 = vsel %vm668, %v646, 0
      %v835 = vsel %vm668, %v647, 0
      %v838 = vsel %vm668, %v648, 0
      %v841 = vsel %vm668, %v649, 0
      %v844 = vsel %vm668, %v650, 0
      %v847 = vsel %vm668, %v651, 0
      %v850 = vsel %vm668, %v652, 0
      %v853 = vsel %vm668, %v653, 0
      %v856 = vsel %vm668, %v654, 0
      %v859 = vsel %vm668, %v655, 0
      %861 = vmatpush.bf16.msra.mxu0 0
      %862 = vmatpush.bf16.msra.mxu0 0
      %863 = vmatpush.bf16.msra.mxu0 0
      %864 = vmatpush.bf16.msra.mxu0 0
      %865 = vmatpush.bf16.msra.mxu0 0
      %866 = vmatpush.bf16.msra.mxu0 0
      %867 = vmatpush.bf16.msra.mxu0 %v665
      %868 = vmatpush.bf16.msra.mxu0 %v664
      %869 = vmatmul.bf16.gmra.mxu0 %v670
      %v870 = vpop.f32.mrf.mxu0
      %v871 = vadd.f32 0.0, %v870
      %v872 = vpop.f32.mrf.mxu0
      %v873 = vadd.f32 0.0, %v872
      %874 = vmatmul.bf16.gmra.mxu0 %v673
      %v875 = vpop.f32.mrf.mxu0
      %v876 = vadd.f32 0.0, %v875
      %v877 = vpop.f32.mrf.mxu0
      %v878 = vadd.f32 0.0, %v877
      %879 = vmatmul.bf16.gmra.mxu0 %v676
      %v880 = vpop.f32.mrf.mxu0
      %v881 = vadd.f32 0.0, %v880
      %v882 = vpop.f32.mrf.mxu0
      %v883 = vadd.f32 0.0, %v882
      %884 = vmatmul.bf16.gmra.mxu0 %v679
      %v885 = vpop.f32.mrf.mxu0
      %v886 = vadd.f32 0.0, %v885
      %v887 = vpop.f32.mrf.mxu0
      %v888 = vadd.f32 0.0, %v887
      %889 = vmatmul.bf16.gmra.mxu0 %v682
      %v890 = vpop.f32.mrf.mxu0
      %v891 = vadd.f32 0.0, %v890
      %v892 = vpop.f32.mrf.mxu0
      %v893 = vadd.f32 0.0, %v892
      %894 = vmatmul.bf16.gmra.mxu0 %v685
      %v895 = vpop.f32.mrf.mxu0
      %v896 = vadd.f32 0.0, %v895
      %v897 = vpop.f32.mrf.mxu0
      %v898 = vadd.f32 0.0, %v897
      %899 = vmatmul.bf16.gmra.mxu0 %v688
      %v900 = vpop.f32.mrf.mxu0
      %v901 = vadd.f32 0.0, %v900
      %v902 = vpop.f32.mrf.mxu0
      %v903 = vadd.f32 0.0, %v902
      %904 = vmatmul.bf16.gmra.mxu0 %v691
      %v905 = vpop.f32.mrf.mxu0
      %v906 = vadd.f32 0.0, %v905
      %v907 = vpop.f32.mrf.mxu0
      %v908 = vadd.f32 0.0, %v907
      %909 = vmatmul.bf16.gmra.mxu0 %v694
      %v910 = vpop.f32.mrf.mxu0
      %v911 = vadd.f32 0.0, %v910
      %v912 = vpop.f32.mrf.mxu0
      %v913 = vadd.f32 0.0, %v912
      %914 = vmatmul.bf16.gmra.mxu0 %v697
      %v915 = vpop.f32.mrf.mxu0
      %v916 = vadd.f32 0.0, %v915
      %v917 = vpop.f32.mrf.mxu0
      %v918 = vadd.f32 0.0, %v917
      %919 = vmatmul.bf16.gmra.mxu0 %v700
      %v920 = vpop.f32.mrf.mxu0
      %v921 = vadd.f32 0.0, %v920
      %v922 = vpop.f32.mrf.mxu0
      %v923 = vadd.f32 0.0, %v922
      %924 = vmatmul.bf16.gmra.mxu0 %v703
      %v925 = vpop.f32.mrf.mxu0
      %v926 = vadd.f32 0.0, %v925
      %v927 = vpop.f32.mrf.mxu0
      %v928 = vadd.f32 0.0, %v927
      %929 = vmatmul.bf16.gmra.mxu0 %v706
      %v930 = vpop.f32.mrf.mxu0
      %v931 = vadd.f32 0.0, %v930
      %v932 = vpop.f32.mrf.mxu0
      %v933 = vadd.f32 0.0, %v932
      %934 = vmatmul.bf16.gmra.mxu0 %v709
      %v935 = vpop.f32.mrf.mxu0
      %v936 = vadd.f32 0.0, %v935
      %v937 = vpop.f32.mrf.mxu0
      %v938 = vadd.f32 0.0, %v937
      %939 = vmatmul.bf16.gmra.mxu0 %v712
      %v940 = vpop.f32.mrf.mxu0
      %v941 = vadd.f32 0.0, %v940
      %v942 = vpop.f32.mrf.mxu0
      %v943 = vadd.f32 0.0, %v942
      %944 = vmatmul.bf16.gmra.mxu0 %v715
      %v945 = vpop.f32.mrf.mxu0
      %v946 = vadd.f32 0.0, %v945
      %v947 = vpop.f32.mrf.mxu0
      %v948 = vadd.f32 0.0, %v947
      %949 = vmatmul.bf16.gmra.mxu0 %v718
      %v950 = vpop.f32.mrf.mxu0
      %v951 = vadd.f32 0.0, %v950
      %v952 = vpop.f32.mrf.mxu0
      %v953 = vadd.f32 0.0, %v952
      %954 = vmatmul.bf16.gmra.mxu0 %v721
      %v955 = vpop.f32.mrf.mxu0
      %v956 = vadd.f32 0.0, %v955
      %v957 = vpop.f32.mrf.mxu0
      %v958 = vadd.f32 0.0, %v957
      %959 = vmatmul.bf16.gmra.mxu0 %v724
      %v960 = vpop.f32.mrf.mxu0
      %v961 = vadd.f32 0.0, %v960
      %v962 = vpop.f32.mrf.mxu0
      %v963 = vadd.f32 0.0, %v962
      %964 = vmatmul.bf16.gmra.mxu0 %v727
      %v965 = vpop.f32.mrf.mxu0
      %v966 = vadd.f32 0.0, %v965
      %v967 = vpop.f32.mrf.mxu0
      %v968 = vadd.f32 0.0, %v967
      %969 = vmatmul.bf16.gmra.mxu0 %v730
      %v970 = vpop.f32.mrf.mxu0
      %v971 = vadd.f32 0.0, %v970
      %v972 = vpop.f32.mrf.mxu0
      %v973 = vadd.f32 0.0, %v972
      %974 = vmatmul.bf16.gmra.mxu0 %v733
      %v975 = vpop.f32.mrf.mxu0
      %v976 = vadd.f32 0.0, %v975
      %v977 = vpop.f32.mrf.mxu0
      %v978 = vadd.f32 0.0, %v977
      %979 = vmatmul.bf16.gmra.mxu0 %v736
      %v980 = vpop.f32.mrf.mxu0
      %v981 = vadd.f32 0.0, %v980
      %v982 = vpop.f32.mrf.mxu0
      %v983 = vadd.f32 0.0, %v982
      %984 = vmatmul.bf16.gmra.mxu0 %v739
      %v985 = vpop.f32.mrf.mxu0
      %v986 = vadd.f32 0.0, %v985
      %v987 = vpop.f32.mrf.mxu0
      %v988 = vadd.f32 0.0, %v987
      %989 = vmatmul.bf16.gmra.mxu0 %v742
      %v990 = vpop.f32.mrf.mxu0
      %v991 = vadd.f32 0.0, %v990
      %v992 = vpop.f32.mrf.mxu0
      %v993 = vadd.f32 0.0, %v992
      %994 = vmatmul.bf16.gmra.mxu0 %v745
      %v995 = vpop.f32.mrf.mxu0
      %v996 = vadd.f32 0.0, %v995
      %v997 = vpop.f32.mrf.mxu0
      %v998 = vadd.f32 0.0, %v997
      %999 = vmatmul.bf16.gmra.mxu0 %v748
      %v1000 = vpop.f32.mrf.mxu0
      %v1001 = vadd.f32 0.0, %v1000
      %v1002 = vpop.f32.mrf.mxu0
      %v1003 = vadd.f32 0.0, %v1002
      %1004 = vmatmul.bf16.gmra.mxu0 %v751
      %v1005 = vpop.f32.mrf.mxu0
      %v1006 = vadd.f32 0.0, %v1005
      %v1007 = vpop.f32.mrf.mxu0
      %v1008 = vadd.f32 0.0, %v1007
      %1009 = vmatmul.bf16.gmra.mxu0 %v754
      %v1010 = vpop.f32.mrf.mxu0
      %v1011 = vadd.f32 0.0, %v1010
      %v1012 = vpop.f32.mrf.mxu0
      %v1013 = vadd.f32 0.0, %v1012
      %1014 = vmatmul.bf16.gmra.mxu0 %v757
      %v1015 = vpop.f32.mrf.mxu0
      %v1016 = vadd.f32 0.0, %v1015
      %v1017 = vpop.f32.mrf.mxu0
      %v1018 = vadd.f32 0.0, %v1017
      %1019 = vmatmul.bf16.gmra.mxu0 %v760
      %v1020 = vpop.f32.mrf.mxu0
      %v1021 = vadd.f32 0.0, %v1020
      %v1022 = vpop.f32.mrf.mxu0
      %v1023 = vadd.f32 0.0, %v1022
      %1024 = vmatmul.bf16.gmra.mxu0 %v763
      %v1025 = vpop.f32.mrf.mxu0
      %v1026 = vadd.f32 0.0, %v1025
      %v1027 = vpop.f32.mrf.mxu0
      %v1028 = vadd.f32 0.0, %v1027
      %1029 = vmatmul.bf16.gmra.mxu0 %v766
      %v1030 = vpop.f32.mrf.mxu0
      %v1031 = vadd.f32 0.0, %v1030
      %v1032 = vpop.f32.mrf.mxu0
      %v1033 = vadd.f32 0.0, %v1032
      %1034 = vmatmul.bf16.gmra.mxu0 %v769
      %v1035 = vpop.f32.mrf.mxu0
      %v1036 = vadd.f32 0.0, %v1035
      %v1037 = vpop.f32.mrf.mxu0
      %v1038 = vadd.f32 0.0, %v1037
      %1039 = vmatmul.bf16.gmra.mxu0 %v772
      %v1040 = vpop.f32.mrf.mxu0
      %v1041 = vadd.f32 0.0, %v1040
      %v1042 = vpop.f32.mrf.mxu0
      %v1043 = vadd.f32 0.0, %v1042
      %1044 = vmatmul.bf16.gmra.mxu0 %v775
      %v1045 = vpop.f32.mrf.mxu0
      %v1046 = vadd.f32 0.0, %v1045
      %v1047 = vpop.f32.mrf.mxu0
      %v1048 = vadd.f32 0.0, %v1047
      %1049 = vmatmul.bf16.gmra.mxu0 %v778
      %v1050 = vpop.f32.mrf.mxu0
      %v1051 = vadd.f32 0.0, %v1050
      %v1052 = vpop.f32.mrf.mxu0
      %v1053 = vadd.f32 0.0, %v1052
      %1054 = vmatmul.bf16.gmra.mxu0 %v781
      %v1055 = vpop.f32.mrf.mxu0
      %v1056 = vadd.f32 0.0, %v1055
      %v1057 = vpop.f32.mrf.mxu0
      %v1058 = vadd.f32 0.0, %v1057
      %1059 = vmatmul.bf16.gmra.mxu0 %v784
      %v1060 = vpop.f32.mrf.mxu0
      %v1061 = vadd.f32 0.0, %v1060
      %v1062 = vpop.f32.mrf.mxu0
      %v1063 = vadd.f32 0.0, %v1062
      %1064 = vmatmul.bf16.gmra.mxu0 %v787
      %v1065 = vpop.f32.mrf.mxu0
      %v1066 = vadd.f32 0.0, %v1065
      %v1067 = vpop.f32.mrf.mxu0
      %v1068 = vadd.f32 0.0, %v1067
      %1069 = vmatmul.bf16.gmra.mxu0 %v790
      %v1070 = vpop.f32.mrf.mxu0
      %v1071 = vadd.f32 0.0, %v1070
      %v1072 = vpop.f32.mrf.mxu0
      %v1073 = vadd.f32 0.0, %v1072
      %1074 = vmatmul.bf16.gmra.mxu0 %v793
      %v1075 = vpop.f32.mrf.mxu0
      %v1076 = vadd.f32 0.0, %v1075
      %v1077 = vpop.f32.mrf.mxu0
      %v1078 = vadd.f32 0.0, %v1077
      %1079 = vmatmul.bf16.gmra.mxu0 %v796
      %v1080 = vpop.f32.mrf.mxu0
      %v1081 = vadd.f32 0.0, %v1080
      %v1082 = vpop.f32.mrf.mxu0
      %v1083 = vadd.f32 0.0, %v1082
      %1084 = vmatmul.bf16.gmra.mxu0 %v799
      %v1085 = vpop.f32.mrf.mxu0
      %v1086 = vadd.f32 0.0, %v1085
      %v1087 = vpop.f32.mrf.mxu0
      %v1088 = vadd.f32 0.0, %v1087
      %1089 = vmatmul.bf16.gmra.mxu0 %v802
      %v1090 = vpop.f32.mrf.mxu0
      %v1091 = vadd.f32 0.0, %v1090
      %v1092 = vpop.f32.mrf.mxu0
      %v1093 = vadd.f32 0.0, %v1092
      %1094 = vmatmul.bf16.gmra.mxu0 %v805
      %v1095 = vpop.f32.mrf.mxu0
      %v1096 = vadd.f32 0.0, %v1095
      %v1097 = vpop.f32.mrf.mxu0
      %v1098 = vadd.f32 0.0, %v1097
      %1099 = vmatmul.bf16.gmra.mxu0 %v808
      %v1100 = vpop.f32.mrf.mxu0
      %v1101 = vadd.f32 0.0, %v1100
      %v1102 = vpop.f32.mrf.mxu0
      %v1103 = vadd.f32 0.0, %v1102
      %1104 = vmatmul.bf16.gmra.mxu0 %v811
      %v1105 = vpop.f32.mrf.mxu0
      %v1106 = vadd.f32 0.0, %v1105
      %v1107 = vpop.f32.mrf.mxu0
      %v1108 = vadd.f32 0.0, %v1107
      %1109 = vmatmul.bf16.gmra.mxu0 %v814
      %v1110 = vpop.f32.mrf.mxu0
      %v1111 = vadd.f32 0.0, %v1110
      %v1112 = vpop.f32.mrf.mxu0
      %v1113 = vadd.f32 0.0, %v1112
      %1114 = vmatmul.bf16.gmra.mxu0 %v817
      %v1115 = vpop.f32.mrf.mxu0
      %v1116 = vadd.f32 0.0, %v1115
      %v1117 = vpop.f32.mrf.mxu0
      %v1118 = vadd.f32 0.0, %v1117
      %1119 = vmatmul.bf16.gmra.mxu0 %v820
      %v1120 = vpop.f32.mrf.mxu0
      %v1121 = vadd.f32 0.0, %v1120
      %v1122 = vpop.f32.mrf.mxu0
      %v1123 = vadd.f32 0.0, %v1122
      %1124 = vmatmul.bf16.gmra.mxu0 %v823
      %v1125 = vpop.f32.mrf.mxu0
      %v1126 = vadd.f32 0.0, %v1125
      %v1127 = vpop.f32.mrf.mxu0
      %v1128 = vadd.f32 0.0, %v1127
      %1129 = vmatmul.bf16.gmra.mxu0 %v826
      %v1130 = vpop.f32.mrf.mxu0
      %v1131 = vadd.f32 0.0, %v1130
      %v1132 = vpop.f32.mrf.mxu0
      %v1133 = vadd.f32 0.0, %v1132
      %1134 = vmatmul.bf16.gmra.mxu0 %v829
      %v1135 = vpop.f32.mrf.mxu0
      %v1136 = vadd.f32 0.0, %v1135
      %v1137 = vpop.f32.mrf.mxu0
      %v1138 = vadd.f32 0.0, %v1137
      %1139 = vmatmul.bf16.gmra.mxu0 %v832
      %v1140 = vpop.f32.mrf.mxu0
      %v1141 = vadd.f32 0.0, %v1140
      %v1142 = vpop.f32.mrf.mxu0
      %v1143 = vadd.f32 0.0, %v1142
      %1144 = vmatmul.bf16.gmra.mxu0 %v835
      %v1145 = vpop.f32.mrf.mxu0
      %v1146 = vadd.f32 0.0, %v1145
      %v1147 = vpop.f32.mrf.mxu0
      %v1148 = vadd.f32 0.0, %v1147
      %1149 = vmatmul.bf16.gmra.mxu0 %v838
      %v1150 = vpop.f32.mrf.mxu0
      %v1151 = vadd.f32 0.0, %v1150
      %v1152 = vpop.f32.mrf.mxu0
      %v1153 = vadd.f32 0.0, %v1152
      %1154 = vmatmul.bf16.gmra.mxu0 %v841
      %v1155 = vpop.f32.mrf.mxu0
      %v1156 = vadd.f32 0.0, %v1155
      %v1157 = vpop.f32.mrf.mxu0
      %v1158 = vadd.f32 0.0, %v1157
      %1159 = vmatmul.bf16.gmra.mxu0 %v844
      %v1160 = vpop.f32.mrf.mxu0
      %v1161 = vadd.f32 0.0, %v1160
      %v1162 = vpop.f32.mrf.mxu0
      %v1163 = vadd.f32 0.0, %v1162
      %1164 = vmatmul.bf16.gmra.mxu0 %v847
      %v1165 = vpop.f32.mrf.mxu0
      %v1166 = vadd.f32 0.0, %v1165
      %v1167 = vpop.f32.mrf.mxu0
      %v1168 = vadd.f32 0.0, %v1167
      %1169 = vmatmul.bf16.gmra.mxu0 %v850
      %v1170 = vpop.f32.mrf.mxu0
      %v1171 = vadd.f32 0.0, %v1170
      %v1172 = vpop.f32.mrf.mxu0
      %v1173 = vadd.f32 0.0, %v1172
      %1174 = vmatmul.bf16.gmra.mxu0 %v853
      %v1175 = vpop.f32.mrf.mxu0
      %v1176 = vadd.f32 0.0, %v1175
      %v1177 = vpop.f32.mrf.mxu0
      %v1178 = vadd.f32 0.0, %v1177
      %1179 = vmatmul.bf16.gmra.mxu0 %v856
      %v1180 = vpop.f32.mrf.mxu0
      %v1181 = vadd.f32 0.0, %v1180
      %v1182 = vpop.f32.mrf.mxu0
      %v1183 = vadd.f32 0.0, %v1182
      %1184 = vmatmul.bf16.gmra.mxu0 %v859
      %v1185 = vpop.f32.mrf.mxu0
      %v1186 = vadd.f32 0.0, %v1185
      %v1187 = vpop.f32.mrf.mxu0
      %v1188 = vadd.f32 0.0, %v1187
      %1189 = vdwg.mxu0
      %v1190 = vtanh.pop %v871
      %v1191 = vtanh.pop %v873
      %v1192 = vtanh.pop %v876
      %v1193 = vtanh.pop %v878
      %v1194 = vtanh.pop %v881
      %v1195 = vtanh.pop %v883
      %v1196 = vtanh.pop %v886
      %v1197 = vtanh.pop %v888
      %v1198 = vtanh.pop %v891
      %v1199 = vtanh.pop %v893
      %v1200 = vtanh.pop %v896
      %v1201 = vtanh.pop %v898
      %v1202 = vtanh.pop %v901
      %v1203 = vtanh.pop %v903
      %v1204 = vtanh.pop %v906
      %v1205 = vtanh.pop %v908
      %v1206 = vtanh.pop %v911
      %v1207 = vtanh.pop %v913
      %v1208 = vtanh.pop %v916
      %v1209 = vtanh.pop %v918
      %v1210 = vtanh.pop %v921
      %v1211 = vtanh.pop %v923
      %v1212 = vtanh.pop %v926
      %v1213 = vtanh.pop %v928
      %v1214 = vtanh.pop %v931
      %v1215 = vtanh.pop %v933
      %v1216 = vtanh.pop %v936
      %v1217 = vtanh.pop %v938
      %v1218 = vtanh.pop %v941
      %v1219 = vtanh.pop %v943
      %v1220 = vtanh.pop %v946
      %v1221 = vtanh.pop %v948
      %v1222 = vtanh.pop %v951
      %v1223 = vtanh.pop %v953
      %v1224 = vtanh.pop %v956
      %v1225 = vtanh.pop %v958
      %v1226 = vtanh.pop %v961
      %v1227 = vtanh.pop %v963
      %v1228 = vtanh.pop %v966
      %v1229 = vtanh.pop %v968
      %v1230 = vtanh.pop %v971
      %v1231 = vtanh.pop %v973
      %v1232 = vtanh.pop %v976
      %v1233 = vtanh.pop %v978
      %v1234 = vtanh.pop %v981
      %v1235 = vtanh.pop %v983
      %v1236 = vtanh.pop %v986
      %v1237 = vtanh.pop %v988
      %v1238 = vtanh.pop %v991
      %v1239 = vtanh.pop %v993
      %v1240 = vtanh.pop %v996
      %v1241 = vtanh.pop %v998
      %v1242 = vtanh.pop %v1001
      %v1243 = vtanh.pop %v1003
      %v1244 = vtanh.pop %v1006
      %v1245 = vtanh.pop %v1008
      %v1246 = vtanh.pop %v1011
      %v1247 = vtanh.pop %v1013
      %v1248 = vtanh.pop %v1016
      %v1249 = vtanh.pop %v1018
      %v1250 = vtanh.pop %v1021
      %v1251 = vtanh.pop %v1023
      %v1252 = vtanh.pop %v1026
      %v1253 = vtanh.pop %v1028
      %v1254 = vtanh.pop %v1031
      %v1255 = vtanh.pop %v1033
      %v1256 = vtanh.pop %v1036
      %v1257 = vtanh.pop %v1038
      %v1258 = vtanh.pop %v1041
      %v1259 = vtanh.pop %v1043
      %v1260 = vtanh.pop %v1046
      %v1261 = vtanh.pop %v1048
      %v1262 = vtanh.pop %v1051
      %v1263 = vtanh.pop %v1053
      %v1264 = vtanh.pop %v1056
      %v1265 = vtanh.pop %v1058
      %v1266 = vtanh.pop %v1061
      %v1267 = vtanh.pop %v1063
      %v1268 = vtanh.pop %v1066
      %v1269 = vtanh.pop %v1068
      %v1270 = vtanh.pop %v1071
      %v1271 = vtanh.pop %v1073
      %v1272 = vtanh.pop %v1076
      %v1273 = vtanh.pop %v1078
      %v1274 = vtanh.pop %v1081
      %v1275 = vtanh.pop %v1083
      %v1276 = vtanh.pop %v1086
      %v1277 = vtanh.pop %v1088
      %v1278 = vtanh.pop %v1091
      %v1279 = vtanh.pop %v1093
      %v1280 = vtanh.pop %v1096
      %v1281 = vtanh.pop %v1098
      %v1282 = vtanh.pop %v1101
      %v1283 = vtanh.pop %v1103
      %v1284 = vtanh.pop %v1106
      %v1285 = vtanh.pop %v1108
      %v1286 = vtanh.pop %v1111
      %v1287 = vtanh.pop %v1113
      %v1288 = vtanh.pop %v1116
      %v1289 = vtanh.pop %v1118
      %v1290 = vtanh.pop %v1121
      %v1291 = vtanh.pop %v1123
      %v1292 = vtanh.pop %v1126
      %v1293 = vtanh.pop %v1128
      %v1294 = vtanh.pop %v1131
      %v1295 = vtanh.pop %v1133
      %v1296 = vtanh.pop %v1136
      %v1297 = vtanh.pop %v1138
      %v1298 = vtanh.pop %v1141
      %v1299 = vtanh.pop %v1143
      %v1300 = vtanh.pop %v1146
      %v1301 = vtanh.pop %v1148
      %v1302 = vtanh.pop %v1151
      %v1303 = vtanh.pop %v1153
      %v1304 = vtanh.pop %v1156
      %v1305 = vtanh.pop %v1158
      %v1306 = vtanh.pop %v1161
      %v1307 = vtanh.pop %v1163
      %v1308 = vtanh.pop %v1166
      %v1309 = vtanh.pop %v1168
      %v1310 = vtanh.pop %v1171
      %v1311 = vtanh.pop %v1173
      %v1312 = vtanh.pop %v1176
      %v1313 = vtanh.pop %v1178
      %v1314 = vtanh.pop %v1181
      %v1315 = vtanh.pop %v1183
      %v1316 = vtanh.pop %v1186
      %v1317 = vtanh.pop %v1188
      %v1318 = vpack.c.bf16 %v1190, %v1190
      %v1319 = vpack.c.bf16 %v1191, %v1191
      %v1320 = vpack.c.bf16 %v1192, %v1192
      %v1321 = vpack.c.bf16 %v1193, %v1193
      %v1322 = vpack.c.bf16 %v1194, %v1194
      %v1323 = vpack.c.bf16 %v1195, %v1195
      %v1324 = vpack.c.bf16 %v1196, %v1196
      %v1325 = vpack.c.bf16 %v1197, %v1197
      %v1326 = vpack.c.bf16 %v1198, %v1198
      %v1327 = vpack.c.bf16 %v1199, %v1199
      %v1328 = vpack.c.bf16 %v1200, %v1200
      %v1329 = vpack.c.bf16 %v1201, %v1201
      %v1330 = vpack.c.bf16 %v1202, %v1202
      %v1331 = vpack.c.bf16 %v1203, %v1203
      %v1332 = vpack.c.bf16 %v1204, %v1204
      %v1333 = vpack.c.bf16 %v1205, %v1205
      %v1334 = vpack.c.bf16 %v1206, %v1206
      %v1335 = vpack.c.bf16 %v1207, %v1207
      %v1336 = vpack.c.bf16 %v1208, %v1208
      %v1337 = vpack.c.bf16 %v1209, %v1209
      %v1338 = vpack.c.bf16 %v1210, %v1210
      %v1339 = vpack.c.bf16 %v1211, %v1211
      %v1340 = vpack.c.bf16 %v1212, %v1212
      %v1341 = vpack.c.bf16 %v1213, %v1213
      %v1342 = vpack.c.bf16 %v1214, %v1214
      %v1343 = vpack.c.bf16 %v1215, %v1215
      %v1344 = vpack.c.bf16 %v1216, %v1216
      %v1345 = vpack.c.bf16 %v1217, %v1217
      %v1346 = vpack.c.bf16 %v1218, %v1218
      %v1347 = vpack.c.bf16 %v1219, %v1219
      %v1348 = vpack.c.bf16 %v1220, %v1220
      %v1349 = vpack.c.bf16 %v1221, %v1221
      %v1350 = vpack.c.bf16 %v1222, %v1222
      %v1351 = vpack.c.bf16 %v1223, %v1223
      %v1352 = vpack.c.bf16 %v1224, %v1224
      %v1353 = vpack.c.bf16 %v1225, %v1225
      %v1354 = vpack.c.bf16 %v1226, %v1226
      %v1355 = vpack.c.bf16 %v1227, %v1227
      %v1356 = vpack.c.bf16 %v1228, %v1228
      %v1357 = vpack.c.bf16 %v1229, %v1229
      %v1358 = vpack.c.bf16 %v1230, %v1230
      %v1359 = vpack.c.bf16 %v1231, %v1231
      %v1360 = vpack.c.bf16 %v1232, %v1232
      %v1361 = vpack.c.bf16 %v1233, %v1233
      %v1362 = vpack.c.bf16 %v1234, %v1234
      %v1363 = vpack.c.bf16 %v1235, %v1235
      %v1364 = vpack.c.bf16 %v1236, %v1236
      %v1365 = vpack.c.bf16 %v1237, %v1237
      %v1366 = vpack.c.bf16 %v1238, %v1238
      %v1367 = vpack.c.bf16 %v1239, %v1239
      %v1368 = vpack.c.bf16 %v1240, %v1240
      %v1369 = vpack.c.bf16 %v1241, %v1241
      %v1370 = vpack.c.bf16 %v1242, %v1242
      %v1371 = vpack.c.bf16 %v1243, %v1243
      %v1372 = vpack.c.bf16 %v1244, %v1244
      %v1373 = vpack.c.bf16 %v1245, %v1245
      %v1374 = vpack.c.bf16 %v1246, %v1246
      %v1375 = vpack.c.bf16 %v1247, %v1247
      %v1376 = vpack.c.bf16 %v1248, %v1248
      %v1377 = vpack.c.bf16 %v1249, %v1249
      %v1378 = vpack.c.bf16 %v1250, %v1250
      %v1379 = vpack.c.bf16 %v1251, %v1251
      %v1380 = vpack.c.bf16 %v1252, %v1252
      %v1381 = vpack.c.bf16 %v1253, %v1253
      %v1382 = vpack.c.bf16 %v1254, %v1254
      %v1383 = vpack.c.bf16 %v1255, %v1255
      %v1384 = vpack.c.bf16 %v1256, %v1256
      %v1385 = vpack.c.bf16 %v1257, %v1257
      %v1386 = vpack.c.bf16 %v1258, %v1258
      %v1387 = vpack.c.bf16 %v1259, %v1259
      %v1388 = vpack.c.bf16 %v1260, %v1260
      %v1389 = vpack.c.bf16 %v1261, %v1261
      %v1390 = vpack.c.bf16 %v1262, %v1262
      %v1391 = vpack.c.bf16 %v1263, %v1263
      %v1392 = vpack.c.bf16 %v1264, %v1264
      %v1393 = vpack.c.bf16 %v1265, %v1265
      %v1394 = vpack.c.bf16 %v1266, %v1266
      %v1395 = vpack.c.bf16 %v1267, %v1267
      %v1396 = vpack.c.bf16 %v1268, %v1268
      %v1397 = vpack.c.bf16 %v1269, %v1269
      %v1398 = vpack.c.bf16 %v1270, %v1270
      %v1399 = vpack.c.bf16 %v1271, %v1271
      %v1400 = vpack.c.bf16 %v1272, %v1272
      %v1401 = vpack.c.bf16 %v1273, %v1273
      %v1402 = vpack.c.bf16 %v1274, %v1274
      %v1403 = vpack.c.bf16 %v1275, %v1275
      %v1404 = vpack.c.bf16 %v1276, %v1276
      %v1405 = vpack.c.bf16 %v1277, %v1277
      %v1406 = vpack.c.bf16 %v1278, %v1278
      %v1407 = vpack.c.bf16 %v1279, %v1279
      %v1408 = vpack.c.bf16 %v1280, %v1280
      %v1409 = vpack.c.bf16 %v1281, %v1281
      %v1410 = vpack.c.bf16 %v1282, %v1282
      %v1411 = vpack.c.bf16 %v1283, %v1283
      %v1412 = vpack.c.bf16 %v1284, %v1284
      %v1413 = vpack.c.bf16 %v1285, %v1285
      %v1414 = vpack.c.bf16 %v1286, %v1286
      %v1415 = vpack.c.bf16 %v1287, %v1287
      %v1416 = vpack.c.bf16 %v1288, %v1288
      %v1417 = vpack.c.bf16 %v1289, %v1289
      %v1418 = vpack.c.bf16 %v1290, %v1290
      %v1419 = vpack.c.bf16 %v1291, %v1291
      %v1420 = vpack.c.bf16 %v1292, %v1292
      %v1421 = vpack.c.bf16 %v1293, %v1293
      %v1422 = vpack.c.bf16 %v1294, %v1294
      %v1423 = vpack.c.bf16 %v1295, %v1295
      %v1424 = vpack.c.bf16 %v1296, %v1296
      %v1425 = vpack.c.bf16 %v1297, %v1297
      %v1426 = vpack.c.bf16 %v1298, %v1298
      %v1427 = vpack.c.bf16 %v1299, %v1299
      %v1428 = vpack.c.bf16 %v1300, %v1300
      %v1429 = vpack.c.bf16 %v1301, %v1301
      %v1430 = vpack.c.bf16 %v1302, %v1302
      %v1431 = vpack.c.bf16 %v1303, %v1303
      %v1432 = vpack.c.bf16 %v1304, %v1304
      %v1433 = vpack.c.bf16 %v1305, %v1305
      %v1434 = vpack.c.bf16 %v1306, %v1306
      %v1435 = vpack.c.bf16 %v1307, %v1307
      %v1436 = vpack.c.bf16 %v1308, %v1308
      %v1437 = vpack.c.bf16 %v1309, %v1309
      %v1438 = vpack.c.bf16 %v1310, %v1310
      %v1439 = vpack.c.bf16 %v1311, %v1311
      %v1440 = vpack.c.bf16 %v1312, %v1312
      %v1441 = vpack.c.bf16 %v1313, %v1313
      %v1442 = vpack.c.bf16 %v1314, %v1314
      %v1443 = vpack.c.bf16 %v1315, %v1315
      %v1444 = vpack.c.bf16 %v1316, %v1316
      %v1445 = vpack.c.bf16 %v1317, %v1317
      %1446 = vst [vmem:[%s201] sm:$0xf] %v1318
      %1447 = vst [vmem:[%s201 + $0x4] sm:$0xf] %v1319
      %1448 = vst [vmem:[%s201 + $0x8] sm:$0xf] %v1320
      %1449 = vst [vmem:[%s201 + $0xc] sm:$0xf] %v1321
      %1450 = vst [vmem:[%s201 + $0x10] sm:$0xf] %v1322
      %1451 = vst [vmem:[%s201 + $0x14] sm:$0xf] %v1323
      %1452 = vst [vmem:[%s201 + $0x18] sm:$0xf] %v1324
      %1453 = vst [vmem:[%s201 + $0x1c] sm:$0xf] %v1325
      %1454 = vst [vmem:[%s201 + $0x20] sm:$0xf] %v1326
      %1455 = vst [vmem:[%s201 + $0x24] sm:$0xf] %v1327
      %1456 = vst [vmem:[%s201 + $0x28] sm:$0xf] %v1328
      %1457 = vst [vmem:[%s201 + $0x2c] sm:$0xf] %v1329
      %1458 = vst [vmem:[%s201 + $0x30] sm:$0xf] %v1330
      %1459 = vst [vmem:[%s201 + $0x34] sm:$0xf] %v1331
      %1460 = vst [vmem:[%s201 + $0x38] sm:$0xf] %v1332
      %1461 = vst [vmem:[%s201 + $0x3c] sm:$0xf] %v1333
      %1462 = vst [vmem:[%s201 + $0x40] sm:$0xf] %v1334
      %1463 = vst [vmem:[%s201 + $0x44] sm:$0xf] %v1335
      %1464 = vst [vmem:[%s201 + $0x48] sm:$0xf] %v1336
      %1465 = vst [vmem:[%s201 + $0x4c] sm:$0xf] %v1337
      %1466 = vst [vmem:[%s201 + $0x50] sm:$0xf] %v1338
      %1467 = vst [vmem:[%s201 + $0x54] sm:$0xf] %v1339
      %1468 = vst [vmem:[%s201 + $0x58] sm:$0xf] %v1340
      %1469 = vst [vmem:[%s201 + $0x5c] sm:$0xf] %v1341
      %1470 = vst [vmem:[%s201 + $0x60] sm:$0xf] %v1342
      %1471 = vst [vmem:[%s201 + $0x64] sm:$0xf] %v1343
      %1472 = vst [vmem:[%s201 + $0x68] sm:$0xf] %v1344
      %1473 = vst [vmem:[%s201 + $0x6c] sm:$0xf] %v1345
      %1474 = vst [vmem:[%s201 + $0x70] sm:$0xf] %v1346
      %1475 = vst [vmem:[%s201 + $0x74] sm:$0xf] %v1347
      %1476 = vst [vmem:[%s201 + $0x78] sm:$0xf] %v1348
      %1477 = vst [vmem:[%s201 + $0x7c] sm:$0xf] %v1349
      %1478 = vst [vmem:[%s201 + $0x80] sm:$0xf] %v1350
      %1479 = vst [vmem:[%s201 + $0x84] sm:$0xf] %v1351
      %1480 = vst [vmem:[%s201 + $0x88] sm:$0xf] %v1352
      %1481 = vst [vmem:[%s201 + $0x8c] sm:$0xf] %v1353
      %1482 = vst [vmem:[%s201 + $0x90] sm:$0xf] %v1354
      %1483 = vst [vmem:[%s201 + $0x94] sm:$0xf] %v1355
      %1484 = vst [vmem:[%s201 + $0x98] sm:$0xf] %v1356
      %1485 = vst [vmem:[%s201 + $0x9c] sm:$0xf] %v1357
      %1486 = vst [vmem:[%s201 + $0xa0] sm:$0xf] %v1358
      %1487 = vst [vmem:[%s201 + $0xa4] sm:$0xf] %v1359
      %1488 = vst [vmem:[%s201 + $0xa8] sm:$0xf] %v1360
      %1489 = vst [vmem:[%s201 + $0xac] sm:$0xf] %v1361
      %1490 = vst [vmem:[%s201 + $0xb0] sm:$0xf] %v1362
      %1491 = vst [vmem:[%s201 + $0xb4] sm:$0xf] %v1363
      %1492 = vst [vmem:[%s201 + $0xb8] sm:$0xf] %v1364
      %1493 = vst [vmem:[%s201 + $0xbc] sm:$0xf] %v1365
      %1494 = vst [vmem:[%s201 + $0xc0] sm:$0xf] %v1366
      %1495 = vst [vmem:[%s201 + $0xc4] sm:$0xf] %v1367
      %1496 = vst [vmem:[%s201 + $0xc8] sm:$0xf] %v1368
      %1497 = vst [vmem:[%s201 + $0xcc] sm:$0xf] %v1369
      %1498 = vst [vmem:[%s201 + $0xd0] sm:$0xf] %v1370
      %1499 = vst [vmem:[%s201 + $0xd4] sm:$0xf] %v1371
      %1500 = vst [vmem:[%s201 + $0xd8] sm:$0xf] %v1372
      %1501 = vst [vmem:[%s201 + $0xdc] sm:$0xf] %v1373
      %1502 = vst [vmem:[%s201 + $0xe0] sm:$0xf] %v1374
      %1503 = vst [vmem:[%s201 + $0xe4] sm:$0xf] %v1375
      %1504 = vst [vmem:[%s201 + $0xe8] sm:$0xf] %v1376
      %1505 = vst [vmem:[%s201 + $0xec] sm:$0xf] %v1377
      %1506 = vst [vmem:[%s201 + $0xf0] sm:$0xf] %v1378
      %1507 = vst [vmem:[%s201 + $0xf4] sm:$0xf] %v1379
      %1508 = vst [vmem:[%s201 + $0xf8] sm:$0xf] %v1380
      %1509 = vst [vmem:[%s201 + $0xfc] sm:$0xf] %v1381
      %1510 = vst [vmem:[%s201 + $0x100] sm:$0xf] %v1382
      %1511 = vst [vmem:[%s201 + $0x104] sm:$0xf] %v1383
      %1512 = vst [vmem:[%s201 + $0x108] sm:$0xf] %v1384
      %1513 = vst [vmem:[%s201 + $0x10c] sm:$0xf] %v1385
      %1514 = vst [vmem:[%s201 + $0x110] sm:$0xf] %v1386
      %1515 = vst [vmem:[%s201 + $0x114] sm:$0xf] %v1387
      %1516 = vst [vmem:[%s201 + $0x118] sm:$0xf] %v1388
      %1517 = vst [vmem:[%s201 + $0x11c] sm:$0xf] %v1389
      %1518 = vst [vmem:[%s201 + $0x120] sm:$0xf] %v1390
      %1519 = vst [vmem:[%s201 + $0x124] sm:$0xf] %v1391
      %1520 = vst [vmem:[%s201 + $0x128] sm:$0xf] %v1392
      %1521 = vst [vmem:[%s201 + $0x12c] sm:$0xf] %v1393
      %1522 = vst [vmem:[%s201 + $0x130] sm:$0xf] %v1394
      %1523 = vst [vmem:[%s201 + $0x134] sm:$0xf] %v1395
      %1524 = vst [vmem:[%s201 + $0x138] sm:$0xf] %v1396
      %1525 = vst [vmem:[%s201 + $0x13c] sm:$0xf] %v1397
      %1526 = vst [vmem:[%s201 + $0x140] sm:$0xf] %v1398
      %1527 = vst [vmem:[%s201 + $0x144] sm:$0xf] %v1399
      %1528 = vst [vmem:[%s201 + $0x148] sm:$0xf] %v1400
      %1529 = vst [vmem:[%s201 + $0x14c] sm:$0xf] %v1401
      %1530 = vst [vmem:[%s201 + $0x150] sm:$0xf] %v1402
      %1531 = vst [vmem:[%s201 + $0x154] sm:$0xf] %v1403
      %1532 = vst [vmem:[%s201 + $0x158] sm:$0xf] %v1404
      %1533 = vst [vmem:[%s201 + $0x15c] sm:$0xf] %v1405
      %1534 = vst [vmem:[%s201 + $0x160] sm:$0xf] %v1406
      %1535 = vst [vmem:[%s201 + $0x164] sm:$0xf] %v1407
      %1536 = vst [vmem:[%s201 + $0x168] sm:$0xf] %v1408
      %1537 = vst [vmem:[%s201 + $0x16c] sm:$0xf] %v1409
      %1538 = vst [vmem:[%s201 + $0x170] sm:$0xf] %v1410
      %1539 = vst [vmem:[%s201 + $0x174] sm:$0xf] %v1411
      %1540 = vst [vmem:[%s201 + $0x178] sm:$0xf] %v1412
      %1541 = vst [vmem:[%s201 + $0x17c] sm:$0xf] %v1413
      %1542 = vst [vmem:[%s201 + $0x180] sm:$0xf] %v1414
      %1543 = vst [vmem:[%s201 + $0x184] sm:$0xf] %v1415
      %1544 = vst [vmem:[%s201 + $0x188] sm:$0xf] %v1416
      %1545 = vst [vmem:[%s201 + $0x18c] sm:$0xf] %v1417
      %1546 = vst [vmem:[%s201 + $0x190] sm:$0xf] %v1418
      %1547 = vst [vmem:[%s201 + $0x194] sm:$0xf] %v1419
      %1548 = vst [vmem:[%s201 + $0x198] sm:$0xf] %v1420
      %1549 = vst [vmem:[%s201 + $0x19c] sm:$0xf] %v1421
      %1550 = vst [vmem:[%s201 + $0x1a0] sm:$0xf] %v1422
      %1551 = vst [vmem:[%s201 + $0x1a4] sm:$0xf] %v1423
      %1552 = vst [vmem:[%s201 + $0x1a8] sm:$0xf] %v1424
      %1553 = vst [vmem:[%s201 + $0x1ac] sm:$0xf] %v1425
      %1554 = vst [vmem:[%s201 + $0x1b0] sm:$0xf] %v1426
      %1555 = vst [vmem:[%s201 + $0x1b4] sm:$0xf] %v1427
      %1556 = vst [vmem:[%s201 + $0x1b8] sm:$0xf] %v1428
      %1557 = vst [vmem:[%s201 + $0x1bc] sm:$0xf] %v1429
      %1558 = vst [vmem:[%s201 + $0x1c0] sm:$0xf] %v1430
      %1559 = vst [vmem:[%s201 + $0x1c4] sm:$0xf] %v1431
      %1560 = vst [vmem:[%s201 + $0x1c8] sm:$0xf] %v1432
      %1561 = vst [vmem:[%s201 + $0x1cc] sm:$0xf] %v1433
      %1562 = vst [vmem:[%s201 + $0x1d0] sm:$0xf] %v1434
      %1563 = vst [vmem:[%s201 + $0x1d4] sm:$0xf] %v1435
      %1564 = vst [vmem:[%s201 + $0x1d8] sm:$0xf] %v1436
      %1565 = vst [vmem:[%s201 + $0x1dc] sm:$0xf] %v1437
      %1566 = vst [vmem:[%s201 + $0x1e0] sm:$0xf] %v1438
      %1567 = vst [vmem:[%s201 + $0x1e4] sm:$0xf] %v1439
      %1568 = vst [vmem:[%s201 + $0x1e8] sm:$0xf] %v1440
      %1569 = vst [vmem:[%s201 + $0x1ec] sm:$0xf] %v1441
      %1570 = vst [vmem:[%s201 + $0x1f0] sm:$0xf] %v1442
      %1571 = vst [vmem:[%s201 + $0x1f4] sm:$0xf] %v1443
      %1572 = vst [vmem:[%s201 + $0x1f8] sm:$0xf] %v1444
      %1573 = vst [vmem:[%s201 + $0x1fc] sm:$0xf] %v1445
      %s1574 = smul.u32 128, %s18
      %p1575 = scmp.lt.s32.totalorder %s17, 3
      %s1576 = scalar_select %p1575, %s17, 3
      %p1577 = scmp.lt.s32.totalorder %s1574, 255
      %s1578 = scalar_select %p1577, %s1574, 255
      %s1579 = smul.addr %s1576, 256
      %s1580 = sadd.s32 %s1578, %s1579
      %s1581 = smul.addr %s1580, 4
      %s1582 = scalar_lea.vmem %s2, %s1581
      // Predicated region
      $region29: #{a_call__.17} parent=27 // pred_check
        %p1583 = pneg %p99
      $region30: #{a_call__.17} parent=27 // pred_check_branch
        %1585 = sbr.rel (%p1583) target = $region32
      $region31: #{a_call__.17} parent=27 // pred_region
        %s1586 = smul.u32 128, %s18
      $region32: #{a_call__.17} parent=27 // pred_fallthru
        _
    $region28: #{a_call__.17} parent=5 // pred_fallthru
      _
    %p1587 = scmp.le.s32.totalorder 2, %s8
    // Predicated region
    $region33: #{a_call__.17} parent=5 // pred_check
      %p1588 = pneg %p1587
    $region34: #{a_call__.17} parent=5 // pred_check_branch
      %1590 = sbr.rel (%p1588) target = $region36
    $region35: #{a_call__.17} parent=5 // pred_region
      %s1591 = ssub.s32 %s8, 2
      // Predicated region
      $region37: #{a_call__.17} parent=35 // pred_check
        %p1592 = pneg %p105
      $region38: #{a_call__.17} parent=35 // pred_check_branch
        %1594 = sbr.rel (%p1592) target = $region40
      $region39: #{a_call__.17} parent=35 // pred_region
        %s1595 = smul.u32 128, %s20
        %p1596 = scmp.lt.s32.totalorder %s19, 3
        %s1597 = scalar_select %p1596, %s19, 3
        %p1598 = scmp.lt.s32.totalorder %s1595, 255
        %s1599 = scalar_select %p1598, %s1595, 255
        %s1600 = smul.addr %s1597, 256
        %s1601 = sadd.s32 %s1599, %s1600
        %s1602 = smul.addr %s1601, 4
        %s1603 = scalar_lea.vmem %s2, %s1602
      $region40: #{a_call__.17} parent=35 // pred_fallthru
        _
    $region36: #{a_call__.17} parent=5 // pred_fallthru
      _
  $region6: #{a_call__.17} parent=0 // loop_footer
    %s12 = sadd.s32 1, %s8
  $region7: #{a_call__.17} parent=0 // loop_footer_branch
    %7 = sbr.rel target = $region3
  $region8: #{a_call__.17} parent=0 // loop_exit
    _

</llo_original>
